<compile_context>
chip_gen: v5e
topology: v5e:2x2
jax: 0.10.0
libtpu: 0.0.40
codegen_flags: <defaults>
</compile_context>

<pallas_src>
import functools
import math

import jax
import jax.numpy as jnp
from jax.experimental import pallas as pl
from jax.experimental.pallas import tpu as pltpu

F32 = jnp.float32


def _vmem():
    return pl.BlockSpec(memory_space=pltpu.MemorySpace.VMEM)


def _sigmoid(x):
    return 1.0 / (1.0 + jnp.exp(-x))


def _softplus(x):
    # numerically stable softplus (exp/log only -> Mosaic friendly)
    return jnp.maximum(x, 0.0) + jnp.log(1.0 + jnp.exp(-jnp.abs(x)))


# ----------------------------------------------------------------------------
# Pallas kernels
# ----------------------------------------------------------------------------
def _conv_bn_relu_t_kernel(p_ref, w_ref, scale_ref, shift_ref, o_ref):
    # p: [Cin*K, rows]  w: [Cout, Cin*K]  scale/shift: [Cout, 1]
    # output transposed [Cout, rows] -> rows (the long dim) on the lane axis.
    y = jnp.dot(w_ref[...], p_ref[...], preferred_element_type=jnp.float32)
    o_ref[...] = jnp.maximum(y * scale_ref[...] + shift_ref[...], 0.0)


def _precompute_kernel(feat_ref, adj_ref, wbig_ref, wdr_ref, kraw_ref,
                       zf_ref, red_ref, loss_ref):
    # feat: [N, V*F]  adj: [N, V*V]  wbig: [V*F, R*H]  wdr: [V*V, R*R]
    # zf  = (kernel.T @ feat) @ Wgf   (projection + GCN feature matmul fused)
    # red = relu(kernel).T @ adj @ relu(kernel)   (dim_reduce)
    zf_ref[...] = jnp.dot(feat_ref[...], wbig_ref[...],
                          preferred_element_type=jnp.float32)
    red_ref[...] = jnp.dot(adj_ref[...], wdr_ref[...],
                           preferred_element_type=jnp.float32)

    # regularization losses: depend only on the kernel parameter -> once.
    kraw = kraw_ref[...]                       # [V, R]
    kp = jnp.maximum(kraw, 0.0)
    R = kp.shape[1]
    kp3 = kp[None]
    gram = jnp.einsum('bvi,bvj->bij', kp3, kp3,
                      preferred_element_type=jnp.float32)[0]     # [R, R]
    row = jax.lax.broadcasted_iota(jnp.int32, (R, R), 0)
    col = jax.lax.broadcasted_iota(jnp.int32, (R, R), 1)
    eye = (row == col).astype(jnp.float32)
    diag_vec = jnp.sum(gram * eye, axis=1, keepdims=True)        # [R, 1]
    off = gram - gram * eye
    ortho_loss = 0.2 * jnp.sum(off * off)
    mean_d = jnp.mean(diag_vec)
    var_d = jnp.sum((diag_vec - mean_d) ** 2) / (R - 1)          # unbiased var
    variance_loss = 0.3 * var_d
    neg_loss = 0.1 * jnp.sum(jnp.maximum(1e-6 - kraw, 0.0))
    l1_loss = 0.05 * jnp.sum(jnp.abs(kp))
    loss_ref[...] = jnp.zeros((1, 1), jnp.float32) + (
        ortho_loss + variance_loss + neg_loss + l1_loss)


def _recurrent_kernel(zf_ref, red_ref, wgh_ref, wg4_ref, bg4_ref,
                      wg4s_ref, bg4s_ref, fcw_ref, fcb_ref,
                      h_out_ref,
                      hm_ref, cm_ref, hs_ref, cs_ref,
                      *, n_batch, n_reduce, out_feat, skip, offset):
    t = pl.program_id(0)
    B, R, O = n_batch, n_reduce, out_feat

    @pl.when(t == 0)
    def _():
        hm_ref[...] = jnp.zeros(hm_ref.shape, F32)
        cm_ref[...] = jnp.zeros(cm_ref.shape, F32)
        hs_ref[...] = jnp.zeros(hs_ref.shape, F32)
        cs_ref[...] = jnp.zeros(cs_ref.shape, F32)

    zf = zf_ref[...]          # [R*B, H]  rows ordered (r, b): feature_t @ Wgf
    red = red_ref[...]        # [R*B, R]  rows (r, b), col s: reduced adjacency
    wgh = wgh_ref[...]        # [O, H]

    def cell(h2, c2, wg4, bg4):
        # GCN: adj_red @ ([feat | h] @ Wg); the concat is folded into the
        # split weights and the feat part is precomputed (zf).
        xw = zf + jnp.dot(h2, wgh, preferred_element_type=jnp.float32)  # [R*B,H]
        # R-deep adjacency contraction as an unrolled VPU FMA chain (off MXU).
        axw = None
        for s in range(R):
            blk = xw[s * B:(s + 1) * B, :]                    # rows (s, ·) -> [B, H]
            blk = jnp.concatenate([blk] * R, axis=0)          # tiled over r
            term = red[:, s:s + 1] * blk
            axw = term if axw is None else axw + term
        y = jnp.maximum(axw, 0.0)
        # column mean over the R super-nodes of each batch element
        csum = y[0:B, :]
        for r in range(1, R):
            csum = csum + y[r * B:(r + 1) * B, :]
        col_mean = jnp.concatenate([csum] * R, axis=0) * (1.0 / R) + 1e-6
        xg = _softplus(y / col_mean)
        # fused LSTM gates: one [H, 4*O] (=128-lane) matmul
        g = jnp.dot(xg, wg4, preferred_element_type=jnp.float32) + bg4  # [R*B,4O]
        it = _sigmoid(g[:, 0 * O:1 * O])
        ft = _sigmoid(g[:, 1 * O:2 * O])
        ot = _sigmoid(g[:, 2 * O:3 * O])
        ut = jnp.maximum(g[:, 3 * O:4 * O], 0.0)
        c_new = ft * c2 + it * ut
        h_new = ot * jnp.tanh(c_new)
        return h_new, c_new

    # main-stream LSTM step (every t)
    h_new, c_new = cell(hm_ref[...], cm_ref[...], wg4_ref[...], bg4_ref[...])
    hm_ref[...] = h_new
    cm_ref[...] = c_new

    # skip-stream s advances at timesteps t = offset + j*skip + s
    for s in range(skip):
        @pl.when(jnp.logical_and(t >= offset, (t - offset) % skip == s))
        def _(s=s):
            hsk, csk = cell(hs_ref[s], cs_ref[s], wg4s_ref[...], bg4s_ref[...])
            hs_ref[s] = hsk
            cs_ref[s] = csk

    # final combine + fc on the last step (dropout p=0.5 -> identity in eval)
    @pl.when(t == pl.num_programs(0) - 1)
    def _():
        parts = [hm_ref[...]] + [hs_ref[s] for s in range(skip)]
        hall = jnp.concatenate(parts, axis=1)          # [R*B, (skip+1)*O]
        h_out_ref[...] = (jnp.dot(hall, fcw_ref[...],
                                  preferred_element_type=jnp.float32)
                          + fcb_ref[...])


def _linear_kernel(x_ref, w_ref, b_ref, o_ref):
    o_ref[...] = (jnp.dot(x_ref[...], w_ref[...],
                          preferred_element_type=jnp.float32) + b_ref[...])


# ----------------------------------------------------------------------------
# pallas_call wrappers
# ----------------------------------------------------------------------------
def conv_bn_relu_t(patches_t, w2d, scale, shift):
    cout, rows = w2d.shape[0], patches_t.shape[1]
    return pl.pallas_call(
        _conv_bn_relu_t_kernel,
        out_shape=jax.ShapeDtypeStruct((cout, rows), F32),
        in_specs=[_vmem()] * 4,
        out_specs=_vmem(),
    )(patches_t, w2d, scale, shift)


def precompute(feat_nv, adj_nv, wbig, wdr, kraw):
    N = feat_nv.shape[0]
    zf, red, loss = pl.pallas_call(
        _precompute_kernel,
        out_shape=(jax.ShapeDtypeStruct((N, wbig.shape[1]), F32),
                   jax.ShapeDtypeStruct((N, wdr.shape[1]), F32),
                   jax.ShapeDtypeStruct((1, 1), F32)),
        in_specs=[_vmem()] * 5,
        out_specs=(_vmem(), _vmem(), _vmem()),
    )(feat_nv, adj_nv, wbig, wdr, kraw)
    return zf, red, loss[0, 0]


def recurrent(zf_rb, red_rb, wgh, wg4, bg4, wg4s, bg4s, fcw, fcb, *,
              n_batch, skip):
    Ts, RB, H = zf_rb.shape
    R = red_rb.shape[2]
    O = wgh.shape[0]
    num_p = Ts // skip
    offset = Ts - num_p * skip
    kern = functools.partial(_recurrent_kernel, n_batch=n_batch, n_reduce=R,
                             out_feat=O, skip=skip, offset=offset)
    return pl.pallas_call(
        kern,
        out_shape=jax.ShapeDtypeStruct((RB, O), F32),
        grid_spec=pltpu.PrefetchScalarGridSpec(
            num_scalar_prefetch=0,
            grid=(Ts,),
            in_specs=[
                pl.BlockSpec((None, RB, H), lambda t: (t, 0, 0)),   # zf
                pl.BlockSpec((None, RB, R), lambda t: (t, 0, 0)),   # red
                pl.BlockSpec((O, H), lambda t: (0, 0)),             # Wgh
                pl.BlockSpec((H, 4 * O), lambda t: (0, 0)),         # Wg4 main
                pl.BlockSpec((1, 4 * O), lambda t: (0, 0)),         # bg4 main
                pl.BlockSpec((H, 4 * O), lambda t: (0, 0)),         # Wg4 skip
                pl.BlockSpec((1, 4 * O), lambda t: (0, 0)),         # bg4 skip
                pl.BlockSpec(((skip + 1) * O, O), lambda t: (0, 0)),  # fc_w
                pl.BlockSpec((1, O), lambda t: (0, 0)),             # fc_b
            ],
            out_specs=pl.BlockSpec((RB, O), lambda t: (0, 0)),
            scratch_shapes=[
                pltpu.VMEM((RB, O), F32),          # h main
                pltpu.VMEM((RB, O), F32),          # c main
                pltpu.VMEM((skip, RB, O), F32),    # h skip streams
                pltpu.VMEM((skip, RB, O), F32),    # c skip streams
            ]),
        compiler_params=pltpu.CompilerParams(
            dimension_semantics=("arbitrary",)),   # sequential recurrence
    )(zf_rb, red_rb, wgh, wg4, bg4, wg4s, bg4s, fcw, fcb)


def linear(x, w, b):
    return pl.pallas_call(
        _linear_kernel,
        out_shape=jax.ShapeDtypeStruct((x.shape[0], w.shape[1]), F32),
        in_specs=[_vmem()] * 3,
        out_specs=_vmem(),
    )(x, w, b)


# ----------------------------------------------------------------------------
# Model glue (layout plumbing in plain JAX, heavy compute in the kernels)
# ----------------------------------------------------------------------------
def _fold_bn(conv_b, gamma, beta):
    # BatchNorm1d eval with running_mean=0, running_var=1, fused with conv bias
    scale = gamma / jnp.sqrt(1.0 + 1e-5)
    shift = scale * conv_b + beta
    return scale.reshape(-1, 1), shift.reshape(-1, 1)


def tcn_forward_batched(p, x4, K=7, S=2):
    # x4: [B, Tseq, V, T] -> feat_flat: [B*Tseq*V, Cout2*T2]
    B, Ts, V, T = x4.shape
    M = B * Ts * V
    xf = x4.reshape(M, T)
    c1 = p['conv1_w'].shape[0]
    c2 = p['conv2_w'].shape[0]

    # --- block 1: im2col via strided slices (no gather), transposed layout --
    T1 = (T - K) // S + 1
    cols1 = [xf[:, k:k + S * (T1 - 1) + 1:S] for k in range(K)]   # K x [M, T1]
    p1 = jnp.stack(cols1, axis=0).reshape(K, M * T1)              # [K, M*T1]
    w1 = p['conv1_w'].reshape(c1, K)
    s1, b1 = _fold_bn(p['conv1_b'], p['bn1_g'], p['bn1_b'])
    out1 = conv_bn_relu_t(p1, w1, s1, b1)                         # [c1, M*T1]

    # --- block 2 ------------------------------------------------------------
    in2 = out1.reshape(c1, M, T1).transpose(1, 0, 2)              # [M, c1, T1]
    T2 = (T1 - K) // S + 1
    cols2 = [in2[:, :, k:k + S * (T2 - 1) + 1:S] for k in range(K)]  # [M,c1,T2]
    p2 = jnp.stack(cols2, axis=2)                                 # [M, c1, K, T2]
    p2 = p2.transpose(1, 2, 0, 3).reshape(c1 * K, M * T2)         # [(c,k),(m,t2)]
    w2 = p['conv2_w'].reshape(c2, c1 * K)
    s2, b2 = _fold_bn(p['conv2_b'], p['bn2_g'], p['bn2_b'])
    out2 = conv_bn_relu_t(p2, w2, s2, b2)                         # [c2, M*T2]

    # back to PyTorch's x.view(N, V, -1) feature ordering f = (cout, t2)
    feat = out2.reshape(c2, M, T2).transpose(1, 0, 2).reshape(M, c2 * T2)
    return feat


def brainnet_forward(p, x, adj, skip=2):
    # x: [B, Tseq, V, T]    adj: [B, Tseq, V, V]
    B, Ts, V, _ = x.shape
    R = p['kernel'].shape[1]
    O = p['Wi'].shape[1]
    H = p['gcn_w'].shape[1]

    # --- batched non-recurrent stage (2 conv calls + 1 precompute call) -----
    feat = tcn_forward_batched(p, x)                  # [B*Ts*V, F]
    Fdim = feat.shape[1]
    N = B * Ts

    wgf = p['gcn_w'][:Fdim]                           # [F, H]
    wgh = p['gcn_w'][Fdim:]                           # [O, H]
    kraw = p['kernel']                                # [V, R]  (raw projection)
    kp = jnp.maximum(kraw, 0.0)                       # relu(kernel) for dim_reduce

    # fold (kernel.T @ feat) @ Wgf and relu(k).T @ adj @ relu(k) into flat
    # 2-D matmuls via Kronecker-structured weights (batch folded into rows).
    wbig = jnp.kron(kraw, wgf)                        # [V*F, R*H]
    wdr = jnp.kron(kp, kp)                            # [V*V, R*R]
    feat_nv = feat.reshape(N, V * Fdim)
    adj_nv = adj.reshape(N, V * V)
    zf_flat, red_flat, loss1 = precompute(feat_nv, adj_nv, wbig, wdr, kraw)
    loss = loss1 * Ts   # identical regularizer is accumulated every timestep

    # per-step blocks for the fused recurrent kernel, rows ordered (r, b)
    zf_rb = (zf_flat.reshape(B, Ts, R, H)
             .transpose(1, 2, 0, 3).reshape(Ts, R * B, H))
    red_rb = (red_flat.reshape(B, Ts, R, R)
              .transpose(1, 2, 0, 3).reshape(Ts, R * B, R))

    # fused 4-gate weights/biases: one 128-wide matmul per cell
    wg4 = jnp.concatenate([p['Wi'], p['Wf'], p['Wo'], p['Wc']], axis=1)
    bg4 = jnp.concatenate([p['bi'], p['bf'], p['bo'], p['bc']], axis=1)
    wg4s = jnp.concatenate([p['Wi_s'], p['Wf_s'], p['Wo_s'], p['Wc_s']], axis=1)
    bg4s = jnp.concatenate([p['bi_s'], p['bf_s'], p['bo_s'], p['bc_s']], axis=1)

    # --- fused recurrent stage: main + skip LSTM streams + fc (1 call) ------
    h_rb = recurrent(zf_rb, red_rb, wgh, wg4, bg4, wg4s, bg4s,
                     p['fc_w'], p['fc_b'], n_batch=B, skip=skip)   # [R*B, O]

    # --- classification head -------------------------------------------------
    h_flat = h_rb.reshape(R, B, O).transpose(1, 0, 2).reshape(B, R * O)
    logits = linear(h_flat, p['lin_w'], p['lin_b'])                # [B, 2]
    # TODO(synk): sklearn PCA (feature_preprocessing) + AgglomerativeClustering
    # and the global label bookkeeping have no Pallas equivalent; only the
    # logits and the regularization loss are returned.
    return logits, loss


def init_params(key, V, R, F, H, O, skip):
    stdv = 1.0 / math.sqrt(256)
    names_shapes = [
        ('kernel', (V, R)),
        ('conv1_w', (8, 1, 7)), ('conv1_b', (8,)), ('bn1_g', (8,)), ('bn1_b', (8,)),
        ('conv2_w', (16, 8, 7)), ('conv2_b', (16,)), ('bn2_g', (16,)), ('bn2_b', (16,)),
        ('gcn_w', (F + O, H)),
        ('Wi', (H, O)), ('Wf', (H, O)), ('Wo', (H, O)), ('Wc', (H, O)),
        ('bi', (1, O)), ('bf', (1, O)), ('bo', (1, O)), ('bc', (1, O)),
        ('Wi_s', (H, O)), ('Wf_s', (H, O)), ('Wo_s', (H, O)), ('Wc_s', (H, O)),
        ('bi_s', (1, O)), ('bf_s', (1, O)), ('bo_s', (1, O)), ('bc_s', (1, O)),
        ('fc_w', ((skip + 1) * O, O)), ('fc_b', (1, O)),
        ('lin_w', (R * O, 2)), ('lin_b', (1, 2)),
    ]
    params = {}
    keys = jax.random.split(key, len(names_shapes))
    for k, (name, shape) in zip(keys, names_shapes):
        params[name] = jax.random.uniform(k, shape, F32, -stdv, stdv)
    return params


if __name__ == "__main__":
    # small shapes consistent with the module:
    #   V (num_node)=16, R (super_node/num_reduce)=4, out_features=32,
    #   hidden_features=16, skip=2, seq=4, time-series length=23
    #   -> tcn feature dim F = 16 * floor((floor((23-7)/2+1)-7)/2+1) = 32
    B, Tseq, V, Tt = 2, 4, 16, 23
    R, O, H, skip = 4, 32, 16, 2
    T1 = (Tt - 7) // 2 + 1
    T2 = (T1 - 7) // 2 + 1
    Fdim = 16 * T2

    key = jax.random.PRNGKey(0)
    kx, ka, kparam = jax.random.split(key, 3)
    x = jax.random.normal(kx, (B, Tseq, V, Tt), F32)
    adj = jax.random.normal(ka, (B, Tseq, V, V), F32)
    params = init_params(kparam, V, R, Fdim, H, O, skip)

    fwd = jax.jit(functools.partial(brainnet_forward, skip=skip))
    logits, loss = fwd(params, x, adj)
    jax.block_until_ready((logits, loss))
    assert logits.shape == (B, 2)
    assert bool(jnp.isfinite(loss))
    print("KERNEL_OK")
</pallas_src>

<mosaic_0001>
module attributes {stable_mosaic.version = 11 : i64} {
  func.func @_conv_bn_relu_t_kernel(%arg0: memref<7x1152xf32, #tpu.memory_space<vmem>>, %arg1: memref<8x7xf32, #tpu.memory_space<vmem>>, %arg2: memref<8x1xf32, #tpu.memory_space<vmem>>, %arg3: memref<8x1xf32, #tpu.memory_space<vmem>>, %arg4: memref<8x1152xf32, #tpu.memory_space<vmem>>) attributes {dimension_semantics = [], scalar_prefetch = 0 : i64, scratch_operands = 0 : i64, tpu.core_type = #tpu.core_type<tc>} {
    %c0 = arith.constant 0 : index
    %c0_0 = arith.constant 0 : index
    %0 = vector.load %arg1[%c0, %c0_0] : memref<8x7xf32, #tpu.memory_space<vmem>>, vector<8x7xf32>
    %c0_1 = arith.constant 0 : index
    %c0_2 = arith.constant 0 : index
    %1 = vector.load %arg0[%c0_1, %c0_2] : memref<7x1152xf32, #tpu.memory_space<vmem>>, vector<7x1152xf32>
    %cst = arith.constant dense<0.000000e+00> : vector<8x1152xf32>
    %2 = tpu.matmul %0, %1, %cst {dimension_numbers = #tpu.dot_dimension_numbers<[1], [0], [0], [1], [0, 0, 1, 1], [], []>} : vector<8x7xf32>, vector<7x1152xf32>, vector<8x1152xf32> -> vector<8x1152xf32>
    %c0_3 = arith.constant 0 : index
    %c0_4 = arith.constant 0 : index
    %3 = vector.load %arg2[%c0_3, %c0_4] : memref<8x1xf32, #tpu.memory_space<vmem>>, vector<8x1xf32>
    %4 = vector.broadcast %3 : vector<8x1xf32> to vector<8x1152xf32>
    %5 = arith.mulf %2, %4 : vector<8x1152xf32>
    %c0_5 = arith.constant 0 : index
    %c0_6 = arith.constant 0 : index
    %6 = vector.load %arg3[%c0_5, %c0_6] : memref<8x1xf32, #tpu.memory_space<vmem>>, vector<8x1xf32>
    %7 = vector.broadcast %6 : vector<8x1xf32> to vector<8x1152xf32>
    %8 = arith.addf %5, %7 : vector<8x1152xf32>
    %cst_7 = arith.constant 0.000000e+00 : f32
    %9 = vector.broadcast %cst_7 : f32 to vector<8x1152xf32>
    %10 = arith.maximumf %8, %9 : vector<8x1152xf32>
    %c0_8 = arith.constant 0 : index
    %c0_9 = arith.constant 0 : index
    %11 = vector.load %arg4[%c0_8, %c0_9] : memref<8x1152xf32, #tpu.memory_space<vmem>>, vector<8x1152xf32>
    tpu.vector_store %arg4[%c0_8, %c0_9], %10 {strides = array<i32>} : memref<8x1152xf32, #tpu.memory_space<vmem>>, vector<8x1152xf32>,
    return
  }
}

module attributes {stable_mosaic.version = 11 : i64} {
  func.func @_conv_bn_relu_t_kernel(%arg0: memref<56x256xf32, #tpu.memory_space<vmem>>, %arg1: memref<16x56xf32, #tpu.memory_space<vmem>>, %arg2: memref<16x1xf32, #tpu.memory_space<vmem>>, %arg3: memref<16x1xf32, #tpu.memory_space<vmem>>, %arg4: memref<16x256xf32, #tpu.memory_space<vmem>>) attributes {dimension_semantics = [], scalar_prefetch = 0 : i64, scratch_operands = 0 : i64, tpu.core_type = #tpu.core_type<tc>} {
    %c0 = arith.constant 0 : index
    %c0_0 = arith.constant 0 : index
    %0 = vector.load %arg1[%c0, %c0_0] : memref<16x56xf32, #tpu.memory_space<vmem>>, vector<16x56xf32>
    %c0_1 = arith.constant 0 : index
    %c0_2 = arith.constant 0 : index
    %1 = vector.load %arg0[%c0_1, %c0_2] : memref<56x256xf32, #tpu.memory_space<vmem>>, vector<56x256xf32>
    %cst = arith.constant dense<0.000000e+00> : vector<16x256xf32>
    %2 = tpu.matmul %0, %1, %cst {dimension_numbers = #tpu.dot_dimension_numbers<[1], [0], [0], [1], [0, 0, 1, 1], [], []>} : vector<16x56xf32>, vector<56x256xf32>, vector<16x256xf32> -> vector<16x256xf32>
    %c0_3 = arith.constant 0 : index
    %c0_4 = arith.constant 0 : index
    %3 = vector.load %arg2[%c0_3, %c0_4] : memref<16x1xf32, #tpu.memory_space<vmem>>, vector<16x1xf32>
    %4 = vector.broadcast %3 : vector<16x1xf32> to vector<16x256xf32>
    %5 = arith.mulf %2, %4 : vector<16x256xf32>
    %c0_5 = arith.constant 0 : index
    %c0_6 = arith.constant 0 : index
    %6 = vector.load %arg3[%c0_5, %c0_6] : memref<16x1xf32, #tpu.memory_space<vmem>>, vector<16x1xf32>
    %7 = vector.broadcast %6 : vector<16x1xf32> to vector<16x256xf32>
    %8 = arith.addf %5, %7 : vector<16x256xf32>
    %cst_7 = arith.constant 0.000000e+00 : f32
    %9 = vector.broadcast %cst_7 : f32 to vector<16x256xf32>
    %10 = arith.maximumf %8, %9 : vector<16x256xf32>
    %c0_8 = arith.constant 0 : index
    %c0_9 = arith.constant 0 : index
    %11 = vector.load %arg4[%c0_8, %c0_9] : memref<16x256xf32, #tpu.memory_space<vmem>>, vector<16x256xf32>
    tpu.vector_store %arg4[%c0_8, %c0_9], %10 {strides = array<i32>} : memref<16x256xf32, #tpu.memory_space<vmem>>, vector<16x256xf32>,
    return
  }
}

module attributes {stable_mosaic.version = 11 : i64} {
  func.func @_precompute_kernel(%arg0: memref<8x512xf32, #tpu.memory_space<vmem>>, %arg1: memref<8x256xf32, #tpu.memory_space<vmem>>, %arg2: memref<512x64xf32, #tpu.memory_space<vmem>>, %arg3: memref<256x16xf32, #tpu.memory_space<vmem>>, %arg4: memref<16x4xf32, #tpu.memory_space<vmem>>, %arg5: memref<8x64xf32, #tpu.memory_space<vmem>>, %arg6: memref<8x16xf32, #tpu.memory_space<vmem>>, %arg7: memref<1x1xf32, #tpu.memory_space<vmem>>) attributes {dimension_semantics = [], scalar_prefetch = 0 : i64, scratch_operands = 0 : i64, tpu.core_type = #tpu.core_type<tc>} {
    %c0 = arith.constant 0 : index
    %c0_0 = arith.constant 0 : index
    %0 = vector.load %arg0[%c0, %c0_0] : memref<8x512xf32, #tpu.memory_space<vmem>>, vector<8x512xf32>
    %c0_1 = arith.constant 0 : index
    %c0_2 = arith.constant 0 : index
    %1 = vector.load %arg2[%c0_1, %c0_2] : memref<512x64xf32, #tpu.memory_space<vmem>>, vector<512x64xf32>
    %cst = arith.constant dense<0.000000e+00> : vector<8x64xf32>
    %2 = tpu.matmul %0, %1, %cst {dimension_numbers = #tpu.dot_dimension_numbers<[1], [0], [0], [1], [0, 0, 1, 1], [], []>} : vector<8x512xf32>, vector<512x64xf32>, vector<8x64xf32> -> vector<8x64xf32>
    %c0_3 = arith.constant 0 : index
    %c0_4 = arith.constant 0 : index
    %3 = vector.load %arg5[%c0_3, %c0_4] : memref<8x64xf32, #tpu.memory_space<vmem>>, vector<8x64xf32>
    tpu.vector_store %arg5[%c0_3, %c0_4], %2 {strides = array<i32>} : memref<8x64xf32, #tpu.memory_space<vmem>>, vector<8x64xf32>,
    %c0_5 = arith.constant 0 : index
    %c0_6 = arith.constant 0 : index
    %4 = vector.load %arg1[%c0_5, %c0_6] : memref<8x256xf32, #tpu.memory_space<vmem>>, vector<8x256xf32>
    %c0_7 = arith.constant 0 : index
    %c0_8 = arith.constant 0 : index
    %5 = vector.load %arg3[%c0_7, %c0_8] : memref<256x16xf32, #tpu.memory_space<vmem>>, vector<256x16xf32>
    %cst_9 = arith.constant dense<0.000000e+00> : vector<8x16xf32>
    %6 = tpu.matmul %4, %5, %cst_9 {dimension_numbers = #tpu.dot_dimension_numbers<[1], [0], [0], [1], [0, 0, 1, 1], [], []>} : vector<8x256xf32>, vector<256x16xf32>, vector<8x16xf32> -> vector<8x16xf32>
    %c0_10 = arith.constant 0 : index
    %c0_11 = arith.constant 0 : index
    %7 = vector.load %arg6[%c0_10, %c0_11] : memref<8x16xf32, #tpu.memory_space<vmem>>, vector<8x16xf32>
    tpu.vector_store %arg6[%c0_10, %c0_11], %6 {strides = array<i32>} : memref<8x16xf32, #tpu.memory_space<vmem>>, vector<8x16xf32>,
    %c0_12 = arith.constant 0 : index
    %c0_13 = arith.constant 0 : index
    %8 = vector.load %arg4[%c0_12, %c0_13] : memref<16x4xf32, #tpu.memory_space<vmem>>, vector<16x4xf32>
    %cst_14 = arith.constant 0.000000e+00 : f32
    %9 = vector.broadcast %cst_14 : f32 to vector<16x4xf32>
    %10 = arith.maximumf %8, %9 : vector<16x4xf32>
    %11 = vector.shape_cast %10 : vector<16x4xf32> to vector<1x16x4xf32>
    "tpu.trace_start"() <{level = 10 : i32, message = "bvi,bvj->bij"}> : () -> ()
    %cst_15 = arith.constant dense<0.000000e+00> : vector<1x4x4xf32>
    %12 = tpu.matmul %11, %11, %cst_15 {dimension_numbers = #tpu.dot_dimension_numbers<[1], [1], [2], [2], [0, 0, 0, 2, 1, 2], [0], [0]>} : vector<1x16x4xf32>, vector<1x16x4xf32>, vector<1x4x4xf32> -> vector<1x4x4xf32>
    "tpu.trace_stop"() : () -> ()
    %13 = vector.shape_cast %12 : vector<1x4x4xf32> to vector<4x4xf32>
    %14 = tpu.iota {dimensions = array<i32: 0>} : vector<4x4xi32>
    %15 = tpu.iota {dimensions = array<i32: 1>} : vector<4x4xi32>
    %16 = arith.cmpi eq, %14, %15 : vector<4x4xi32>
    %17 = arith.extui %16 : vector<4x4xi1> to vector<4x4xi32>
    %18 = arith.sitofp %17 : vector<4x4xi32> to vector<4x4xf32>
    %19 = arith.mulf %13, %18 : vector<4x4xf32>
    %cst_16 = arith.constant dense<0.000000e+00> : vector<4xf32>
    %20 = vector.multi_reduction <add>, %19, %cst_16 [1] : vector<4x4xf32> to vector<4xf32>
    %21 = vector.shape_cast %20 : vector<4xf32> to vector<4x1xf32>
    %22 = arith.mulf %13, %18 : vector<4x4xf32>
    %23 = arith.subf %13, %22 : vector<4x4xf32>
    %24 = arith.mulf %23, %23 : vector<4x4xf32>
    %25 = vector.shape_cast %24 : vector<4x4xf32> to vector<1x4x4xf32>
    %cst_17 = arith.constant dense<0.000000e+00> : vector<1xf32>
    %26 = vector.multi_reduction <add>, %25, %cst_17 [1, 2] : vector<1x4x4xf32> to vector<1xf32>
    %27 = vector.shape_cast %26 : vector<1xf32> to vector<1x1x1xf32>
    %28 = vector.extract %27[0, 0, 0] : f32 from vector<1x1x1xf32>
    %cst_18 = arith.constant 2.000000e-01 : f32
    %29 = arith.mulf %cst_18, %28 : f32
    %30 = vector.shape_cast %21 : vector<4x1xf32> to vector<1x4x1xf32>
    %cst_19 = arith.constant dense<0.000000e+00> : vector<1xf32>
    %31 = vector.multi_reduction <add>, %30, %cst_19 [1, 2] : vector<1x4x1xf32> to vector<1xf32>
    %32 = vector.shape_cast %31 : vector<1xf32> to vector<1x1x1xf32>
    %33 = vector.extract %32[0, 0, 0] : f32 from vector<1x1x1xf32>
    %cst_20 = arith.constant 4.000000e+00 : f32
    %34 = arith.divf %33, %cst_20 : f32
    %35 = vector.broadcast %34 : f32 to vector<4x1xf32>
    %36 = arith.subf %21, %35 : vector<4x1xf32>
    %37 = arith.mulf %36, %36 : vector<4x1xf32>
    %38 = vector.shape_cast %37 : vector<4x1xf32> to vector<1x4x1xf32>
    %cst_21 = arith.constant dense<0.000000e+00> : vector<1xf32>
    %39 = vector.multi_reduction <add>, %38, %cst_21 [1, 2] : vector<1x4x1xf32> to vector<1xf32>
    %40 = vector.shape_cast %39 : vector<1xf32> to vector<1x1x1xf32>
    %41 = vector.extract %40[0, 0, 0] : f32 from vector<1x1x1xf32>
    %cst_22 = arith.constant 3.000000e+00 : f32
    %42 = arith.divf %41, %cst_22 : f32
    %cst_23 = arith.constant 3.000000e-01 : f32
    %43 = arith.mulf %cst_23, %42 : f32
    %cst_24 = arith.constant 9.99999997E-7 : f32
    %44 = vector.broadcast %cst_24 : f32 to vector<16x4xf32>
    %45 = arith.subf %44, %8 : vector<16x4xf32>
    %cst_25 = arith.constant 0.000000e+00 : f32
    %46 = vector.broadcast %cst_25 : f32 to vector<16x4xf32>
    %47 = arith.maximumf %45, %46 : vector<16x4xf32>
    %48 = vector.shape_cast %47 : vector<16x4xf32> to vector<1x16x4xf32>
    %cst_26 = arith.constant dense<0.000000e+00> : vector<1xf32>
    %49 = vector.multi_reduction <add>, %48, %cst_26 [1, 2] : vector<1x16x4xf32> to vector<1xf32>
    %50 = vector.shape_cast %49 : vector<1xf32> to vector<1x1x1xf32>
    %51 = vector.extract %50[0, 0, 0] : f32 from vector<1x1x1xf32>
    %cst_27 = arith.constant 1.000000e-01 : f32
    %52 = arith.mulf %cst_27, %51 : f32
    %53 = math.absf %10 : vector<16x4xf32>
    %54 = vector.shape_cast %53 : vector<16x4xf32> to vector<1x16x4xf32>
    %cst_28 = arith.constant dense<0.000000e+00> : vector<1xf32>
    %55 = vector.multi_reduction <add>, %54, %cst_28 [1, 2] : vector<1x16x4xf32> to vector<1xf32>
    %56 = vector.shape_cast %55 : vector<1xf32> to vector<1x1x1xf32>
    %57 = vector.extract %56[0, 0, 0] : f32 from vector<1x1x1xf32>
    %cst_29 = arith.constant 5.000000e-02 : f32
    %58 = arith.mulf %cst_29, %57 : f32
    %cst_30 = arith.constant 0.000000e+00 : f32
    %59 = vector.broadcast %cst_30 : f32 to vector<1x1xf32>
    %60 = arith.addf %29, %43 : f32
    %61 = arith.addf %60, %52 : f32
    %62 = arith.addf %61, %58 : f32
    %63 = vector.broadcast %62 : f32 to vector<1x1xf32>
    %64 = arith.addf %59, %63 : vector<1x1xf32>
    %c0_31 = arith.constant 0 : index
    %c0_32 = arith.constant 0 : index
    %65 = vector.load %arg7[%c0_31, %c0_32] : memref<1x1xf32, #tpu.memory_space<vmem>>, vector<1x1xf32>
    tpu.vector_store %arg7[%c0_31, %c0_32], %64 {strides = array<i32>} : memref<1x1xf32, #tpu.memory_space<vmem>>, vector<1x1xf32>,
    return
  }
}

module attributes {stable_mosaic.version = 11 : i64} {
  func.func @_recurrent_kernel(%arg0: i32, %arg1: memref<1x8x16xf32, #tpu.memory_space<vmem>>, %arg2: memref<1x8x4xf32, #tpu.memory_space<vmem>>, %arg3: memref<32x16xf32, #tpu.memory_space<vmem>>, %arg4: memref<16x128xf32, #tpu.memory_space<vmem>>, %arg5: memref<1x128xf32, #tpu.memory_space<vmem>>, %arg6: memref<16x128xf32, #tpu.memory_space<vmem>>, %arg7: memref<1x128xf32, #tpu.memory_space<vmem>>, %arg8: memref<96x32xf32, #tpu.memory_space<vmem>>, %arg9: memref<1x32xf32, #tpu.memory_space<vmem>>, %arg10: memref<8x32xf32, #tpu.memory_space<vmem>>, %arg11: memref<8x32xf32, #tpu.memory_space<vmem>>, %arg12: memref<8x32xf32, #tpu.memory_space<vmem>>, %arg13: memref<2x8x32xf32, #tpu.memory_space<vmem>>, %arg14: memref<2x8x32xf32, #tpu.memory_space<vmem>>) attributes {dimension_semantics = [#tpu.dimension_semantics<arbitrary>], iteration_bounds = array<i64: 4>, scalar_prefetch = 0 : i64, scratch_operands = 4 : i64, tpu.core_type = #tpu.core_type<tc>, window_params = [{transform_indices = @transform_0, window_bounds = array<i64: 1, 8, 16>}, {transform_indices = @transform_1, window_bounds = array<i64: 1, 8, 4>}, {pipeline_mode = #tpu.pipeline_mode<synchronous>, transform_indices = @transform_2, window_bounds = array<i64: 32, 16>}, {pipeline_mode = #tpu.pipeline_mode<synchronous>, transform_indices = @transform_3, window_bounds = array<i64: 16, 128>}, {pipeline_mode = #tpu.pipeline_mode<synchronous>, transform_indices = @transform_4, window_bounds = array<i64: 1, 128>}, {pipeline_mode = #tpu.pipeline_mode<synchronous>, transform_indices = @transform_5, window_bounds = array<i64: 16, 128>}, {pipeline_mode = #tpu.pipeline_mode<synchronous>, transform_indices = @transform_6, window_bounds = array<i64: 1, 128>}, {pipeline_mode = #tpu.pipeline_mode<synchronous>, transform_indices = @transform_7, window_bounds = array<i64: 96, 32>}, {pipeline_mode = #tpu.pipeline_mode<synchronous>, transform_indices = @transform_8, window_bounds = array<i64: 1, 32>}, {pipeline_mode = #tpu.pipeline_mode<synchronous>, transform_indices = @transform_9, window_bounds = array<i64: 8, 32>}]} {
    %c0_i32 = arith.constant 0 : i32
    %0 = arith.cmpi eq, %arg0, %c0_i32 : i32
    %1 = arith.extui %0 : i1 to i32
    %c0_i32_0 = arith.constant 0 : i32
    %2 = arith.cmpi ne, %1, %c0_i32_0 : i32
    scf.if %2 {
      %cst_56 = arith.constant 0.000000e+00 : f32
      %134 = vector.broadcast %cst_56 : f32 to vector<8x32xf32>
      %c0_57 = arith.constant 0 : index
      %c0_58 = arith.constant 0 : index
      %135 = vector.load %arg11[%c0_57, %c0_58] : memref<8x32xf32, #tpu.memory_space<vmem>>, vector<8x32xf32>
      tpu.vector_store %arg11[%c0_57, %c0_58], %134 {strides = array<i32>} : memref<8x32xf32, #tpu.memory_space<vmem>>, vector<8x32xf32>,
      %cst_59 = arith.constant 0.000000e+00 : f32
      %136 = vector.broadcast %cst_59 : f32 to vector<8x32xf32>
      %c0_60 = arith.constant 0 : index
      %c0_61 = arith.constant 0 : index
      %137 = vector.load %arg12[%c0_60, %c0_61] : memref<8x32xf32, #tpu.memory_space<vmem>>, vector<8x32xf32>
      tpu.vector_store %arg12[%c0_60, %c0_61], %136 {strides = array<i32>} : memref<8x32xf32, #tpu.memory_space<vmem>>, vector<8x32xf32>,
      %cst_62 = arith.constant 0.000000e+00 : f32
      %138 = vector.broadcast %cst_62 : f32 to vector<2x8x32xf32>
      %c0_63 = arith.constant 0 : index
      %c0_64 = arith.constant 0 : index
      %c0_65 = arith.constant 0 : index
      %139 = vector.load %arg13[%c0_63, %c0_64, %c0_65] : memref<2x8x32xf32, #tpu.memory_space<vmem>>, vector<2x8x32xf32>
      tpu.vector_store %arg13[%c0_63, %c0_64, %c0_65], %138 {strides = array<i32>} : memref<2x8x32xf32, #tpu.memory_space<vmem>>, vector<2x8x32xf32>,
      %cst_66 = arith.constant 0.000000e+00 : f32
      %140 = vector.broadcast %cst_66 : f32 to vector<2x8x32xf32>
      %c0_67 = arith.constant 0 : index
      %c0_68 = arith.constant 0 : index
      %c0_69 = arith.constant 0 : index
      %141 = vector.load %arg14[%c0_67, %c0_68, %c0_69] : memref<2x8x32xf32, #tpu.memory_space<vmem>>, vector<2x8x32xf32>
      tpu.vector_store %arg14[%c0_67, %c0_68, %c0_69], %140 {strides = array<i32>} : memref<2x8x32xf32, #tpu.memory_space<vmem>>, vector<2x8x32xf32>,
    } else {
    }
    %c0 = arith.constant 0 : index
    %c0_1 = arith.constant 0 : index
    %c0_2 = arith.constant 0 : index
    %3 = vector.load %arg1[%c0, %c0_1, %c0_2] : memref<1x8x16xf32, #tpu.memory_space<vmem>>, vector<1x8x16xf32>
    %4 = vector.shape_cast %3 : vector<1x8x16xf32> to vector<8x16xf32>
    %c0_3 = arith.constant 0 : index
    %c0_4 = arith.constant 0 : index
    %c0_5 = arith.constant 0 : index
    %5 = vector.load %arg2[%c0_3, %c0_4, %c0_5] : memref<1x8x4xf32, #tpu.memory_space<vmem>>, vector<1x8x4xf32>
    %6 = vector.shape_cast %5 : vector<1x8x4xf32> to vector<8x4xf32>
    %c0_6 = arith.constant 0 : index
    %c0_7 = arith.constant 0 : index
    %7 = vector.load %arg3[%c0_6, %c0_7] : memref<32x16xf32, #tpu.memory_space<vmem>>, vector<32x16xf32>
    %c0_8 = arith.constant 0 : index
    %c0_9 = arith.constant 0 : index
    %8 = vector.load %arg11[%c0_8, %c0_9] : memref<8x32xf32, #tpu.memory_space<vmem>>, vector<8x32xf32>
    %c0_10 = arith.constant 0 : index
    %c0_11 = arith.constant 0 : index
    %9 = vector.load %arg12[%c0_10, %c0_11] : memref<8x32xf32, #tpu.memory_space<vmem>>, vector<8x32xf32>
    %c0_12 = arith.constant 0 : index
    %c0_13 = arith.constant 0 : index
    %10 = vector.load %arg4[%c0_12, %c0_13] : memref<16x128xf32, #tpu.memory_space<vmem>>, vector<16x128xf32>
    %c0_14 = arith.constant 0 : index
    %c0_15 = arith.constant 0 : index
    %11 = vector.load %arg5[%c0_14, %c0_15] : memref<1x128xf32, #tpu.memory_space<vmem>>, vector<1x128xf32>
    %cst = arith.constant dense<0.000000e+00> : vector<8x16xf32>
    %12 = tpu.matmul %8, %7, %cst {dimension_numbers = #tpu.dot_dimension_numbers<[1], [0], [0], [1], [0, 0, 1, 1], [], []>} : vector<8x32xf32>, vector<32x16xf32>, vector<8x16xf32> -> vector<8x16xf32>
    %13 = arith.addf %4, %12 : vector<8x16xf32>
    %14 = vector.extract_strided_slice %13 {offsets = [0, 0], sizes = [2, 16], strides = [1, 1]} : vector<8x16xf32> to vector<2x16xf32>
    %15 = tpu.concatenate %14, %14, %14, %14 in 0 : vector<2x16xf32>, vector<2x16xf32>, vector<2x16xf32>, vector<2x16xf32> -> vector<8x16xf32>
    %16 = vector.extract_strided_slice %6 {offsets = [0, 0], sizes = [8, 1], strides = [1, 1]} : vector<8x4xf32> to vector<8x1xf32>
    %17 = vector.broadcast %16 : vector<8x1xf32> to vector<8x16xf32>
    %18 = arith.mulf %17, %15 : vector<8x16xf32>
    %19 = vector.extract_strided_slice %13 {offsets = [2, 0], sizes = [2, 16], strides = [1, 1]} : vector<8x16xf32> to vector<2x16xf32>
    %20 = tpu.concatenate %19, %19, %19, %19 in 0 : vector<2x16xf32>, vector<2x16xf32>, vector<2x16xf32>, vector<2x16xf32> -> vector<8x16xf32>
    %21 = vector.extract_strided_slice %6 {offsets = [0, 1], sizes = [8, 1], strides = [1, 1]} : vector<8x4xf32> to vector<8x1xf32>
    %22 = vector.broadcast %21 : vector<8x1xf32> to vector<8x16xf32>
    %23 = arith.mulf %22, %20 : vector<8x16xf32>
    %24 = arith.addf %18, %23 : vector<8x16xf32>
    %25 = vector.extract_strided_slice %13 {offsets = [4, 0], sizes = [2, 16], strides = [1, 1]} : vector<8x16xf32> to vector<2x16xf32>
    %26 = tpu.concatenate %25, %25, %25, %25 in 0 : vector<2x16xf32>, vector<2x16xf32>, vector<2x16xf32>, vector<2x16xf32> -> vector<8x16xf32>
    %27 = vector.extract_strided_slice %6 {offsets = [0, 2], sizes = [8, 1], strides = [1, 1]} : vector<8x4xf32> to vector<8x1xf32>
    %28 = vector.broadcast %27 : vector<8x1xf32> to vector<8x16xf32>
    %29 = arith.mulf %28, %26 : vector<8x16xf32>
    %30 = arith.addf %24, %29 : vector<8x16xf32>
    %31 = vector.extract_strided_slice %13 {offsets = [6, 0], sizes = [2, 16], strides = [1, 1]} : vector<8x16xf32> to vector<2x16xf32>
    %32 = tpu.concatenate %31, %31, %31, %31 in 0 : vector<2x16xf32>, vector<2x16xf32>, vector<2x16xf32>, vector<2x16xf32> -> vector<8x16xf32>
    %33 = vector.extract_strided_slice %6 {offsets = [0, 3], sizes = [8, 1], strides = [1, 1]} : vector<8x4xf32> to vector<8x1xf32>
    %34 = vector.broadcast %33 : vector<8x1xf32> to vector<8x16xf32>
    %35 = arith.mulf %34, %32 : vector<8x16xf32>
    %36 = arith.addf %30, %35 : vector<8x16xf32>
    %cst_16 = arith.constant 0.000000e+00 : f32
    %37 = vector.broadcast %cst_16 : f32 to vector<8x16xf32>
    %38 = arith.maximumf %36, %37 : vector<8x16xf32>
    %39 = vector.extract_strided_slice %38 {offsets = [0, 0], sizes = [2, 16], strides = [1, 1]} : vector<8x16xf32> to vector<2x16xf32>
    %40 = vector.extract_strided_slice %38 {offsets = [2, 0], sizes = [2, 16], strides = [1, 1]} : vector<8x16xf32> to vector<2x16xf32>
    %41 = arith.addf %39, %40 : vector<2x16xf32>
    %42 = vector.extract_strided_slice %38 {offsets = [4, 0], sizes = [2, 16], strides = [1, 1]} : vector<8x16xf32> to vector<2x16xf32>
    %43 = arith.addf %41, %42 : vector<2x16xf32>
    %44 = vector.extract_strided_slice %38 {offsets = [6, 0], sizes = [2, 16], strides = [1, 1]} : vector<8x16xf32> to vector<2x16xf32>
    %45 = arith.addf %43, %44 : vector<2x16xf32>
    %46 = tpu.concatenate %45, %45, %45, %45 in 0 : vector<2x16xf32>, vector<2x16xf32>, vector<2x16xf32>, vector<2x16xf32> -> vector<8x16xf32>
    %cst_17 = arith.constant 2.500000e-01 : f32
    %47 = vector.broadcast %cst_17 : f32 to vector<8x16xf32>
    %48 = arith.mulf %46, %47 : vector<8x16xf32>
    %cst_18 = arith.constant 9.99999997E-7 : f32
    %49 = vector.broadcast %cst_18 : f32 to vector<8x16xf32>
    %50 = arith.addf %48, %49 : vector<8x16xf32>
    %51 = arith.divf %38, %50 : vector<8x16xf32>
    %cst_19 = arith.constant 0.000000e+00 : f32
    %52 = vector.broadcast %cst_19 : f32 to vector<8x16xf32>
    %53 = arith.maximumf %51, %52 : vector<8x16xf32>
    %54 = math.absf %51 : vector<8x16xf32>
    %cst_20 = arith.constant 0.000000e+00 : f32
    %55 = vector.broadcast %cst_20 : f32 to vector<8x16xf32>
    %56 = arith.subf %55, %54 : vector<8x16xf32>
    %57 = math.exp %56 : vector<8x16xf32>
    %cst_21 = arith.constant 1.000000e+00 : f32
    %58 = vector.broadcast %cst_21 : f32 to vector<8x16xf32>
    %59 = arith.addf %58, %57 : vector<8x16xf32>
    %60 = math.log %59 : vector<8x16xf32>
    %61 = arith.addf %53, %60 : vector<8x16xf32>
    %cst_22 = arith.constant dense<0.000000e+00> : vector<8x128xf32>
    %62 = tpu.matmul %61, %10, %cst_22 {dimension_numbers = #tpu.dot_dimension_numbers<[1], [0], [0], [1], [0, 0, 1, 1], [], []>} : vector<8x16xf32>, vector<16x128xf32>, vector<8x128xf32> -> vector<8x128xf32>
    %63 = vector.broadcast %11 : vector<1x128xf32> to vector<8x128xf32>
    %64 = arith.addf %62, %63 : vector<8x128xf32>
    %65 = vector.extract_strided_slice %64 {offsets = [0, 0], sizes = [8, 32], strides = [1, 1]} : vector<8x128xf32> to vector<8x32xf32>
    %cst_23 = arith.constant 0.000000e+00 : f32
    %66 = vector.broadcast %cst_23 : f32 to vector<8x32xf32>
    %67 = arith.subf %66, %65 : vector<8x32xf32>
    %68 = math.exp %67 : vector<8x32xf32>
    %cst_24 = arith.constant 1.000000e+00 : f32
    %69 = vector.broadcast %cst_24 : f32 to vector<8x32xf32>
    %70 = arith.addf %69, %68 : vector<8x32xf32>
    %cst_25 = arith.constant 1.000000e+00 : f32
    %71 = vector.broadcast %cst_25 : f32 to vector<8x32xf32>
    %72 = arith.divf %71, %70 : vector<8x32xf32>
    %73 = vector.extract_strided_slice %64 {offsets = [0, 32], sizes = [8, 32], strides = [1, 1]} : vector<8x128xf32> to vector<8x32xf32>
    %cst_26 = arith.constant 0.000000e+00 : f32
    %74 = vector.broadcast %cst_26 : f32 to vector<8x32xf32>
    %75 = arith.subf %74, %73 : vector<8x32xf32>
    %76 = math.exp %75 : vector<8x32xf32>
    %cst_27 = arith.constant 1.000000e+00 : f32
    %77 = vector.broadcast %cst_27 : f32 to vector<8x32xf32>
    %78 = arith.addf %77, %76 : vector<8x32xf32>
    %cst_28 = arith.constant 1.000000e+00 : f32
    %79 = vector.broadcast %cst_28 : f32 to vector<8x32xf32>
    %80 = arith.divf %79, %78 : vector<8x32xf32>
    %81 = vector.extract_strided_slice %64 {offsets = [0, 64], sizes = [8, 32], strides = [1, 1]} : vector<8x128xf32> to vector<8x32xf32>
    %cst_29 = arith.constant 0.000000e+00 : f32
    %82 = vector.broadcast %cst_29 : f32 to vector<8x32xf32>
    %83 = arith.subf %82, %81 : vector<8x32xf32>
    %84 = math.exp %83 : vector<8x32xf32>
    %cst_30 = arith.constant 1.000000e+00 : f32
    %85 = vector.broadcast %cst_30 : f32 to vector<8x32xf32>
    %86 = arith.addf %85, %84 : vector<8x32xf32>
    %cst_31 = arith.constant 1.000000e+00 : f32
    %87 = vector.broadcast %cst_31 : f32 to vector<8x32xf32>
    %88 = arith.divf %87, %86 : vector<8x32xf32>
    %89 = vector.extract_strided_slice %64 {offsets = [0, 96], sizes = [8, 32], strides = [1, 1]} : vector<8x128xf32> to vector<8x32xf32>
    %cst_32 = arith.constant 0.000000e+00 : f32
    %90 = vector.broadcast %cst_32 : f32 to vector<8x32xf32>
    %91 = arith.maximumf %89, %90 : vector<8x32xf32>
    %92 = arith.mulf %80, %9 : vector<8x32xf32>
    %93 = arith.mulf %72, %91 : vector<8x32xf32>
    %94 = arith.addf %92, %93 : vector<8x32xf32>
    %95 = math.tanh %94 : vector<8x32xf32>
    %96 = arith.mulf %88, %95 : vector<8x32xf32>
    %c0_33 = arith.constant 0 : index
    %c0_34 = arith.constant 0 : index
    %97 = vector.load %arg11[%c0_33, %c0_34] : memref<8x32xf32, #tpu.memory_space<vmem>>, vector<8x32xf32>
    tpu.vector_store %arg11[%c0_33, %c0_34], %96 {strides = array<i32>} : memref<8x32xf32, #tpu.memory_space<vmem>>, vector<8x32xf32>,
    %c0_35 = arith.constant 0 : index
    %c0_36 = arith.constant 0 : index
    %98 = vector.load %arg12[%c0_35, %c0_36] : memref<8x32xf32, #tpu.memory_space<vmem>>, vector<8x32xf32>
    tpu.vector_store %arg12[%c0_35, %c0_36], %94 {strides = array<i32>} : memref<8x32xf32, #tpu.memory_space<vmem>>, vector<8x32xf32>,
    %c0_i32_37 = arith.constant 0 : i32
    %99 = arith.cmpi sge, %arg0, %c0_i32_37 : i32
    %c0_i32_38 = arith.constant 0 : i32
    %100 = arith.subi %arg0, %c0_i32_38 : i32
    %c2_i32 = arith.constant 2 : i32
    %c0_i32_39 = arith.constant 0 : i32
    %101 = arith.cmpi eq, %c2_i32, %c0_i32_39 : i32
    %c1_i32 = arith.constant 1 : i32
    %102 = arith.select %101, %c1_i32, %c2_i32 : i32
    %103 = arith.remsi %100, %102 : i32
    %c0_i32_40 = arith.constant 0 : i32
    %104 = arith.cmpi ne, %103, %c0_i32_40 : i32
    %c0_i32_41 = arith.constant 0 : i32
    %105 = arith.cmpi slt, %103, %c0_i32_41 : i32
    %c0_i32_42 = arith.constant 0 : i32
    %106 = arith.cmpi slt, %102, %c0_i32_42 : i32
    %107 = arith.xori %105, %106 : i1
    %108 = arith.andi %107, %104 : i1
    %109 = arith.addi %103, %102 : i32
    %110 = arith.select %108, %109, %103 : i32
    %c0_i32_43 = arith.constant 0 : i32
    %111 = arith.cmpi eq, %110, %c0_i32_43 : i32
    %112 = arith.andi %99, %111 : i1
    %113 = arith.extui %112 : i1 to i32
    %c0_i32_44 = arith.constant 0 : i32
    %114 = arith.cmpi ne, %113, %c0_i32_44 : i32
    scf.if %114 {
      %c0_56 = arith.constant 0 : index
      %c0_57 = arith.constant 0 : index
      %c0_58 = arith.constant 0 : index
      %134 = vector.load %arg13[%c0_56, %c0_57, %c0_58] : memref<2x8x32xf32, #tpu.memory_space<vmem>>, vector<1x8x32xf32>
      %135 = vector.shape_cast %134 : vector<1x8x32xf32> to vector<8x32xf32>
      %c0_59 = arith.constant 0 : index
      %c0_60 = arith.constant 0 : index
      %c0_61 = arith.constant 0 : index
      %136 = vector.load %arg14[%c0_59, %c0_60, %c0_61] : memref<2x8x32xf32, #tpu.memory_space<vmem>>, vector<1x8x32xf32>
      %137 = vector.shape_cast %136 : vector<1x8x32xf32> to vector<8x32xf32>
      %c0_62 = arith.constant 0 : index
      %c0_63 = arith.constant 0 : index
      %138 = vector.load %arg6[%c0_62, %c0_63] : memref<16x128xf32, #tpu.memory_space<vmem>>, vector<16x128xf32>
      %c0_64 = arith.constant 0 : index
      %c0_65 = arith.constant 0 : index
      %139 = vector.load %arg7[%c0_64, %c0_65] : memref<1x128xf32, #tpu.memory_space<vmem>>, vector<1x128xf32>
      %cst_66 = arith.constant dense<0.000000e+00> : vector<8x16xf32>
      %140 = tpu.matmul %135, %7, %cst_66 {dimension_numbers = #tpu.dot_dimension_numbers<[1], [0], [0], [1], [0, 0, 1, 1], [], []>} : vector<8x32xf32>, vector<32x16xf32>, vector<8x16xf32> -> vector<8x16xf32>
      %141 = arith.addf %4, %140 : vector<8x16xf32>
      %142 = vector.extract_strided_slice %141 {offsets = [0, 0], sizes = [2, 16], strides = [1, 1]} : vector<8x16xf32> to vector<2x16xf32>
      %143 = tpu.concatenate %142, %142, %142, %142 in 0 : vector<2x16xf32>, vector<2x16xf32>, vector<2x16xf32>, vector<2x16xf32> -> vector<8x16xf32>
      %144 = vector.extract_strided_slice %6 {offsets = [0, 0], sizes = [8, 1], strides = [1, 1]} : vector<8x4xf32> to vector<8x1xf32>
      %145 = vector.broadcast %144 : vector<8x1xf32> to vector<8x16xf32>
      %146 = arith.mulf %145, %143 : vector<8x16xf32>
      %147 = vector.extract_strided_slice %141 {offsets = [2, 0], sizes = [2, 16], strides = [1, 1]} : vector<8x16xf32> to vector<2x16xf32>
      %148 = tpu.concatenate %147, %147, %147, %147 in 0 : vector<2x16xf32>, vector<2x16xf32>, vector<2x16xf32>, vector<2x16xf32> -> vector<8x16xf32>
      %149 = vector.extract_strided_slice %6 {offsets = [0, 1], sizes = [8, 1], strides = [1, 1]} : vector<8x4xf32> to vector<8x1xf32>
      %150 = vector.broadcast %149 : vector<8x1xf32> to vector<8x16xf32>
      %151 = arith.mulf %150, %148 : vector<8x16xf32>
      %152 = arith.addf %146, %151 : vector<8x16xf32>
      %153 = vector.extract_strided_slice %141 {offsets = [4, 0], sizes = [2, 16], strides = [1, 1]} : vector<8x16xf32> to vector<2x16xf32>
      %154 = tpu.concatenate %153, %153, %153, %153 in 0 : vector<2x16xf32>, vector<2x16xf32>, vector<2x16xf32>, vector<2x16xf32> -> vector<8x16xf32>
      %155 = vector.extract_strided_slice %6 {offsets = [0, 2], sizes = [8, 1], strides = [1, 1]} : vector<8x4xf32> to vector<8x1xf32>
      %156 = vector.broadcast %155 : vector<8x1xf32> to vector<8x16xf32>
      %157 = arith.mulf %156, %154 : vector<8x16xf32>
      %158 = arith.addf %152, %157 : vector<8x16xf32>
      %159 = vector.extract_strided_slice %141 {offsets = [6, 0], sizes = [2, 16], strides = [1, 1]} : vector<8x16xf32> to vector<2x16xf32>
      %160 = tpu.concatenate %159, %159, %159, %159 in 0 : vector<2x16xf32>, vector<2x16xf32>, vector<2x16xf32>, vector<2x16xf32> -> vector<8x16xf32>
      %161 = vector.extract_strided_slice %6 {offsets = [0, 3], sizes = [8, 1], strides = [1, 1]} : vector<8x4xf32> to vector<8x1xf32>
      %162 = vector.broadcast %161 : vector<8x1xf32> to vector<8x16xf32>
      %163 = arith.mulf %162, %160 : vector<8x16xf32>
      %164 = arith.addf %158, %163 : vector<8x16xf32>
      %cst_67 = arith.constant 0.000000e+00 : f32
      %165 = vector.broadcast %cst_67 : f32 to vector<8x16xf32>
      %166 = arith.maximumf %164, %165 : vector<8x16xf32>
      %167 = vector.extract_strided_slice %166 {offsets = [0, 0], sizes = [2, 16], strides = [1, 1]} : vector<8x16xf32> to vector<2x16xf32>
      %168 = vector.extract_strided_slice %166 {offsets = [2, 0], sizes = [2, 16], strides = [1, 1]} : vector<8x16xf32> to vector<2x16xf32>
      %169 = arith.addf %167, %168 : vector<2x16xf32>
      %170 = vector.extract_strided_slice %166 {offsets = [4, 0], sizes = [2, 16], strides = [1, 1]} : vector<8x16xf32> to vector<2x16xf32>
      %171 = arith.addf %169, %170 : vector<2x16xf32>
      %172 = vector.extract_strided_slice %166 {offsets = [6, 0], sizes = [2, 16], strides = [1, 1]} : vector<8x16xf32> to vector<2x16xf32>
      %173 = arith.addf %171, %172 : vector<2x16xf32>
      %174 = tpu.concatenate %173, %173, %173, %173 in 0 : vector<2x16xf32>, vector<2x16xf32>, vector<2x16xf32>, vector<2x16xf32> -> vector<8x16xf32>
      %cst_68 = arith.constant 2.500000e-01 : f32
      %175 = vector.broadcast %cst_68 : f32 to vector<8x16xf32>
      %176 = arith.mulf %174, %175 : vector<8x16xf32>
      %cst_69 = arith.constant 9.99999997E-7 : f32
      %177 = vector.broadcast %cst_69 : f32 to vector<8x16xf32>
      %178 = arith.addf %176, %177 : vector<8x16xf32>
      %179 = arith.divf %166, %178 : vector<8x16xf32>
      %cst_70 = arith.constant 0.000000e+00 : f32
      %180 = vector.broadcast %cst_70 : f32 to vector<8x16xf32>
      %181 = arith.maximumf %179, %180 : vector<8x16xf32>
      %182 = math.absf %179 : vector<8x16xf32>
      %cst_71 = arith.constant 0.000000e+00 : f32
      %183 = vector.broadcast %cst_71 : f32 to vector<8x16xf32>
      %184 = arith.subf %183, %182 : vector<8x16xf32>
      %185 = math.exp %184 : vector<8x16xf32>
      %cst_72 = arith.constant 1.000000e+00 : f32
      %186 = vector.broadcast %cst_72 : f32 to vector<8x16xf32>
      %187 = arith.addf %186, %185 : vector<8x16xf32>
      %188 = math.log %187 : vector<8x16xf32>
      %189 = arith.addf %181, %188 : vector<8x16xf32>
      %cst_73 = arith.constant dense<0.000000e+00> : vector<8x128xf32>
      %190 = tpu.matmul %189, %138, %cst_73 {dimension_numbers = #tpu.dot_dimension_numbers<[1], [0], [0], [1], [0, 0, 1, 1], [], []>} : vector<8x16xf32>, vector<16x128xf32>, vector<8x128xf32> -> vector<8x128xf32>
      %191 = vector.broadcast %139 : vector<1x128xf32> to vector<8x128xf32>
      %192 = arith.addf %190, %191 : vector<8x128xf32>
      %193 = vector.extract_strided_slice %192 {offsets = [0, 0], sizes = [8, 32], strides = [1, 1]} : vector<8x128xf32> to vector<8x32xf32>
      %cst_74 = arith.constant 0.000000e+00 : f32
      %194 = vector.broadcast %cst_74 : f32 to vector<8x32xf32>
      %195 = arith.subf %194, %193 : vector<8x32xf32>
      %196 = math.exp %195 : vector<8x32xf32>
      %cst_75 = arith.constant 1.000000e+00 : f32
      %197 = vector.broadcast %cst_75 : f32 to vector<8x32xf32>
      %198 = arith.addf %197, %196 : vector<8x32xf32>
      %cst_76 = arith.constant 1.000000e+00 : f32
      %199 = vector.broadcast %cst_76 : f32 to vector<8x32xf32>
      %200 = arith.divf %199, %198 : vector<8x32xf32>
      %201 = vector.extract_strided_slice %192 {offsets = [0, 32], sizes = [8, 32], strides = [1, 1]} : vector<8x128xf32> to vector<8x32xf32>
      %cst_77 = arith.constant 0.000000e+00 : f32
      %202 = vector.broadcast %cst_77 : f32 to vector<8x32xf32>
      %203 = arith.subf %202, %201 : vector<8x32xf32>
      %204 = math.exp %203 : vector<8x32xf32>
      %cst_78 = arith.constant 1.000000e+00 : f32
      %205 = vector.broadcast %cst_78 : f32 to vector<8x32xf32>
      %206 = arith.addf %205, %204 : vector<8x32xf32>
      %cst_79 = arith.constant 1.000000e+00 : f32
      %207 = vector.broadcast %cst_79 : f32 to vector<8x32xf32>
      %208 = arith.divf %207, %206 : vector<8x32xf32>
      %209 = vector.extract_strided_slice %192 {offsets = [0, 64], sizes = [8, 32], strides = [1, 1]} : vector<8x128xf32> to vector<8x32xf32>
      %cst_80 = arith.constant 0.000000e+00 : f32
      %210 = vector.broadcast %cst_80 : f32 to vector<8x32xf32>
      %211 = arith.subf %210, %209 : vector<8x32xf32>
      %212 = math.exp %211 : vector<8x32xf32>
      %cst_81 = arith.constant 1.000000e+00 : f32
      %213 = vector.broadcast %cst_81 : f32 to vector<8x32xf32>
      %214 = arith.addf %213, %212 : vector<8x32xf32>
      %cst_82 = arith.constant 1.000000e+00 : f32
      %215 = vector.broadcast %cst_82 : f32 to vector<8x32xf32>
      %216 = arith.divf %215, %214 : vector<8x32xf32>
      %217 = vector.extract_strided_slice %192 {offsets = [0, 96], sizes = [8, 32], strides = [1, 1]} : vector<8x128xf32> to vector<8x32xf32>
      %cst_83 = arith.constant 0.000000e+00 : f32
      %218 = vector.broadcast %cst_83 : f32 to vector<8x32xf32>
      %219 = arith.maximumf %217, %218 : vector<8x32xf32>
      %220 = arith.mulf %208, %137 : vector<8x32xf32>
      %221 = arith.mulf %200, %219 : vector<8x32xf32>
      %222 = arith.addf %220, %221 : vector<8x32xf32>
      %223 = math.tanh %222 : vector<8x32xf32>
      %224 = arith.mulf %216, %223 : vector<8x32xf32>
      %c0_84 = arith.constant 0 : index
      %c0_85 = arith.constant 0 : index
      %c0_86 = arith.constant 0 : index
      %225 = vector.load %arg13[%c0_84, %c0_85, %c0_86] : memref<2x8x32xf32, #tpu.memory_space<vmem>>, vector<1x8x32xf32>
      %226 = vector.shape_cast %225 : vector<1x8x32xf32> to vector<8x32xf32>
      %227 = vector.shape_cast %224 : vector<8x32xf32> to vector<1x8x32xf32>
      tpu.vector_store %arg13[%c0_84, %c0_85, %c0_86], %227 {strides = array<i32>} : memref<2x8x32xf32, #tpu.memory_space<vmem>>, vector<1x8x32xf32>,
      %c0_87 = arith.constant 0 : index
      %c0_88 = arith.constant 0 : index
      %c0_89 = arith.constant 0 : index
      %228 = vector.load %arg14[%c0_87, %c0_88, %c0_89] : memref<2x8x32xf32, #tpu.memory_space<vmem>>, vector<1x8x32xf32>
      %229 = vector.shape_cast %228 : vector<1x8x32xf32> to vector<8x32xf32>
      %230 = vector.shape_cast %222 : vector<8x32xf32> to vector<1x8x32xf32>
      tpu.vector_store %arg14[%c0_87, %c0_88, %c0_89], %230 {strides = array<i32>} : memref<2x8x32xf32, #tpu.memory_space<vmem>>, vector<1x8x32xf32>,
    } else {
    }
    %c0_i32_45 = arith.constant 0 : i32
    %115 = arith.cmpi sge, %arg0, %c0_i32_45 : i32
    %c0_i32_46 = arith.constant 0 : i32
    %116 = arith.subi %arg0, %c0_i32_46 : i32
    %c2_i32_47 = arith.constant 2 : i32
    %c0_i32_48 = arith.constant 0 : i32
    %117 = arith.cmpi eq, %c2_i32_47, %c0_i32_48 : i32
    %c1_i32_49 = arith.constant 1 : i32
    %118 = arith.select %117, %c1_i32_49, %c2_i32_47 : i32
    %119 = arith.remsi %116, %118 : i32
    %c0_i32_50 = arith.constant 0 : i32
    %120 = arith.cmpi ne, %119, %c0_i32_50 : i32
    %c0_i32_51 = arith.constant 0 : i32
    %121 = arith.cmpi slt, %119, %c0_i32_51 : i32
    %c0_i32_52 = arith.constant 0 : i32
    %122 = arith.cmpi slt, %118, %c0_i32_52 : i32
    %123 = arith.xori %121, %122 : i1
    %124 = arith.andi %123, %120 : i1
    %125 = arith.addi %119, %118 : i32
    %126 = arith.select %124, %125, %119 : i32
    %c1_i32_53 = arith.constant 1 : i32
    %127 = arith.cmpi eq, %126, %c1_i32_53 : i32
    %128 = arith.andi %115, %127 : i1
    %129 = arith.extui %128 : i1 to i32
    %c0_i32_54 = arith.constant 0 : i32
    %130 = arith.cmpi ne, %129, %c0_i32_54 : i32
    scf.if %130 {
      %c1 = arith.constant 1 : index
      %c0_56 = arith.constant 0 : index
      %c0_57 = arith.constant 0 : index
      %134 = vector.load %arg13[%c1, %c0_56, %c0_57] : memref<2x8x32xf32, #tpu.memory_space<vmem>>, vector<1x8x32xf32>
      %135 = vector.shape_cast %134 : vector<1x8x32xf32> to vector<8x32xf32>
      %c1_58 = arith.constant 1 : index
      %c0_59 = arith.constant 0 : index
      %c0_60 = arith.constant 0 : index
      %136 = vector.load %arg14[%c1_58, %c0_59, %c0_60] : memref<2x8x32xf32, #tpu.memory_space<vmem>>, vector<1x8x32xf32>
      %137 = vector.shape_cast %136 : vector<1x8x32xf32> to vector<8x32xf32>
      %c0_61 = arith.constant 0 : index
      %c0_62 = arith.constant 0 : index
      %138 = vector.load %arg6[%c0_61, %c0_62] : memref<16x128xf32, #tpu.memory_space<vmem>>, vector<16x128xf32>
      %c0_63 = arith.constant 0 : index
      %c0_64 = arith.constant 0 : index
      %139 = vector.load %arg7[%c0_63, %c0_64] : memref<1x128xf32, #tpu.memory_space<vmem>>, vector<1x128xf32>
      %cst_65 = arith.constant dense<0.000000e+00> : vector<8x16xf32>
      %140 = tpu.matmul %135, %7, %cst_65 {dimension_numbers = #tpu.dot_dimension_numbers<[1], [0], [0], [1], [0, 0, 1, 1], [], []>} : vector<8x32xf32>, vector<32x16xf32>, vector<8x16xf32> -> vector<8x16xf32>
      %141 = arith.addf %4, %140 : vector<8x16xf32>
      %142 = vector.extract_strided_slice %141 {offsets = [0, 0], sizes = [2, 16], strides = [1, 1]} : vector<8x16xf32> to vector<2x16xf32>
      %143 = tpu.concatenate %142, %142, %142, %142 in 0 : vector<2x16xf32>, vector<2x16xf32>, vector<2x16xf32>, vector<2x16xf32> -> vector<8x16xf32>
      %144 = vector.extract_strided_slice %6 {offsets = [0, 0], sizes = [8, 1], strides = [1, 1]} : vector<8x4xf32> to vector<8x1xf32>
      %145 = vector.broadcast %144 : vector<8x1xf32> to vector<8x16xf32>
      %146 = arith.mulf %145, %143 : vector<8x16xf32>
      %147 = vector.extract_strided_slice %141 {offsets = [2, 0], sizes = [2, 16], strides = [1, 1]} : vector<8x16xf32> to vector<2x16xf32>
      %148 = tpu.concatenate %147, %147, %147, %147 in 0 : vector<2x16xf32>, vector<2x16xf32>, vector<2x16xf32>, vector<2x16xf32> -> vector<8x16xf32>
      %149 = vector.extract_strided_slice %6 {offsets = [0, 1], sizes = [8, 1], strides = [1, 1]} : vector<8x4xf32> to vector<8x1xf32>
      %150 = vector.broadcast %149 : vector<8x1xf32> to vector<8x16xf32>
      %151 = arith.mulf %150, %148 : vector<8x16xf32>
      %152 = arith.addf %146, %151 : vector<8x16xf32>
      %153 = vector.extract_strided_slice %141 {offsets = [4, 0], sizes = [2, 16], strides = [1, 1]} : vector<8x16xf32> to vector<2x16xf32>
      %154 = tpu.concatenate %153, %153, %153, %153 in 0 : vector<2x16xf32>, vector<2x16xf32>, vector<2x16xf32>, vector<2x16xf32> -> vector<8x16xf32>
      %155 = vector.extract_strided_slice %6 {offsets = [0, 2], sizes = [8, 1], strides = [1, 1]} : vector<8x4xf32> to vector<8x1xf32>
      %156 = vector.broadcast %155 : vector<8x1xf32> to vector<8x16xf32>
      %157 = arith.mulf %156, %154 : vector<8x16xf32>
      %158 = arith.addf %152, %157 : vector<8x16xf32>
      %159 = vector.extract_strided_slice %141 {offsets = [6, 0], sizes = [2, 16], strides = [1, 1]} : vector<8x16xf32> to vector<2x16xf32>
      %160 = tpu.concatenate %159, %159, %159, %159 in 0 : vector<2x16xf32>, vector<2x16xf32>, vector<2x16xf32>, vector<2x16xf32> -> vector<8x16xf32>
      %161 = vector.extract_strided_slice %6 {offsets = [0, 3], sizes = [8, 1], strides = [1, 1]} : vector<8x4xf32> to vector<8x1xf32>
      %162 = vector.broadcast %161 : vector<8x1xf32> to vector<8x16xf32>
      %163 = arith.mulf %162, %160 : vector<8x16xf32>
      %164 = arith.addf %158, %163 : vector<8x16xf32>
      %cst_66 = arith.constant 0.000000e+00 : f32
      %165 = vector.broadcast %cst_66 : f32 to vector<8x16xf32>
      %166 = arith.maximumf %164, %165 : vector<8x16xf32>
      %167 = vector.extract_strided_slice %166 {offsets = [0, 0], sizes = [2, 16], strides = [1, 1]} : vector<8x16xf32> to vector<2x16xf32>
      %168 = vector.extract_strided_slice %166 {offsets = [2, 0], sizes = [2, 16], strides = [1, 1]} : vector<8x16xf32> to vector<2x16xf32>
      %169 = arith.addf %167, %168 : vector<2x16xf32>
      %170 = vector.extract_strided_slice %166 {offsets = [4, 0], sizes = [2, 16], strides = [1, 1]} : vector<8x16xf32> to vector<2x16xf32>
      %171 = arith.addf %169, %170 : vector<2x16xf32>
      %172 = vector.extract_strided_slice %166 {offsets = [6, 0], sizes = [2, 16], strides = [1, 1]} : vector<8x16xf32> to vector<2x16xf32>
      %173 = arith.addf %171, %172 : vector<2x16xf32>
      %174 = tpu.concatenate %173, %173, %173, %173 in 0 : vector<2x16xf32>, vector<2x16xf32>, vector<2x16xf32>, vector<2x16xf32> -> vector<8x16xf32>
      %cst_67 = arith.constant 2.500000e-01 : f32
      %175 = vector.broadcast %cst_67 : f32 to vector<8x16xf32>
      %176 = arith.mulf %174, %175 : vector<8x16xf32>
      %cst_68 = arith.constant 9.99999997E-7 : f32
      %177 = vector.broadcast %cst_68 : f32 to vector<8x16xf32>
      %178 = arith.addf %176, %177 : vector<8x16xf32>
      %179 = arith.divf %166, %178 : vector<8x16xf32>
      %cst_69 = arith.constant 0.000000e+00 : f32
      %180 = vector.broadcast %cst_69 : f32 to vector<8x16xf32>
      %181 = arith.maximumf %179, %180 : vector<8x16xf32>
      %182 = math.absf %179 : vector<8x16xf32>
      %cst_70 = arith.constant 0.000000e+00 : f32
      %183 = vector.broadcast %cst_70 : f32 to vector<8x16xf32>
      %184 = arith.subf %183, %182 : vector<8x16xf32>
      %185 = math.exp %184 : vector<8x16xf32>
      %cst_71 = arith.constant 1.000000e+00 : f32
      %186 = vector.broadcast %cst_71 : f32 to vector<8x16xf32>
      %187 = arith.addf %186, %185 : vector<8x16xf32>
      %188 = math.log %187 : vector<8x16xf32>
      %189 = arith.addf %181, %188 : vector<8x16xf32>
      %cst_72 = arith.constant dense<0.000000e+00> : vector<8x128xf32>
      %190 = tpu.matmul %189, %138, %cst_72 {dimension_numbers = #tpu.dot_dimension_numbers<[1], [0], [0], [1], [0, 0, 1, 1], [], []>} : vector<8x16xf32>, vector<16x128xf32>, vector<8x128xf32> -> vector<8x128xf32>
      %191 = vector.broadcast %139 : vector<1x128xf32> to vector<8x128xf32>
      %192 = arith.addf %190, %191 : vector<8x128xf32>
      %193 = vector.extract_strided_slice %192 {offsets = [0, 0], sizes = [8, 32], strides = [1, 1]} : vector<8x128xf32> to vector<8x32xf32>
      %cst_73 = arith.constant 0.000000e+00 : f32
      %194 = vector.broadcast %cst_73 : f32 to vector<8x32xf32>
      %195 = arith.subf %194, %193 : vector<8x32xf32>
      %196 = math.exp %195 : vector<8x32xf32>
      %cst_74 = arith.constant 1.000000e+00 : f32
      %197 = vector.broadcast %cst_74 : f32 to vector<8x32xf32>
      %198 = arith.addf %197, %196 : vector<8x32xf32>
      %cst_75 = arith.constant 1.000000e+00 : f32
      %199 = vector.broadcast %cst_75 : f32 to vector<8x32xf32>
      %200 = arith.divf %199, %198 : vector<8x32xf32>
      %201 = vector.extract_strided_slice %192 {offsets = [0, 32], sizes = [8, 32], strides = [1, 1]} : vector<8x128xf32> to vector<8x32xf32>
      %cst_76 = arith.constant 0.000000e+00 : f32
      %202 = vector.broadcast %cst_76 : f32 to vector<8x32xf32>
      %203 = arith.subf %202, %201 : vector<8x32xf32>
      %204 = math.exp %203 : vector<8x32xf32>
      %cst_77 = arith.constant 1.000000e+00 : f32
      %205 = vector.broadcast %cst_77 : f32 to vector<8x32xf32>
      %206 = arith.addf %205, %204 : vector<8x32xf32>
      %cst_78 = arith.constant 1.000000e+00 : f32
      %207 = vector.broadcast %cst_78 : f32 to vector<8x32xf32>
      %208 = arith.divf %207, %206 : vector<8x32xf32>
      %209 = vector.extract_strided_slice %192 {offsets = [0, 64], sizes = [8, 32], strides = [1, 1]} : vector<8x128xf32> to vector<8x32xf32>
      %cst_79 = arith.constant 0.000000e+00 : f32
      %210 = vector.broadcast %cst_79 : f32 to vector<8x32xf32>
      %211 = arith.subf %210, %209 : vector<8x32xf32>
      %212 = math.exp %211 : vector<8x32xf32>
      %cst_80 = arith.constant 1.000000e+00 : f32
      %213 = vector.broadcast %cst_80 : f32 to vector<8x32xf32>
      %214 = arith.addf %213, %212 : vector<8x32xf32>
      %cst_81 = arith.constant 1.000000e+00 : f32
      %215 = vector.broadcast %cst_81 : f32 to vector<8x32xf32>
      %216 = arith.divf %215, %214 : vector<8x32xf32>
      %217 = vector.extract_strided_slice %192 {offsets = [0, 96], sizes = [8, 32], strides = [1, 1]} : vector<8x128xf32> to vector<8x32xf32>
      %cst_82 = arith.constant 0.000000e+00 : f32
      %218 = vector.broadcast %cst_82 : f32 to vector<8x32xf32>
      %219 = arith.maximumf %217, %218 : vector<8x32xf32>
      %220 = arith.mulf %208, %137 : vector<8x32xf32>
      %221 = arith.mulf %200, %219 : vector<8x32xf32>
      %222 = arith.addf %220, %221 : vector<8x32xf32>
      %223 = math.tanh %222 : vector<8x32xf32>
      %224 = arith.mulf %216, %223 : vector<8x32xf32>
      %c1_83 = arith.constant 1 : index
      %c0_84 = arith.constant 0 : index
      %c0_85 = arith.constant 0 : index
      %225 = vector.load %arg13[%c1_83, %c0_84, %c0_85] : memref<2x8x32xf32, #tpu.memory_space<vmem>>, vector<1x8x32xf32>
      %226 = vector.shape_cast %225 : vector<1x8x32xf32> to vector<8x32xf32>
      %227 = vector.shape_cast %224 : vector<8x32xf32> to vector<1x8x32xf32>
      tpu.vector_store %arg13[%c1_83, %c0_84, %c0_85], %227 {strides = array<i32>} : memref<2x8x32xf32, #tpu.memory_space<vmem>>, vector<1x8x32xf32>,
      %c1_86 = arith.constant 1 : index
      %c0_87 = arith.constant 0 : index
      %c0_88 = arith.constant 0 : index
      %228 = vector.load %arg14[%c1_86, %c0_87, %c0_88] : memref<2x8x32xf32, #tpu.memory_space<vmem>>, vector<1x8x32xf32>
      %229 = vector.shape_cast %228 : vector<1x8x32xf32> to vector<8x32xf32>
      %230 = vector.shape_cast %222 : vector<8x32xf32> to vector<1x8x32xf32>
      tpu.vector_store %arg14[%c1_86, %c0_87, %c0_88], %230 {strides = array<i32>} : memref<2x8x32xf32, #tpu.memory_space<vmem>>, vector<1x8x32xf32>,
    } else {
    }
    %c3_i32 = arith.constant 3 : i32
    %131 = arith.cmpi eq, %arg0, %c3_i32 : i32
    %132 = arith.extui %131 : i1 to i32
    %c0_i32_55 = arith.constant 0 : i32
    %133 = arith.cmpi ne, %132, %c0_i32_55 : i32
    scf.if %133 {
      %c0_56 = arith.constant 0 : index
      %c0_57 = arith.constant 0 : index
      %134 = vector.load %arg11[%c0_56, %c0_57] : memref<8x32xf32, #tpu.memory_space<vmem>>, vector<8x32xf32>
      %c0_58 = arith.constant 0 : index
      %c0_59 = arith.constant 0 : index
      %c0_60 = arith.constant 0 : index
      %135 = vector.load %arg13[%c0_58, %c0_59, %c0_60] : memref<2x8x32xf32, #tpu.memory_space<vmem>>, vector<1x8x32xf32>
      %136 = vector.shape_cast %135 : vector<1x8x32xf32> to vector<8x32xf32>
      %c1 = arith.constant 1 : index
      %c0_61 = arith.constant 0 : index
      %c0_62 = arith.constant 0 : index
      %137 = vector.load %arg13[%c1, %c0_61, %c0_62] : memref<2x8x32xf32, #tpu.memory_space<vmem>>, vector<1x8x32xf32>
      %138 = vector.shape_cast %137 : vector<1x8x32xf32> to vector<8x32xf32>
      %139 = tpu.concatenate %134, %136, %138 in 1 : vector<8x32xf32>, vector<8x32xf32>, vector<8x32xf32> -> vector<8x96xf32>
      %c0_63 = arith.constant 0 : index
      %c0_64 = arith.constant 0 : index
      %140 = vector.load %arg8[%c0_63, %c0_64] : memref<96x32xf32, #tpu.memory_space<vmem>>, vector<96x32xf32>
      %cst_65 = arith.constant dense<0.000000e+00> : vector<8x32xf32>
      %141 = tpu.matmul %139, %140, %cst_65 {dimension_numbers = #tpu.dot_dimension_numbers<[1], [0], [0], [1], [0, 0, 1, 1], [], []>} : vector<8x96xf32>, vector<96x32xf32>, vector<8x32xf32> -> vector<8x32xf32>
      %c0_66 = arith.constant 0 : index
      %c0_67 = arith.constant 0 : index
      %142 = vector.load %arg9[%c0_66, %c0_67] : memref<1x32xf32, #tpu.memory_space<vmem>>, vector<1x32xf32>
      %143 = vector.broadcast %142 : vector<1x32xf32> to vector<8x32xf32>
      %144 = arith.addf %141, %143 : vector<8x32xf32>
      %c0_68 = arith.constant 0 : index
      %c0_69 = arith.constant 0 : index
      %145 = vector.load %arg10[%c0_68, %c0_69] : memref<8x32xf32, #tpu.memory_space<vmem>>, vector<8x32xf32>
      tpu.vector_store %arg10[%c0_68, %c0_69], %144 {strides = array<i32>} : memref<8x32xf32, #tpu.memory_space<vmem>>, vector<8x32xf32>,
    } else {
    }
    return
  }
  func.func @transform_0(%arg0: i32) -> (i32, i32, i32) {
    %c0_i32 = arith.constant 0 : i32
    %c0_i32_0 = arith.constant 0 : i32
    %c0_i32_1 = arith.constant 0 : i32
    return %arg0, %c0_i32, %c0_i32_0 : i32, i32, i32
  }
  func.func @transform_1(%arg0: i32) -> (i32, i32, i32) {
    %c0_i32 = arith.constant 0 : i32
    %c0_i32_0 = arith.constant 0 : i32
    %c0_i32_1 = arith.constant 0 : i32
    return %arg0, %c0_i32, %c0_i32_0 : i32, i32, i32
  }
  func.func @transform_2(%arg0: i32) -> (i32, i32) {
    %c0_i32 = arith.constant 0 : i32
    %c0_i32_0 = arith.constant 0 : i32
    %c0_i32_1 = arith.constant 0 : i32
    return %c0_i32, %c0_i32_0 : i32, i32
  }
  func.func @transform_3(%arg0: i32) -> (i32, i32) {
    %c0_i32 = arith.constant 0 : i32
    %c0_i32_0 = arith.constant 0 : i32
    %c0_i32_1 = arith.constant 0 : i32
    return %c0_i32, %c0_i32_0 : i32, i32
  }
  func.func @transform_4(%arg0: i32) -> (i32, i32) {
    %c0_i32 = arith.constant 0 : i32
    %c0_i32_0 = arith.constant 0 : i32
    %c0_i32_1 = arith.constant 0 : i32
    return %c0_i32, %c0_i32_0 : i32, i32
  }
  func.func @transform_5(%arg0: i32) -> (i32, i32) {
    %c0_i32 = arith.constant 0 : i32
    %c0_i32_0 = arith.constant 0 : i32
    %c0_i32_1 = arith.constant 0 : i32
    return %c0_i32, %c0_i32_0 : i32, i32
  }
  func.func @transform_6(%arg0: i32) -> (i32, i32) {
    %c0_i32 = arith.constant 0 : i32
    %c0_i32_0 = arith.constant 0 : i32
    %c0_i32_1 = arith.constant 0 : i32
    return %c0_i32, %c0_i32_0 : i32, i32
  }
  func.func @transform_7(%arg0: i32) -> (i32, i32) {
    %c0_i32 = arith.constant 0 : i32
    %c0_i32_0 = arith.constant 0 : i32
    %c0_i32_1 = arith.constant 0 : i32
    return %c0_i32, %c0_i32_0 : i32, i32
  }
  func.func @transform_8(%arg0: i32) -> (i32, i32) {
    %c0_i32 = arith.constant 0 : i32
    %c0_i32_0 = arith.constant 0 : i32
    %c0_i32_1 = arith.constant 0 : i32
    return %c0_i32, %c0_i32_0 : i32, i32
  }
  func.func @transform_9(%arg0: i32) -> (i32, i32) {
    %c0_i32 = arith.constant 0 : i32
    %c0_i32_0 = arith.constant 0 : i32
    %c0_i32_1 = arith.constant 0 : i32
    return %c0_i32, %c0_i32_0 : i32, i32
  }
}

module attributes {stable_mosaic.version = 11 : i64} {
  func.func @_linear_kernel(%arg0: memref<2x128xf32, #tpu.memory_space<vmem>>, %arg1: memref<128x2xf32, #tpu.memory_space<vmem>>, %arg2: memref<1x2xf32, #tpu.memory_space<vmem>>, %arg3: memref<2x2xf32, #tpu.memory_space<vmem>>) attributes {dimension_semantics = [], scalar_prefetch = 0 : i64, scratch_operands = 0 : i64, tpu.core_type = #tpu.core_type<tc>} {
    %c0 = arith.constant 0 : index
    %c0_0 = arith.constant 0 : index
    %0 = vector.load %arg0[%c0, %c0_0] : memref<2x128xf32, #tpu.memory_space<vmem>>, vector<2x128xf32>
    %c0_1 = arith.constant 0 : index
    %c0_2 = arith.constant 0 : index
    %1 = vector.load %arg1[%c0_1, %c0_2] : memref<128x2xf32, #tpu.memory_space<vmem>>, vector<128x2xf32>
    %cst = arith.constant dense<0.000000e+00> : vector<2x2xf32>
    %2 = tpu.matmul %0, %1, %cst {dimension_numbers = #tpu.dot_dimension_numbers<[1], [0], [0], [1], [0, 0, 1, 1], [], []>} : vector<2x128xf32>, vector<128x2xf32>, vector<2x2xf32> -> vector<2x2xf32>
    %c0_3 = arith.constant 0 : index
    %c0_4 = arith.constant 0 : index
    %3 = vector.load %arg2[%c0_3, %c0_4] : memref<1x2xf32, #tpu.memory_space<vmem>>, vector<1x2xf32>
    %4 = vector.broadcast %3 : vector<1x2xf32> to vector<2x2xf32>
    %5 = arith.addf %2, %4 : vector<2x2xf32>
    %c0_5 = arith.constant 0 : index
    %c0_6 = arith.constant 0 : index
    %6 = vector.load %arg3[%c0_5, %c0_6] : memref<2x2xf32, #tpu.memory_space<vmem>>, vector<2x2xf32>
    tpu.vector_store %arg3[%c0_5, %c0_6], %5 {strides = array<i32>} : memref<2x2xf32, #tpu.memory_space<vmem>>, vector<2x2xf32>,
    return
  }
}

</mosaic_0001>

<llo_original>
// kernel: brainnet_forward.5
$region0: #{brainnet_forward.5}
  #allocation0 [shape = 'u32[]', space=smem, size = 0x4, offset = 0x4, fixed_abs, tag = 'smem constant byte address 0x4 - core index']
  #allocation1 [shape = 'u32[72,128]{1,0:T(1,128)}', space=vmem, size = 0x9000, scoped, tag = 'internal scratch']
  %s0 = inlined_call_operand.vmem [shape: f32[7,1152], index: 0, kind: input, shape index: {}]
  %s1 = inlined_call_operand.vmem [shape: f32[8,7], index: 1, kind: input, shape index: {}]
  %s2 = inlined_call_operand.vmem [shape: f32[8,1], index: 2, kind: input, shape index: {}]
  %s3 = inlined_call_operand.vmem [shape: f32[8,1], index: 3, kind: input, shape index: {}]
  %s4 = inlined_call_operand.vmem [shape: f32[8,1152], index: 4, kind: output, shape index: {}]
  %s5 = sld [smem:[#allocation0]]
  $region26: #{brainnet_forward.5} parent=0
    _
  %s7 = ssub.s32 1, %s5
  %s8 = scalar_select 0, %s7, %s5
  // Predicated region
  $region2: #{brainnet_forward.5} parent=0 // pred_check
    _
  $region3: #{brainnet_forward.5} parent=0 // pred_check_branch
    %10 = sbr.rel (0) target = $region5
  $region4: #{brainnet_forward.5} parent=0 // pred_region
    _
  $region5: #{brainnet_forward.5} parent=0 // pred_fallthru
    _
  // Predicated region
  $region6: #{brainnet_forward.5} parent=0 // pred_check
    _
  $region7: #{brainnet_forward.5} parent=0 // pred_check_branch
    %12 = sbr.rel (0) target = $region9
  $region8: #{brainnet_forward.5} parent=0 // pred_region
    _
  $region9: #{brainnet_forward.5} parent=0 // pred_fallthru
    _
  // Predicated region
  $region10: #{brainnet_forward.5} parent=0 // pred_check
    _
  $region11: #{brainnet_forward.5} parent=0 // pred_check_branch
    %14 = sbr.rel (0) target = $region13
  $region12: #{brainnet_forward.5} parent=0 // pred_region
    _
  $region13: #{brainnet_forward.5} parent=0 // pred_fallthru
    _
  // Predicated region
  $region14: #{brainnet_forward.5} parent=0 // pred_check
    _
  $region15: #{brainnet_forward.5} parent=0 // pred_check_branch
    %16 = sbr.rel (0) target = $region17
  $region16: #{brainnet_forward.5} parent=0 // pred_region
    _
  $region17: #{brainnet_forward.5} parent=0 // pred_fallthru
    _
  %v17 = vld [vmem:[%s1] sm:$0xff]
  %v18 = vld [vmem:[%s0] sm:$0x7f]
  %v19 = vld [vmem:[%s0 + $0x8] sm:$0x7f]
  %v20 = vld [vmem:[%s0 + $0x10] sm:$0x7f]
  %v21 = vld [vmem:[%s0 + $0x18] sm:$0x7f]
  %v22 = vld [vmem:[%s0 + $0x20] sm:$0x7f]
  %v23 = vld [vmem:[%s0 + $0x28] sm:$0x7f]
  %v24 = vld [vmem:[%s0 + $0x30] sm:$0x7f]
  %v25 = vld [vmem:[%s0 + $0x38] sm:$0x7f]
  %v26 = vld [vmem:[%s0 + $0x40] sm:$0x7f]
  %vm27 = vcmask 56320
  %v29 = vsel %vm27, %v17, 0
  %vm31 = vcmask 1046528
  %v33 = vsel %vm31, %v18, 0
  %v36 = vsel %vm31, %v19, 0
  %v39 = vsel %vm31, %v20, 0
  %v42 = vsel %vm31, %v21, 0
  %v45 = vsel %vm31, %v22, 0
  %v48 = vsel %vm31, %v23, 0
  %v51 = vsel %vm31, %v24, 0
  %v54 = vsel %vm31, %v25, 0
  %v57 = vsel %vm31, %v26, 0
  %59 = vmatpush.msra.mxu0 0.0
  %60 = vmatpush.msra.mxu0 0.0
  %61 = vmatpush.msra.mxu0 0.0
  %62 = vmatpush.msra.mxu0 0.0
  %63 = vmatpush.msra.mxu0 0.0
  %64 = vmatpush.msra.mxu0 0.0
  %65 = vmatpush.msra.mxu0 0.0
  %66 = vmatpush.msra.mxu0 0.0
  %67 = vmatpush.msra.mxu0 0.0
  %68 = vmatpush.msra.mxu0 0.0
  %69 = vmatpush.msra.mxu0 0.0
  %70 = vmatpush.msra.mxu0 0.0
  %71 = vmatpush.msra.mxu0 0.0
  %72 = vmatpush.msra.mxu0 0.0
  %73 = vmatpush.msra.mxu0 0.0
  %74 = vmatpush.msra.mxu0 %v33
  %75 = vmatmul.f32.gmra.mxu0 %v29
  %v76 = vpop.f32.mrf.mxu0
  %v77 = vadd.f32 0.0, %v76
  %78 = vdwg.mxu0
  %79 = vmatpush.msra.mxu0 0.0
  %80 = vmatpush.msra.mxu0 0.0
  %81 = vmatpush.msra.mxu0 0.0
  %82 = vmatpush.msra.mxu0 0.0
  %83 = vmatpush.msra.mxu0 0.0
  %84 = vmatpush.msra.mxu0 0.0
  %85 = vmatpush.msra.mxu0 0.0
  %86 = vmatpush.msra.mxu0 0.0
  %87 = vmatpush.msra.mxu0 0.0
  %88 = vmatpush.msra.mxu0 0.0
  %89 = vmatpush.msra.mxu0 0.0
  %90 = vmatpush.msra.mxu0 0.0
  %91 = vmatpush.msra.mxu0 0.0
  %92 = vmatpush.msra.mxu0 0.0
  %93 = vmatpush.msra.mxu0 0.0
  %94 = vmatpush.msra.mxu0 %v36
  %95 = vmatmul.f32.gmra.mxu0 %v29
  %v96 = vpop.f32.mrf.mxu0
  %v97 = vadd.f32 0.0, %v96
  %98 = vdwg.mxu0
  %99 = vmatpush.msra.mxu0 0.0
  %100 = vmatpush.msra.mxu0 0.0
  %101 = vmatpush.msra.mxu0 0.0
  %102 = vmatpush.msra.mxu0 0.0
  %103 = vmatpush.msra.mxu0 0.0
  %104 = vmatpush.msra.mxu0 0.0
  %105 = vmatpush.msra.mxu0 0.0
  %106 = vmatpush.msra.mxu0 0.0
  %107 = vmatpush.msra.mxu0 0.0
  %108 = vmatpush.msra.mxu0 0.0
  %109 = vmatpush.msra.mxu0 0.0
  %110 = vmatpush.msra.mxu0 0.0
  %111 = vmatpush.msra.mxu0 0.0
  %112 = vmatpush.msra.mxu0 0.0
  %113 = vmatpush.msra.mxu0 0.0
  %114 = vmatpush.msra.mxu0 %v39
  %115 = vmatmul.f32.gmra.mxu0 %v29
  %v116 = vpop.f32.mrf.mxu0
  %v117 = vadd.f32 0.0, %v116
  %118 = vdwg.mxu0
  %119 = vmatpush.msra.mxu0 0.0
  %120 = vmatpush.msra.mxu0 0.0
  %121 = vmatpush.msra.mxu0 0.0
  %122 = vmatpush.msra.mxu0 0.0
  %123 = vmatpush.msra.mxu0 0.0
  %124 = vmatpush.msra.mxu0 0.0
  %125 = vmatpush.msra.mxu0 0.0
  %126 = vmatpush.msra.mxu0 0.0
  %127 = vmatpush.msra.mxu0 0.0
  %128 = vmatpush.msra.mxu0 0.0
  %129 = vmatpush.msra.mxu0 0.0
  %130 = vmatpush.msra.mxu0 0.0
  %131 = vmatpush.msra.mxu0 0.0
  %132 = vmatpush.msra.mxu0 0.0
  %133 = vmatpush.msra.mxu0 0.0
  %134 = vmatpush.msra.mxu0 %v42
  %135 = vmatmul.f32.gmra.mxu0 %v29
  %v136 = vpop.f32.mrf.mxu0
  %v137 = vadd.f32 0.0, %v136
  %138 = vdwg.mxu0
  %139 = vmatpush.msra.mxu0 0.0
  %140 = vmatpush.msra.mxu0 0.0
  %141 = vmatpush.msra.mxu0 0.0
  %142 = vmatpush.msra.mxu0 0.0
  %143 = vmatpush.msra.mxu0 0.0
  %144 = vmatpush.msra.mxu0 0.0
  %145 = vmatpush.msra.mxu0 0.0
  %146 = vmatpush.msra.mxu0 0.0
  %147 = vmatpush.msra.mxu0 0.0
  %148 = vmatpush.msra.mxu0 0.0
  %149 = vmatpush.msra.mxu0 0.0
  %150 = vmatpush.msra.mxu0 0.0
  %151 = vmatpush.msra.mxu0 0.0
  %152 = vmatpush.msra.mxu0 0.0
  %153 = vmatpush.msra.mxu0 0.0
  %154 = vmatpush.msra.mxu0 %v45
  %155 = vmatmul.f32.gmra.mxu0 %v29
  %v156 = vpop.f32.mrf.mxu0
  %v157 = vadd.f32 0.0, %v156
  %158 = vdwg.mxu0
  %159 = vmatpush.msra.mxu0 0.0
  %160 = vmatpush.msra.mxu0 0.0
  %161 = vmatpush.msra.mxu0 0.0
  %162 = vmatpush.msra.mxu0 0.0
  %163 = vmatpush.msra.mxu0 0.0
  %164 = vmatpush.msra.mxu0 0.0
  %165 = vmatpush.msra.mxu0 0.0
  %166 = vmatpush.msra.mxu0 0.0
  %167 = vmatpush.msra.mxu0 0.0
  %168 = vmatpush.msra.mxu0 0.0
  %169 = vmatpush.msra.mxu0 0.0
  %170 = vmatpush.msra.mxu0 0.0
  %171 = vmatpush.msra.mxu0 0.0
  %172 = vmatpush.msra.mxu0 0.0
  %173 = vmatpush.msra.mxu0 0.0
  %174 = vmatpush.msra.mxu0 %v48
  %175 = vmatmul.f32.gmra.mxu0 %v29
  %v176 = vpop.f32.mrf.mxu0
  %v177 = vadd.f32 0.0, %v176
  %178 = vdwg.mxu0
  %179 = vmatpush.msra.mxu0 0.0
  %180 = vmatpush.msra.mxu0 0.0
  %181 = vmatpush.msra.mxu0 0.0
  %182 = vmatpush.msra.mxu0 0.0
  %183 = vmatpush.msra.mxu0 0.0
  %184 = vmatpush.msra.mxu0 0.0
  %185 = vmatpush.msra.mxu0 0.0
  %186 = vmatpush.msra.mxu0 0.0
  %187 = vmatpush.msra.mxu0 0.0
  %188 = vmatpush.msra.mxu0 0.0
  %189 = vmatpush.msra.mxu0 0.0
  %190 = vmatpush.msra.mxu0 0.0
  %191 = vmatpush.msra.mxu0 0.0
  %192 = vmatpush.msra.mxu0 0.0
  %193 = vmatpush.msra.mxu0 0.0
  %194 = vmatpush.msra.mxu0 %v51
  %195 = vmatmul.f32.gmra.mxu0 %v29
  %v196 = vpop.f32.mrf.mxu0
  %v197 = vadd.f32 0.0, %v196
  %198 = vdwg.mxu0
  %199 = vmatpush.msra.mxu0 0.0
  %200 = vmatpush.msra.mxu0 0.0
  %201 = vmatpush.msra.mxu0 0.0
  %202 = vmatpush.msra.mxu0 0.0
  %203 = vmatpush.msra.mxu0 0.0
  %204 = vmatpush.msra.mxu0 0.0
  %205 = vmatpush.msra.mxu0 0.0
  %206 = vmatpush.msra.mxu0 0.0
  %207 = vmatpush.msra.mxu0 0.0
  %208 = vmatpush.msra.mxu0 0.0
  %209 = vmatpush.msra.mxu0 0.0
  %210 = vmatpush.msra.mxu0 0.0
  %211 = vmatpush.msra.mxu0 0.0
  %212 = vmatpush.msra.mxu0 0.0
  %213 = vmatpush.msra.mxu0 0.0
  %214 = vmatpush.msra.mxu0 %v54
  %215 = vmatmul.f32.gmra.mxu0 %v29
  %v216 = vpop.f32.mrf.mxu0
  %v217 = vadd.f32 0.0, %v216
  %218 = vdwg.mxu0
  %219 = vmatpush.msra.mxu0 0.0
  %220 = vmatpush.msra.mxu0 0.0
  %221 = vmatpush.msra.mxu0 0.0
  %222 = vmatpush.msra.mxu0 0.0
  %223 = vmatpush.msra.mxu0 0.0
  %224 = vmatpush.msra.mxu0 0.0
  %225 = vmatpush.msra.mxu0 0.0
  %226 = vmatpush.msra.mxu0 0.0
  %227 = vmatpush.msra.mxu0 0.0
  %228 = vmatpush.msra.mxu0 0.0
  %229 = vmatpush.msra.mxu0 0.0
  %230 = vmatpush.msra.mxu0 0.0
  %231 = vmatpush.msra.mxu0 0.0
  %232 = vmatpush.msra.mxu0 0.0
  %233 = vmatpush.msra.mxu0 0.0
  %234 = vmatpush.msra.mxu0 %v57
  %235 = vmatmul.f32.gmra.mxu0 %v29
  %v236 = vpop.f32.mrf.mxu0
  %v237 = vadd.f32 0.0, %v236
  %238 = vdwg.mxu0
  %v239 = vld [vmem:[%s2] sm:$0xff]
  %241 = vset.pattern.permute.xlu0 0
  %242 = vperm.xlu0 %241, %v239
  %v243 = vpop.permute.xlu0 %242
  %v245 = vmul.f32 %v77, %v243
  %v246 = vmul.f32 %v97, %v243
  %v247 = vmul.f32 %v117, %v243
  %v248 = vmul.f32 %v137, %v243
  %v249 = vmul.f32 %v157, %v243
  %v250 = vmul.f32 %v177, %v243
  %v251 = vmul.f32 %v197, %v243
  %v252 = vmul.f32 %v217, %v243
  %v253 = vmul.f32 %v237, %v243
  %v254 = vld [vmem:[%s3] sm:$0xff]
  %256 = vset.pattern.permute.xlu0 0
  %257 = vperm.xlu0 %256, %v254
  %v258 = vpop.permute.xlu0 %257
  %v260 = vadd.f32 %v245, %v258
  %v261 = vadd.f32 %v246, %v258
  %v262 = vadd.f32 %v247, %v258
  %v263 = vadd.f32 %v248, %v258
  %v264 = vadd.f32 %v249, %v258
  %v265 = vadd.f32 %v250, %v258
  %v266 = vadd.f32 %v251, %v258
  %v267 = vadd.f32 %v252, %v258
  %v268 = vadd.f32 %v253, %v258
  %v269 = vmax.f32 %v260, 0.0
  %v270 = vmax.f32 %v261, 0.0
  %v271 = vmax.f32 %v262, 0.0
  %v272 = vmax.f32 %v263, 0.0
  %v273 = vmax.f32 %v264, 0.0
  %v274 = vmax.f32 %v265, 0.0
  %v275 = vmax.f32 %v266, 0.0
  %v276 = vmax.f32 %v267, 0.0
  %v277 = vmax.f32 %v268, 0.0
  %278 = vst [vmem:[%s4] sm:$0xff] %v269
  %279 = vst [vmem:[%s4 + $0x8] sm:$0xff] %v270
  %280 = vst [vmem:[%s4 + $0x10] sm:$0xff] %v271
  %281 = vst [vmem:[%s4 + $0x18] sm:$0xff] %v272
  %282 = vst [vmem:[%s4 + $0x20] sm:$0xff] %v273
  %283 = vst [vmem:[%s4 + $0x28] sm:$0xff] %v274
  %284 = vst [vmem:[%s4 + $0x30] sm:$0xff] %v275
  %285 = vst [vmem:[%s4 + $0x38] sm:$0xff] %v276
  %286 = vst [vmem:[%s4 + $0x40] sm:$0xff] %v277
  // Predicated region
  $region18: #{brainnet_forward.5} parent=0 // pred_check
    _
  $region19: #{brainnet_forward.5} parent=0 // pred_check_branch
    %288 = sbr.rel (0) target = $region21
  $region20: #{brainnet_forward.5} parent=0 // pred_region
    _
  $region21: #{brainnet_forward.5} parent=0 // pred_fallthru
    _
  // Predicated region
  $region22: #{brainnet_forward.5} parent=0 // pred_check
    _
  $region23: #{brainnet_forward.5} parent=0 // pred_check_branch
    %290 = sbr.rel (0) target = $region25
  $region24: #{brainnet_forward.5} parent=0 // pred_region
    _
  $region25: #{brainnet_forward.5} parent=0 // pred_fallthru
    _

// kernel: brainnet_forward.6
$region0: #{brainnet_forward.6}
  #allocation0 [shape = 'u32[]', space=smem, size = 0x4, offset = 0x4, fixed_abs, tag = 'smem constant byte address 0x4 - core index']
  #allocation1 [shape = 'u32[72,128]{1,0:T(1,128)}', space=vmem, size = 0x9000, scoped, tag = 'internal scratch']
  %s0 = inlined_call_operand.vmem [shape: f32[56,256], index: 0, kind: input, shape index: {}]
  %s1 = inlined_call_operand.vmem [shape: f32[16,56], index: 1, kind: input, shape index: {}]
  %s2 = inlined_call_operand.vmem [shape: f32[16,1], index: 2, kind: input, shape index: {}]
  %s3 = inlined_call_operand.vmem [shape: f32[16,1], index: 3, kind: input, shape index: {}]
  %s4 = inlined_call_operand.vmem [shape: f32[16,256], index: 4, kind: output, shape index: {}]
  %s5 = sld [smem:[#allocation0]]
  $region26: #{brainnet_forward.6} parent=0
    _
  %s7 = ssub.s32 1, %s5
  %s8 = scalar_select 0, %s7, %s5
  // Predicated region
  $region2: #{brainnet_forward.6} parent=0 // pred_check
    _
  $region3: #{brainnet_forward.6} parent=0 // pred_check_branch
    %10 = sbr.rel (0) target = $region5
  $region4: #{brainnet_forward.6} parent=0 // pred_region
    _
  $region5: #{brainnet_forward.6} parent=0 // pred_fallthru
    _
  // Predicated region
  $region6: #{brainnet_forward.6} parent=0 // pred_check
    _
  $region7: #{brainnet_forward.6} parent=0 // pred_check_branch
    %12 = sbr.rel (0) target = $region9
  $region8: #{brainnet_forward.6} parent=0 // pred_region
    _
  $region9: #{brainnet_forward.6} parent=0 // pred_fallthru
    _
  // Predicated region
  $region10: #{brainnet_forward.6} parent=0 // pred_check
    _
  $region11: #{brainnet_forward.6} parent=0 // pred_check_branch
    %14 = sbr.rel (0) target = $region13
  $region12: #{brainnet_forward.6} parent=0 // pred_region
    _
  $region13: #{brainnet_forward.6} parent=0 // pred_fallthru
    _
  // Predicated region
  $region14: #{brainnet_forward.6} parent=0 // pred_check
    _
  $region15: #{brainnet_forward.6} parent=0 // pred_check_branch
    %16 = sbr.rel (0) target = $region17
  $region16: #{brainnet_forward.6} parent=0 // pred_region
    _
  $region17: #{brainnet_forward.6} parent=0 // pred_fallthru
    _
  %v17 = vld [vmem:[%s1] sm:$0xff]
  %v18 = vld [vmem:[%s1 + $0x8] sm:$0xff]
  %v19 = vld [vmem:[%s0] sm:$0xff]
  %v20 = vld [vmem:[%s0 + $0x8] sm:$0xff]
  %v21 = vld [vmem:[%s0 + $0x10] sm:$0xff]
  %v22 = vld [vmem:[%s0 + $0x18] sm:$0xff]
  %v23 = vld [vmem:[%s0 + $0x20] sm:$0xff]
  %v24 = vld [vmem:[%s0 + $0x28] sm:$0xff]
  %v25 = vld [vmem:[%s0 + $0x30] sm:$0xff]
  %v26 = vld [vmem:[%s0 + $0x38] sm:$0xff]
  %v27 = vld [vmem:[%s0 + $0x40] sm:$0xff]
  %v28 = vld [vmem:[%s0 + $0x48] sm:$0xff]
  %v29 = vld [vmem:[%s0 + $0x50] sm:$0xff]
  %v30 = vld [vmem:[%s0 + $0x58] sm:$0xff]
  %v31 = vld [vmem:[%s0 + $0x60] sm:$0xff]
  %v32 = vld [vmem:[%s0 + $0x68] sm:$0xff]
  %vm33 = vcmask 457728
  %v35 = vsel %vm33, %v17, 0
  %v38 = vsel %vm33, %v18, 0
  %40 = vmatpush.msra.mxu0 0.0
  %41 = vmatpush.msra.mxu0 0.0
  %42 = vmatpush.msra.mxu0 0.0
  %43 = vmatpush.msra.mxu0 0.0
  %44 = vmatpush.msra.mxu0 0.0
  %45 = vmatpush.msra.mxu0 0.0
  %46 = vmatpush.msra.mxu0 0.0
  %47 = vmatpush.msra.mxu0 0.0
  %48 = vmatpush.msra.mxu0 0.0
  %49 = vmatpush.msra.mxu0 %v31
  %50 = vmatpush.msra.mxu0 %v29
  %51 = vmatpush.msra.mxu0 %v27
  %52 = vmatpush.msra.mxu0 %v25
  %53 = vmatpush.msra.mxu0 %v23
  %54 = vmatpush.msra.mxu0 %v21
  %55 = vmatpush.msra.mxu0 %v19
  %56 = vmatmul.f32.gmra.mxu0 %v35
  %v57 = vpop.f32.mrf.mxu0
  %v58 = vadd.f32 0.0, %v57
  %59 = vmatmul.f32.gmra.mxu0 %v38
  %v60 = vpop.f32.mrf.mxu0
  %v61 = vadd.f32 0.0, %v60
  %62 = vdwg.mxu0
  %63 = vmatpush.msra.mxu0 0.0
  %64 = vmatpush.msra.mxu0 0.0
  %65 = vmatpush.msra.mxu0 0.0
  %66 = vmatpush.msra.mxu0 0.0
  %67 = vmatpush.msra.mxu0 0.0
  %68 = vmatpush.msra.mxu0 0.0
  %69 = vmatpush.msra.mxu0 0.0
  %70 = vmatpush.msra.mxu0 0.0
  %71 = vmatpush.msra.mxu0 0.0
  %72 = vmatpush.msra.mxu0 %v32
  %73 = vmatpush.msra.mxu0 %v30
  %74 = vmatpush.msra.mxu0 %v28
  %75 = vmatpush.msra.mxu0 %v26
  %76 = vmatpush.msra.mxu0 %v24
  %77 = vmatpush.msra.mxu0 %v22
  %78 = vmatpush.msra.mxu0 %v20
  %79 = vmatmul.f32.gmra.mxu0 %v35
  %v80 = vpop.f32.mrf.mxu0
  %v81 = vadd.f32 0.0, %v80
  %82 = vmatmul.f32.gmra.mxu0 %v38
  %v83 = vpop.f32.mrf.mxu0
  %v84 = vadd.f32 0.0, %v83
  %85 = vdwg.mxu0
  %v86 = vld [vmem:[%s2] sm:$0xff]
  %v87 = vld [vmem:[%s2 + $0x8] sm:$0xff]
  %89 = vset.pattern.permute.xlu0 0
  %90 = vperm.xlu0 %89, %v86
  %v91 = vpop.permute.xlu0 %90
  %94 = vset.pattern.permute.xlu0 0
  %95 = vperm.xlu0 %94, %v87
  %v96 = vpop.permute.xlu0 %95
  %v98 = vmul.f32 %v58, %v91
  %v99 = vmul.f32 %v81, %v91
  %v100 = vmul.f32 %v61, %v96
  %v101 = vmul.f32 %v84, %v96
  %v102 = vld [vmem:[%s3] sm:$0xff]
  %v103 = vld [vmem:[%s3 + $0x8] sm:$0xff]
  %105 = vset.pattern.permute.xlu0 0
  %106 = vperm.xlu0 %105, %v102
  %v107 = vpop.permute.xlu0 %106
  %110 = vset.pattern.permute.xlu0 0
  %111 = vperm.xlu0 %110, %v103
  %v112 = vpop.permute.xlu0 %111
  %v114 = vadd.f32 %v98, %v107
  %v115 = vadd.f32 %v99, %v107
  %v116 = vadd.f32 %v100, %v112
  %v117 = vadd.f32 %v101, %v112
  %v118 = vmax.f32 %v114, 0.0
  %v119 = vmax.f32 %v115, 0.0
  %v120 = vmax.f32 %v116, 0.0
  %v121 = vmax.f32 %v117, 0.0
  %122 = vst [vmem:[%s4] sm:$0xff] %v118
  %123 = vst [vmem:[%s4 + $0x8] sm:$0xff] %v119
  %124 = vst [vmem:[%s4 + $0x10] sm:$0xff] %v120
  %125 = vst [vmem:[%s4 + $0x18] sm:$0xff] %v121
  // Predicated region
  $region18: #{brainnet_forward.6} parent=0 // pred_check
    _
  $region19: #{brainnet_forward.6} parent=0 // pred_check_branch
    %127 = sbr.rel (0) target = $region21
  $region20: #{brainnet_forward.6} parent=0 // pred_region
    _
  $region21: #{brainnet_forward.6} parent=0 // pred_fallthru
    _
  // Predicated region
  $region22: #{brainnet_forward.6} parent=0 // pred_check
    _
  $region23: #{brainnet_forward.6} parent=0 // pred_check_branch
    %129 = sbr.rel (0) target = $region25
  $region24: #{brainnet_forward.6} parent=0 // pred_region
    _
  $region25: #{brainnet_forward.6} parent=0 // pred_fallthru
    _

// kernel: brainnet_forward.7
$region0: #{brainnet_forward.7}
  #allocation0 [shape = 'u32[]', space=smem, size = 0x4, offset = 0x4, fixed_abs, tag = 'smem constant byte address 0x4 - core index']
  #allocation1 [shape = 'u32[72,128]{1,0:T(1,128)}', space=vmem, size = 0x9000, scoped, tag = 'internal scratch']
  %s0 = inlined_call_operand.vmem [shape: f32[8,512], index: 0, kind: input, shape index: {}]
  %s1 = inlined_call_operand.vmem [shape: f32[8,256], index: 1, kind: input, shape index: {}]
  %s2 = inlined_call_operand.vmem [shape: f32[512,64], index: 2, kind: input, shape index: {}]
  %s3 = inlined_call_operand.vmem [shape: f32[256,16], index: 3, kind: input, shape index: {}]
  %s4 = inlined_call_operand.vmem [shape: f32[16,4], index: 4, kind: input, shape index: {}]
  %s5 = inlined_call_operand.vmem [shape: f32[8,64], index: 5, kind: output, shape index: {0}]
  %s6 = inlined_call_operand.vmem [shape: f32[8,16], index: 6, kind: output, shape index: {1}]
  %s7 = inlined_call_operand.hbm [shape: f32[1,1], index: 7, kind: output, shape index: {2}]
  %8 = xla_tuple %s5, %s6, %s7
  %s9 = sld [smem:[#allocation0]]
  $region46: #{brainnet_forward.7} parent=0
    _
  %s11 = ssub.s32 1, %s9
  %s12 = scalar_select 0, %s11, %s9
  $region1: #{brainnet_forward.7} parent=0
    #allocation2 [shape = 'u8[512]{0}', space=vmem, size = 0x400, scoped, tag = 'output window, operand 2, single buffered']
    #allocation3 [shape = 's32[1]{0}', space=sflag, size = 0x4, scoped, tag = 'scoped memory for brainnet_forward.7']
    %13 = vsyncpa [#allocation3], 0
    // Predicated region
    $region2: #{brainnet_forward.7} parent=1 // pred_check
      _
    $region3: #{brainnet_forward.7} parent=1 // pred_check_branch
      %15 = sbr.rel (0) target = $region5
    $region4: #{brainnet_forward.7} parent=1 // pred_region
      _
    $region5: #{brainnet_forward.7} parent=1 // pred_fallthru
      _
    // Predicated region
    $region6: #{brainnet_forward.7} parent=1 // pred_check
      _
    $region7: #{brainnet_forward.7} parent=1 // pred_check_branch
      %17 = sbr.rel (0) target = $region9
    $region8: #{brainnet_forward.7} parent=1 // pred_region
      _
    $region9: #{brainnet_forward.7} parent=1 // pred_fallthru
      _
    // Predicated region
    $region10: #{brainnet_forward.7} parent=1 // pred_check
      _
    $region11: #{brainnet_forward.7} parent=1 // pred_check_branch
      %19 = sbr.rel (0) target = $region13
    $region12: #{brainnet_forward.7} parent=1 // pred_region
      _
    $region13: #{brainnet_forward.7} parent=1 // pred_fallthru
      _
    // Predicated region
    $region14: #{brainnet_forward.7} parent=1 // pred_check
      _
    $region15: #{brainnet_forward.7} parent=1 // pred_check_branch
      %21 = sbr.rel (0) target = $region17
    $region16: #{brainnet_forward.7} parent=1 // pred_region
      _
    $region17: #{brainnet_forward.7} parent=1 // pred_fallthru
      _
    // Predicated region
    $region18: #{brainnet_forward.7} parent=1 // pred_check
      _
    $region19: #{brainnet_forward.7} parent=1 // pred_check_branch
      %23 = sbr.rel (0) target = $region21
    $region20: #{brainnet_forward.7} parent=1 // pred_region
      _
    $region21: #{brainnet_forward.7} parent=1 // pred_fallthru
      _
    %v24 = vld [vmem:[%s0] sm:$0xff]
    %v25 = vld [vmem:[%s0 + $0x8] sm:$0xff]
    %v26 = vld [vmem:[%s0 + $0x10] sm:$0xff]
    %v27 = vld [vmem:[%s0 + $0x18] sm:$0xff]
    %v28 = vld [vmem:[%s2] sm:$0xff]
    %v29 = vld [vmem:[%s2 + $0x8] sm:$0xff]
    %v30 = vld [vmem:[%s2 + $0x10] sm:$0xff]
    %v31 = vld [vmem:[%s2 + $0x18] sm:$0xff]
    %v32 = vld [vmem:[%s2 + $0x20] sm:$0xff]
    %v33 = vld [vmem:[%s2 + $0x28] sm:$0xff]
    %v34 = vld [vmem:[%s2 + $0x30] sm:$0xff]
    %v35 = vld [vmem:[%s2 + $0x38] sm:$0xff]
    %v36 = vld [vmem:[%s2 + $0x40] sm:$0xff]
    %v37 = vld [vmem:[%s2 + $0x48] sm:$0xff]
    %v38 = vld [vmem:[%s2 + $0x50] sm:$0xff]
    %v39 = vld [vmem:[%s2 + $0x58] sm:$0xff]
    %v40 = vld [vmem:[%s2 + $0x60] sm:$0xff]
    %v41 = vld [vmem:[%s2 + $0x68] sm:$0xff]
    %v42 = vld [vmem:[%s2 + $0x70] sm:$0xff]
    %v43 = vld [vmem:[%s2 + $0x78] sm:$0xff]
    %v44 = vld [vmem:[%s2 + $0x80] sm:$0xff]
    %v45 = vld [vmem:[%s2 + $0x88] sm:$0xff]
    %v46 = vld [vmem:[%s2 + $0x90] sm:$0xff]
    %v47 = vld [vmem:[%s2 + $0x98] sm:$0xff]
    %v48 = vld [vmem:[%s2 + $0xa0] sm:$0xff]
    %v49 = vld [vmem:[%s2 + $0xa8] sm:$0xff]
    %v50 = vld [vmem:[%s2 + $0xb0] sm:$0xff]
    %v51 = vld [vmem:[%s2 + $0xb8] sm:$0xff]
    %v52 = vld [vmem:[%s2 + $0xc0] sm:$0xff]
    %v53 = vld [vmem:[%s2 + $0xc8] sm:$0xff]
    %v54 = vld [vmem:[%s2 + $0xd0] sm:$0xff]
    %v55 = vld [vmem:[%s2 + $0xd8] sm:$0xff]
    %v56 = vld [vmem:[%s2 + $0xe0] sm:$0xff]
    %v57 = vld [vmem:[%s2 + $0xe8] sm:$0xff]
    %v58 = vld [vmem:[%s2 + $0xf0] sm:$0xff]
    %v59 = vld [vmem:[%s2 + $0xf8] sm:$0xff]
    %v60 = vld [vmem:[%s2 + $0x100] sm:$0xff]
    %v61 = vld [vmem:[%s2 + $0x108] sm:$0xff]
    %v62 = vld [vmem:[%s2 + $0x110] sm:$0xff]
    %v63 = vld [vmem:[%s2 + $0x118] sm:$0xff]
    %v64 = vld [vmem:[%s2 + $0x120] sm:$0xff]
    %v65 = vld [vmem:[%s2 + $0x128] sm:$0xff]
    %v66 = vld [vmem:[%s2 + $0x130] sm:$0xff]
    %v67 = vld [vmem:[%s2 + $0x138] sm:$0xff]
    %v68 = vld [vmem:[%s2 + $0x140] sm:$0xff]
    %v69 = vld [vmem:[%s2 + $0x148] sm:$0xff]
    %v70 = vld [vmem:[%s2 + $0x150] sm:$0xff]
    %v71 = vld [vmem:[%s2 + $0x158] sm:$0xff]
    %v72 = vld [vmem:[%s2 + $0x160] sm:$0xff]
    %v73 = vld [vmem:[%s2 + $0x168] sm:$0xff]
    %v74 = vld [vmem:[%s2 + $0x170] sm:$0xff]
    %v75 = vld [vmem:[%s2 + $0x178] sm:$0xff]
    %v76 = vld [vmem:[%s2 + $0x180] sm:$0xff]
    %v77 = vld [vmem:[%s2 + $0x188] sm:$0xff]
    %v78 = vld [vmem:[%s2 + $0x190] sm:$0xff]
    %v79 = vld [vmem:[%s2 + $0x198] sm:$0xff]
    %v80 = vld [vmem:[%s2 + $0x1a0] sm:$0xff]
    %v81 = vld [vmem:[%s2 + $0x1a8] sm:$0xff]
    %v82 = vld [vmem:[%s2 + $0x1b0] sm:$0xff]
    %v83 = vld [vmem:[%s2 + $0x1b8] sm:$0xff]
    %v84 = vld [vmem:[%s2 + $0x1c0] sm:$0xff]
    %v85 = vld [vmem:[%s2 + $0x1c8] sm:$0xff]
    %v86 = vld [vmem:[%s2 + $0x1d0] sm:$0xff]
    %v87 = vld [vmem:[%s2 + $0x1d8] sm:$0xff]
    %v88 = vld [vmem:[%s2 + $0x1e0] sm:$0xff]
    %v89 = vld [vmem:[%s2 + $0x1e8] sm:$0xff]
    %v90 = vld [vmem:[%s2 + $0x1f0] sm:$0xff]
    %v91 = vld [vmem:[%s2 + $0x1f8] sm:$0xff]
    %92 = vmatpush.msra.mxu0 %v43
    %93 = vmatpush.msra.mxu0 %v42
    %94 = vmatpush.msra.mxu0 %v41
    %95 = vmatpush.msra.mxu0 %v40
    %96 = vmatpush.msra.mxu0 %v39
    %97 = vmatpush.msra.mxu0 %v38
    %98 = vmatpush.msra.mxu0 %v37
    %99 = vmatpush.msra.mxu0 %v36
    %100 = vmatpush.msra.mxu0 %v35
    %101 = vmatpush.msra.mxu0 %v34
    %102 = vmatpush.msra.mxu0 %v33
    %103 = vmatpush.msra.mxu0 %v32
    %104 = vmatpush.msra.mxu0 %v31
    %105 = vmatpush.msra.mxu0 %v30
    %106 = vmatpush.msra.mxu0 %v29
    %107 = vmatpush.msra.mxu0 %v28
    %108 = vmatmul.f32.gmra.mxu0 %v24
    %v109 = vpop.f32.mrf.mxu0
    %v110 = vadd.f32 0.0, %v109
    %111 = vdwg.mxu0
    %112 = vmatpush.msra.mxu0 %v59
    %113 = vmatpush.msra.mxu0 %v58
    %114 = vmatpush.msra.mxu0 %v57
    %115 = vmatpush.msra.mxu0 %v56
    %116 = vmatpush.msra.mxu0 %v55
    %117 = vmatpush.msra.mxu0 %v54
    %118 = vmatpush.msra.mxu0 %v53
    %119 = vmatpush.msra.mxu0 %v52
    %120 = vmatpush.msra.mxu0 %v51
    %121 = vmatpush.msra.mxu0 %v50
    %122 = vmatpush.msra.mxu0 %v49
    %123 = vmatpush.msra.mxu0 %v48
    %124 = vmatpush.msra.mxu0 %v47
    %125 = vmatpush.msra.mxu0 %v46
    %126 = vmatpush.msra.mxu0 %v45
    %127 = vmatpush.msra.mxu0 %v44
    %128 = vmatmul.f32.gmra.mxu0 %v25
    %v129 = vpop.f32.mrf.mxu0
    %v130 = vadd.f32 %v110, %v129
    %131 = vdwg.mxu0
    %132 = vmatpush.msra.mxu0 %v75
    %133 = vmatpush.msra.mxu0 %v74
    %134 = vmatpush.msra.mxu0 %v73
    %135 = vmatpush.msra.mxu0 %v72
    %136 = vmatpush.msra.mxu0 %v71
    %137 = vmatpush.msra.mxu0 %v70
    %138 = vmatpush.msra.mxu0 %v69
    %139 = vmatpush.msra.mxu0 %v68
    %140 = vmatpush.msra.mxu0 %v67
    %141 = vmatpush.msra.mxu0 %v66
    %142 = vmatpush.msra.mxu0 %v65
    %143 = vmatpush.msra.mxu0 %v64
    %144 = vmatpush.msra.mxu0 %v63
    %145 = vmatpush.msra.mxu0 %v62
    %146 = vmatpush.msra.mxu0 %v61
    %147 = vmatpush.msra.mxu0 %v60
    %148 = vmatmul.f32.gmra.mxu0 %v26
    %v149 = vpop.f32.mrf.mxu0
    %v150 = vadd.f32 %v130, %v149
    %151 = vdwg.mxu0
    %152 = vmatpush.msra.mxu0 %v91
    %153 = vmatpush.msra.mxu0 %v90
    %154 = vmatpush.msra.mxu0 %v89
    %155 = vmatpush.msra.mxu0 %v88
    %156 = vmatpush.msra.mxu0 %v87
    %157 = vmatpush.msra.mxu0 %v86
    %158 = vmatpush.msra.mxu0 %v85
    %159 = vmatpush.msra.mxu0 %v84
    %160 = vmatpush.msra.mxu0 %v83
    %161 = vmatpush.msra.mxu0 %v82
    %162 = vmatpush.msra.mxu0 %v81
    %163 = vmatpush.msra.mxu0 %v80
    %164 = vmatpush.msra.mxu0 %v79
    %165 = vmatpush.msra.mxu0 %v78
    %166 = vmatpush.msra.mxu0 %v77
    %167 = vmatpush.msra.mxu0 %v76
    %168 = vmatmul.f32.gmra.mxu0 %v27
    %v169 = vpop.f32.mrf.mxu0
    %v170 = vadd.f32 %v150, %v169
    %171 = vdwg.mxu0
    %vm172 = vcmask 523264
    %173 = vst.msk [vmem:[%s5] sm:$0xff] %vm172, %v170
    %v174 = vld [vmem:[%s1] sm:$0xff]
    %v175 = vld [vmem:[%s1 + $0x8] sm:$0xff]
    %v176 = vld [vmem:[%s3] sm:$0xff]
    %v177 = vld [vmem:[%s3 + $0x8] sm:$0xff]
    %v178 = vld [vmem:[%s3 + $0x10] sm:$0xff]
    %v179 = vld [vmem:[%s3 + $0x18] sm:$0xff]
    %v180 = vld [vmem:[%s3 + $0x20] sm:$0xff]
    %v181 = vld [vmem:[%s3 + $0x28] sm:$0xff]
    %v182 = vld [vmem:[%s3 + $0x30] sm:$0xff]
    %v183 = vld [vmem:[%s3 + $0x38] sm:$0xff]
    %v184 = vld [vmem:[%s3 + $0x40] sm:$0xff]
    %v185 = vld [vmem:[%s3 + $0x48] sm:$0xff]
    %v186 = vld [vmem:[%s3 + $0x50] sm:$0xff]
    %v187 = vld [vmem:[%s3 + $0x58] sm:$0xff]
    %v188 = vld [vmem:[%s3 + $0x60] sm:$0xff]
    %v189 = vld [vmem:[%s3 + $0x68] sm:$0xff]
    %v190 = vld [vmem:[%s3 + $0x70] sm:$0xff]
    %v191 = vld [vmem:[%s3 + $0x78] sm:$0xff]
    %v192 = vld [vmem:[%s3 + $0x80] sm:$0xff]
    %v193 = vld [vmem:[%s3 + $0x88] sm:$0xff]
    %v194 = vld [vmem:[%s3 + $0x90] sm:$0xff]
    %v195 = vld [vmem:[%s3 + $0x98] sm:$0xff]
    %v196 = vld [vmem:[%s3 + $0xa0] sm:$0xff]
    %v197 = vld [vmem:[%s3 + $0xa8] sm:$0xff]
    %v198 = vld [vmem:[%s3 + $0xb0] sm:$0xff]
    %v199 = vld [vmem:[%s3 + $0xb8] sm:$0xff]
    %v200 = vld [vmem:[%s3 + $0xc0] sm:$0xff]
    %v201 = vld [vmem:[%s3 + $0xc8] sm:$0xff]
    %v202 = vld [vmem:[%s3 + $0xd0] sm:$0xff]
    %v203 = vld [vmem:[%s3 + $0xd8] sm:$0xff]
    %v204 = vld [vmem:[%s3 + $0xe0] sm:$0xff]
    %v205 = vld [vmem:[%s3 + $0xe8] sm:$0xff]
    %v206 = vld [vmem:[%s3 + $0xf0] sm:$0xff]
    %v207 = vld [vmem:[%s3 + $0xf8] sm:$0xff]
    %208 = vmatpush.msra.mxu0 %v191
    %209 = vmatpush.msra.mxu0 %v190
    %210 = vmatpush.msra.mxu0 %v189
    %211 = vmatpush.msra.mxu0 %v188
    %212 = vmatpush.msra.mxu0 %v187
    %213 = vmatpush.msra.mxu0 %v186
    %214 = vmatpush.msra.mxu0 %v185
    %215 = vmatpush.msra.mxu0 %v184
    %216 = vmatpush.msra.mxu0 %v183
    %217 = vmatpush.msra.mxu0 %v182
    %218 = vmatpush.msra.mxu0 %v181
    %219 = vmatpush.msra.mxu0 %v180
    %220 = vmatpush.msra.mxu0 %v179
    %221 = vmatpush.msra.mxu0 %v178
    %222 = vmatpush.msra.mxu0 %v177
    %223 = vmatpush.msra.mxu0 %v176
    %224 = vmatmul.f32.gmra.mxu0 %v174
    %v225 = vpop.f32.mrf.mxu0
    %v226 = vadd.f32 0.0, %v225
    %227 = vdwg.mxu0
    %228 = vmatpush.msra.mxu0 %v207
    %229 = vmatpush.msra.mxu0 %v206
    %230 = vmatpush.msra.mxu0 %v205
    %231 = vmatpush.msra.mxu0 %v204
    %232 = vmatpush.msra.mxu0 %v203
    %233 = vmatpush.msra.mxu0 %v202
    %234 = vmatpush.msra.mxu0 %v201
    %235 = vmatpush.msra.mxu0 %v200
    %236 = vmatpush.msra.mxu0 %v199
    %237 = vmatpush.msra.mxu0 %v198
    %238 = vmatpush.msra.mxu0 %v197
    %239 = vmatpush.msra.mxu0 %v196
    %240 = vmatpush.msra.mxu0 %v195
    %241 = vmatpush.msra.mxu0 %v194
    %242 = vmatpush.msra.mxu0 %v193
    %243 = vmatpush.msra.mxu0 %v192
    %244 = vmatmul.f32.gmra.mxu0 %v175
    %v245 = vpop.f32.mrf.mxu0
    %v246 = vadd.f32 %v226, %v245
    %247 = vdwg.mxu0
    %vm248 = vcmask 130048
    %249 = vst.msk [vmem:[%s6] sm:$0xff] %vm248, %v246
    %v250 = vld [vmem:[%s4] sm:$0xff]
    %v251 = vld [vmem:[%s4 + $0x8] sm:$0xff]
    %v252 = vmax.f32 %v250, 0.0
    %v253 = vmax.f32 %v251, 0.0
    %254 = vxpose.xlu0.b32.start [1/16] %v252, 128
    %255 = vxpose.xlu0.b32.cont [2/16] %v253, 128
    %256 = vxpose.xlu0.b32.cont [3/16] 0.0, 128
    %257 = vxpose.xlu0.b32.cont [4/16] 0.0, 128
    %258 = vxpose.xlu0.b32.cont [5/16] 0.0, 128
    %259 = vxpose.xlu0.b32.cont [6/16] 0.0, 128
    %260 = vxpose.xlu0.b32.cont [7/16] 0.0, 128
    %261 = vxpose.xlu0.b32.cont [8/16] 0.0, 128
    %262 = vxpose.xlu0.b32.cont [9/16] 0.0, 128
    %263 = vxpose.xlu0.b32.cont [10/16] 0.0, 128
    %264 = vxpose.xlu0.b32.cont [11/16] 0.0, 128
    %265 = vxpose.xlu0.b32.cont [12/16] 0.0, 128
    %266 = vxpose.xlu0.b32.cont [13/16] 0.0, 128
    %267 = vxpose.xlu0.b32.cont [14/16] 0.0, 128
    %268 = vxpose.xlu0.b32.cont [15/16] 0.0, 128
    %269 = vxpose.xlu0.b32.end [16/16] 0.0, 128
    %v270 = vpop.trf.xlu0
    %v271 = vpop.trf.xlu0
    %v272 = vpop.trf.xlu0
    %v273 = vpop.trf.xlu0
    %v274 = vpop.trf.xlu0
    %v275 = vpop.trf.xlu0
    %v276 = vpop.trf.xlu0
    %v277 = vpop.trf.xlu0
    %v278 = vpop.trf.xlu0
    %v279 = vpop.trf.xlu0
    %v280 = vpop.trf.xlu0
    %v281 = vpop.trf.xlu0
    %v282 = vpop.trf.xlu0
    %v283 = vpop.trf.xlu0
    %v284 = vpop.trf.xlu0
    %v285 = vpop.trf.xlu0
    %v287 = vsel %vm248, %v270, 0
    %289 = vmatpush.msra.mxu0 0.0
    %290 = vmatpush.msra.mxu0 0.0
    %291 = vmatpush.msra.mxu0 0.0
    %292 = vmatpush.msra.mxu0 0.0
    %293 = vmatpush.msra.mxu0 0.0
    %294 = vmatpush.msra.mxu0 0.0
    %295 = vmatpush.msra.mxu0 0.0
    %296 = vmatpush.msra.mxu0 0.0
    %297 = vmatpush.msra.mxu0 0.0
    %298 = vmatpush.msra.mxu0 0.0
    %299 = vmatpush.msra.mxu0 0.0
    %300 = vmatpush.msra.mxu0 0.0
    %301 = vmatpush.msra.mxu0 0.0
    %302 = vmatpush.msra.mxu0 0.0
    %303 = vmatpush.msra.mxu0 %v253
    %304 = vmatpush.msra.mxu0 %v252
    %305 = vmatmul.f32.gmra.mxu0 %v287
    %v306 = vpop.f32.mrf.mxu0
    %v307 = vadd.f32 0.0, %v306
    %308 = vdwg.mxu0
    %v309 = vlaneseq
    %v310 = vshrl.u32 %v309, 7
    %v311 = vlaneseq
    %v312 = vand.u32 %v311, 127
    %vm313 = vcmp.eq.s32.totalorder %v310, %v312
    %v314 = vsel %vm313, 1, 0
    %v315 = vcvt.s32.f32 %v314
    %v316 = vmul.f32 %v307, %v315
    %vm317 = vcmask 27648
    %v318 = vsel %vm317, %v316, 0.0
    %319 = vadd.xlane.f32.xlu0 %v318
    %v320 = vpop.xlane.xlu0 %319
    %v321 = vsub.f32 %v307, %v316
    %v322 = vmul.f32 %v321, %v321
    %v323 = vsel %vm317, %v322, 0.0
    %324 = vadd.xlane.f32.xlu0 %v323
    %v325 = vpop.xlane.xlu0 %324
    %v326 = vrot.slane %v325, 4
    %v327 = vadd.f32 %v325, %v326
    %v328 = vrot.slane %v327, 2
    %v329 = vadd.f32 %v327, %v328
    %v330 = vrot.slane %v329, 1
    %v331 = vadd.f32 %v329, %v330
    %s332 = vtos %v331
    %s333 = smul.f32 %s332, 0.2
    %vm334 = vcmask 3072
    %v335 = vsel %vm334, %v320, 0.0
    %336 = vadd.xlane.f32.xlu0 %v335
    %v337 = vpop.xlane.xlu0 %336
    %v338 = vrot.slane %v337, 4
    %v339 = vadd.f32 %v337, %v338
    %v340 = vrot.slane %v339, 2
    %v341 = vadd.f32 %v339, %v340
    %v342 = vrot.slane %v341, 1
    %v343 = vadd.f32 %v341, %v342
    %s344 = vtos %v343
    %v345 = vrcp.pop 4.0
    %v346 = vmul.f32 4.0, %v345
    %v347 = vsub.f32 1.0, %v346
    %v348 = vmul.f32 %v345, %v347
    %v349 = vadd.f32 %v345, %v348
    %vm350 = vweird.f32 %v345
    %v351 = vsel %vm350, %v345, %v349
    %s352 = vtos %v351
    %s353 = smul.f32 %s344, %s352
    %v354 = vstv %s353
    %v355 = vsub.f32 %v320, %v354
    %v356 = vmul.f32 %v355, %v355
    %v357 = vsel %vm334, %v356, 0.0
    %358 = vadd.xlane.f32.xlu0 %v357
    %v359 = vpop.xlane.xlu0 %358
    %v360 = vrot.slane %v359, 4
    %v361 = vadd.f32 %v359, %v360
    %v362 = vrot.slane %v361, 2
    %v363 = vadd.f32 %v361, %v362
    %v364 = vrot.slane %v363, 1
    %v365 = vadd.f32 %v363, %v364
    %s366 = vtos %v365
    %v367 = vrcp.pop 3.0
    %v368 = vmul.f32 3.0, %v367
    %v369 = vsub.f32 1.0, %v368
    %v370 = vmul.f32 %v367, %v369
    %v371 = vadd.f32 %v367, %v370
    %vm372 = vweird.f32 %v367
    %v373 = vsel %vm372, %v367, %v371
    %s374 = vtos %v373
    %s375 = smul.f32 %s366, %s374
    %s376 = smul.f32 %s375, 0.3
    %v377 = vsub.f32 1e-06, %v250
    %v378 = vsub.f32 1e-06, %v251
    %v379 = vmax.f32 %v377, 0.0
    %v380 = vmax.f32 %v378, 0.0
    %vm381 = vcmask 31744
    %v382 = vsel %vm381, %v379, 0.0
    %v383 = vsel %vm381, %v380, 0.0
    %v384 = vadd.f32 %v382, %v383
    %385 = vadd.xlane.f32.xlu0 %v384
    %v386 = vpop.xlane.xlu0 %385
    %v387 = vrot.slane %v386, 4
    %v388 = vadd.f32 %v386, %v387
    %v389 = vrot.slane %v388, 2
    %v390 = vadd.f32 %v388, %v389
    %v391 = vrot.slane %v390, 1
    %v392 = vadd.f32 %v390, %v391
    %s393 = vtos %v392
    %s394 = smul.f32 %s393, 0.1
    %v395 = vand.u32 2147483647, %v252
    %v396 = vand.u32 2147483647, %v253
    %v397 = vsel %vm381, %v395, 0.0
    %v398 = vsel %vm381, %v396, 0.0
    %v399 = vadd.f32 %v397, %v398
    %400 = vadd.xlane.f32.xlu0 %v399
    %v401 = vpop.xlane.xlu0 %400
    %v402 = vrot.slane %v401, 4
    %v403 = vadd.f32 %v401, %v402
    %v404 = vrot.slane %v403, 2
    %v405 = vadd.f32 %v403, %v404
    %v406 = vrot.slane %v405, 1
    %v407 = vadd.f32 %v405, %v406
    %s408 = vtos %v407
    %s409 = smul.f32 %s408, 0.05
    %s410 = sadd.f32 %s333, %s376
    %s411 = sadd.f32 %s410, %s394
    %s412 = sadd.f32 %s411, %s409
    %v413 = vstv %s412
    %v414 = vadd.f32 %v413, 0.0
    %vm415 = vcmask 0
    %416 = vst.msk [vmem:[#allocation2] sm:$0x1] %vm415, %v414
    // Predicated region
    $region22: #{brainnet_forward.7} parent=1 // pred_check
      _
    $region23: #{brainnet_forward.7} parent=1 // pred_check_branch
      %418 = sbr.rel (0) target = $region25
    $region24: #{brainnet_forward.7} parent=1 // pred_region
      _
    $region25: #{brainnet_forward.7} parent=1 // pred_fallthru
      _
    // Predicated region
    $region26: #{brainnet_forward.7} parent=1 // pred_check
      _
    $region27: #{brainnet_forward.7} parent=1 // pred_check_branch
      %420 = sbr.rel (0) target = $region29
    $region28: #{brainnet_forward.7} parent=1 // pred_region
      _
    $region29: #{brainnet_forward.7} parent=1 // pred_fallthru
      _
    // Predicated region
    $region30: #{brainnet_forward.7} parent=1 // pred_check
      _
    $region31: #{brainnet_forward.7} parent=1 // pred_check_branch
      %422 = sbr.rel (0) target = $region33
    $region32: #{brainnet_forward.7} parent=1 // pred_region
      %424 = vsyncadd [#allocation3], 0
      %s426 = sshll.u32 [#allocation2], 4
      %s427 = int_to_ptr.vmem [resolvable:$true] %s426
      %s428 = sshll.u32 %s7, 4
      %s429 = int_to_ptr.hbm [resolvable:$true] %s428
      %431 = dma.vmem_to_hbm [thread:$0]  %s427, 16, %s429, [#allocation3]
    $region33: #{brainnet_forward.7} parent=1 // pred_fallthru
      _
    // Predicated region
    $region34: #{brainnet_forward.7} parent=1 // pred_check
      _
    $region35: #{brainnet_forward.7} parent=1 // pred_check_branch
      %433 = sbr.rel (0) target = $region37
    $region36: #{brainnet_forward.7} parent=1 // pred_region
      _
    $region37: #{brainnet_forward.7} parent=1 // pred_fallthru
      _
    // Predicated region
    $region38: #{brainnet_forward.7} parent=1 // pred_check
      _
    $region39: #{brainnet_forward.7} parent=1 // pred_check_branch
      %435 = sbr.rel (0) target = $region41
    $region40: #{brainnet_forward.7} parent=1 // pred_region
      _
    $region41: #{brainnet_forward.7} parent=1 // pred_fallthru
      _
    // Predicated region
    $region42: #{brainnet_forward.7} parent=1 // pred_check
      _
    $region43: #{brainnet_forward.7} parent=1 // pred_check_branch
      %437 = sbr.rel (0) target = $region45
    $region44: #{brainnet_forward.7} parent=1 // pred_region
      %439 = dma.done [#allocation3], 16
    $region45: #{brainnet_forward.7} parent=1 // pred_fallthru
      _
    %440 = vsyncpa [#allocation3], 1

// kernel: brainnet_forward.9
$region0: #{brainnet_forward.9}
  #allocation0 [shape = 'u32[]', space=smem, size = 0x4, offset = 0x4, fixed_abs, tag = 'smem constant byte address 0x4 - core index']
  #allocation1 [shape = 'u32[72,128]{1,0:T(1,128)}', space=vmem, size = 0x9000, scoped, tag = 'internal scratch']
  %s0 = inlined_call_operand.vmem [shape: f32[2,128], index: 0, kind: input, shape index: {}]
  %s1 = inlined_call_operand.vmem [shape: f32[128,2], index: 1, kind: input, shape index: {}]
  %s2 = inlined_call_operand.vmem [shape: f32[1,2], index: 2, kind: input, shape index: {}]
  %s3 = inlined_call_operand.hbm [shape: f32[2,2], index: 3, kind: output, shape index: {}]
  %s4 = sld [smem:[#allocation0]]
  $region22: #{brainnet_forward.9} parent=0
    _
  %s6 = ssub.s32 1, %s4
  %s7 = scalar_select 0, %s6, %s4
  $region1: #{brainnet_forward.9} parent=0
    #allocation2 [shape = 'u8[1024]{0}', space=vmem, size = 0x400, scoped, tag = 'output window, operand 0, single buffered']
    #allocation3 [shape = 's32[1]{0}', space=sflag, size = 0x4, scoped, tag = 'scoped memory for brainnet_forward.9']
    %8 = vsyncpa [#allocation3], 0
    // Predicated region
    $region2: #{brainnet_forward.9} parent=1 // pred_check
      _
    $region3: #{brainnet_forward.9} parent=1 // pred_check_branch
      %10 = sbr.rel (0) target = $region5
    $region4: #{brainnet_forward.9} parent=1 // pred_region
      _
    $region5: #{brainnet_forward.9} parent=1 // pred_fallthru
      _
    // Predicated region
    $region6: #{brainnet_forward.9} parent=1 // pred_check
      _
    $region7: #{brainnet_forward.9} parent=1 // pred_check_branch
      %12 = sbr.rel (0) target = $region9
    $region8: #{brainnet_forward.9} parent=1 // pred_region
      _
    $region9: #{brainnet_forward.9} parent=1 // pred_fallthru
      _
    // Predicated region
    $region10: #{brainnet_forward.9} parent=1 // pred_check
      _
    $region11: #{brainnet_forward.9} parent=1 // pred_check_branch
      %14 = sbr.rel (0) target = $region13
    $region12: #{brainnet_forward.9} parent=1 // pred_region
      _
    $region13: #{brainnet_forward.9} parent=1 // pred_fallthru
      _
    %v15 = vld [vmem:[%s0] sm:$0x3]
    %v16 = vld [vmem:[%s1] sm:$0xff]
    %v17 = vld [vmem:[%s1 + $0x8] sm:$0xff]
    %v18 = vld [vmem:[%s1 + $0x10] sm:$0xff]
    %v19 = vld [vmem:[%s1 + $0x18] sm:$0xff]
    %v20 = vld [vmem:[%s1 + $0x20] sm:$0xff]
    %v21 = vld [vmem:[%s1 + $0x28] sm:$0xff]
    %v22 = vld [vmem:[%s1 + $0x30] sm:$0xff]
    %v23 = vld [vmem:[%s1 + $0x38] sm:$0xff]
    %v24 = vld [vmem:[%s1 + $0x40] sm:$0xff]
    %v25 = vld [vmem:[%s1 + $0x48] sm:$0xff]
    %v26 = vld [vmem:[%s1 + $0x50] sm:$0xff]
    %v27 = vld [vmem:[%s1 + $0x58] sm:$0xff]
    %v28 = vld [vmem:[%s1 + $0x60] sm:$0xff]
    %v29 = vld [vmem:[%s1 + $0x68] sm:$0xff]
    %v30 = vld [vmem:[%s1 + $0x70] sm:$0xff]
    %v31 = vld [vmem:[%s1 + $0x78] sm:$0xff]
    %v32 = vld [vmem:[%s2] sm:$0x1]
    %v34 = vperm.slane %v32, 0
    %36 = vmatpush.msra.mxu0 %v31
    %37 = vmatpush.msra.mxu0 %v30
    %38 = vmatpush.msra.mxu0 %v29
    %39 = vmatpush.msra.mxu0 %v28
    %40 = vmatpush.msra.mxu0 %v27
    %41 = vmatpush.msra.mxu0 %v26
    %42 = vmatpush.msra.mxu0 %v25
    %43 = vmatpush.msra.mxu0 %v24
    %44 = vmatpush.msra.mxu0 %v23
    %45 = vmatpush.msra.mxu0 %v22
    %46 = vmatpush.msra.mxu0 %v21
    %47 = vmatpush.msra.mxu0 %v20
    %48 = vmatpush.msra.mxu0 %v19
    %49 = vmatpush.msra.mxu0 %v18
    %50 = vmatpush.msra.mxu0 %v17
    %51 = vmatpush.msra.mxu0 %v16
    %52 = vmatmul.f32.gmra.mxu0 %v15
    %v53 = vpop.f32.mrf.mxu0
    %v54 = vadd.f32 %v34, %v53
    %55 = vdwg.mxu0
    %vm56 = vcmask 9216
    %57 = vst.msk [vmem:[#allocation2] sm:$0x3] %vm56, %v54
    // Predicated region
    $region14: #{brainnet_forward.9} parent=1 // pred_check
      _
    $region15: #{brainnet_forward.9} parent=1 // pred_check_branch
      %59 = sbr.rel (0) target = $region17
    $region16: #{brainnet_forward.9} parent=1 // pred_region
      %61 = vsyncadd [#allocation3], 0
      %s63 = sshll.u32 [#allocation2], 4
      %s64 = int_to_ptr.vmem [resolvable:$true] %s63
      %s65 = sshll.u32 %s3, 4
      %s66 = int_to_ptr.hbm [resolvable:$true] %s65
      %68 = dma.vmem_to_hbm [thread:$0]  %s64, 32, %s66, [#allocation3]
    $region17: #{brainnet_forward.9} parent=1 // pred_fallthru
      _
    // Predicated region
    $region18: #{brainnet_forward.9} parent=1 // pred_check
      _
    $region19: #{brainnet_forward.9} parent=1 // pred_check_branch
      %70 = sbr.rel (0) target = $region21
    $region20: #{brainnet_forward.9} parent=1 // pred_region
      %72 = dma.done [#allocation3], 32
    $region21: #{brainnet_forward.9} parent=1 // pred_fallthru
      _
    %73 = vsyncpa [#allocation3], 1

// kernel: brainnet_forward.8
$region0: #{brainnet_forward.8}
  #allocation0 [shape = 'u32[]', space=smem, size = 0x4, offset = 0x4, fixed_abs, tag = 'smem constant byte address 0x4 - core index']
  #allocation1 [shape = 'u32[72,128]{1,0:T(1,128)}', space=vmem, size = 0x9000, scoped, tag = 'internal scratch']
  #allocation2 [shape = 'f32[8,32]{1,0:T(8,128)}', space=vmem, size = 0x1000, scoped, tag = 'scratch operand']
  #allocation3 [shape = 'f32[8,32]{1,0:T(8,128)}', space=vmem, size = 0x1000, scoped, tag = 'scratch operand']
  #allocation4 [shape = 'f32[2,8,32]{2,1,0:T(8,128)}', space=vmem, size = 0x2000, scoped, tag = 'scratch operand']
  #allocation5 [shape = 'f32[2,8,32]{2,1,0:T(8,128)}', space=vmem, size = 0x2000, scoped, tag = 'scratch operand']
  %s0 = inlined_call_operand.vmem [shape: f32[4,8,16], index: 0, kind: input, shape index: {}]
  %s1 = inlined_call_operand.vmem [shape: f32[4,8,4], index: 1, kind: input, shape index: {}]
  %s2 = inlined_call_operand.vmem [shape: f32[32,16], index: 2, kind: input, shape index: {}]
  %s3 = inlined_call_operand.vmem [shape: f32[16,128], index: 3, kind: input, shape index: {}]
  %s4 = inlined_call_operand.vmem [shape: f32[1,128], index: 4, kind: input, shape index: {}]
  %s5 = inlined_call_operand.vmem [shape: f32[16,128], index: 5, kind: input, shape index: {}]
  %s6 = inlined_call_operand.vmem [shape: f32[1,128], index: 6, kind: input, shape index: {}]
  %s7 = inlined_call_operand.vmem [shape: f32[96,32], index: 7, kind: input, shape index: {}]
  %s8 = inlined_call_operand.vmem [shape: f32[1,32], index: 8, kind: input, shape index: {}]
  %s9 = inlined_call_operand.vmem [shape: f32[8,32], index: 9, kind: output, shape index: {}]
  %s10 = sld [smem:[#allocation0]]
  $region85: #{brainnet_forward.8} parent=0
    _
  %s12 = ssub.s32 1, %s10
  %s13 = scalar_select 0, %s12, %s10
  loop: start=0, step=1, limit=6
  $region2: #{brainnet_forward.8} parent=0 // loop_pre_header
    _
  $region3: #{brainnet_forward.8} parent=0 // loop_header
    %s15 = sphi 0, %s19
    %p16 = scmp.ge.s32.totalorder %s15, 6
    %s25 = sphi 0, %s27
    %s28 = sphi 0, %s25
    %s29 = sphi 0, %s28
    %s45 = sphi 0, %s29
    %s51 = sphi 0, %s53
    %s54 = sphi 0, %s51
    %s55 = sphi 0, %s54
    %s71 = sphi 0, %s55
    %s75 = sphi 0, %s75
    %s77 = sphi 0, %s75
    %s78 = sphi 0, %s77
    %s92 = sphi 0, %s78
    %s96 = sphi 0, %s96
    %s98 = sphi 0, %s96
    %s99 = sphi 0, %s98
    %s113 = sphi 0, %s99
    %s117 = sphi 0, %s117
    %s119 = sphi 0, %s117
    %s120 = sphi 0, %s119
    %s134 = sphi 0, %s120
    %s138 = sphi 0, %s138
    %s140 = sphi 0, %s138
    %s141 = sphi 0, %s140
    %s155 = sphi 0, %s141
    %s159 = sphi 0, %s159
    %s161 = sphi 0, %s159
    %s162 = sphi 0, %s161
    %s176 = sphi 0, %s162
    %s180 = sphi 0, %s180
    %s182 = sphi 0, %s180
    %s183 = sphi 0, %s182
    %s197 = sphi 0, %s183
    %s201 = sphi 0, %s201
    %s203 = sphi 0, %s201
    %s204 = sphi 0, %s203
    %s218 = sphi 0, %s204
    %s222 = sphi 0, %s222
    %s224 = sphi 0, %s222
    %s225 = sphi 0, %s224
    %s239 = sphi 0, %s225
  $region4: #{brainnet_forward.8} parent=0 // loop_header_branch
    %18 = sbr.rel (%p16) target = $region8
  $region5: #{brainnet_forward.8} parent=0 // loop_body
    %s20 = ssub.s32 %s15, 1
    %s21 = ssub.s32 %s15, 2
    %s22 = sadd.s32 %s15, 1
    %s23 = ssub.s32 %s15, %s22
    %p24 = scmp.eq.s32.totalorder %s23, 0
    %s26 = sadd.s32 %s25, 1
    %s27 = scalar_select %p24, %s25, %s26
    %p30 = pneg %p24
    %p31 = scmp.eq.s32.totalorder %s15, 3
    %p32 = por %p30, %p31
    %p33 = scmp.ne.s32.totalorder %s25, %s28
    %p34 = scmp.eq.s32.totalorder %s15, 0
    %p35 = por %p33, %p34
    %p36 = scmp.ne.s32.totalorder %s25, %s28
    %p37 = scmp.eq.s32.totalorder %s20, 3
    %p38 = por %p36, %p37
    %p39 = scmp.ne.s32.totalorder %s28, %s29
    %p40 = scmp.eq.s32.totalorder %s20, 0
    %p41 = por %p39, %p40
    %p42 = scmp.ne.s32.totalorder %s28, %s29
    %p43 = scmp.eq.s32.totalorder %s21, 3
    %p44 = por %p42, %p43
    %p46 = scmp.ne.s32.totalorder %s29, %s45
    %p47 = scmp.eq.s32.totalorder %s21, 0
    %p48 = por %p46, %p47
    %s49 = ssub.s32 %s15, %s22
    %p50 = scmp.eq.s32.totalorder %s49, 0
    %s52 = sadd.s32 %s51, 1
    %s53 = scalar_select %p50, %s51, %s52
    %p56 = pneg %p50
    %p57 = scmp.eq.s32.totalorder %s15, 3
    %p58 = por %p56, %p57
    %p59 = scmp.ne.s32.totalorder %s51, %s54
    %p60 = scmp.eq.s32.totalorder %s15, 0
    %p61 = por %p59, %p60
    %p62 = scmp.ne.s32.totalorder %s51, %s54
    %p63 = scmp.eq.s32.totalorder %s20, 3
    %p64 = por %p62, %p63
    %p65 = scmp.ne.s32.totalorder %s54, %s55
    %p66 = scmp.eq.s32.totalorder %s20, 0
    %p67 = por %p65, %p66
    %p68 = scmp.ne.s32.totalorder %s54, %s55
    %p69 = scmp.eq.s32.totalorder %s21, 3
    %p70 = por %p68, %p69
    %p72 = scmp.ne.s32.totalorder %s55, %s71
    %p73 = scmp.eq.s32.totalorder %s21, 0
    %p74 = por %p72, %p73
    %s76 = sadd.s32 %s75, 1
    %p79 = scmp.eq.s32.totalorder %s15, 3
    %p80 = scmp.ne.s32.totalorder %s75, %s77
    %p81 = scmp.eq.s32.totalorder %s15, 0
    %p82 = por %p80, %p81
    %p83 = scmp.ne.s32.totalorder %s75, %s77
    %p84 = scmp.eq.s32.totalorder %s20, 3
    %p85 = por %p83, %p84
    %p86 = scmp.ne.s32.totalorder %s77, %s78
    %p87 = scmp.eq.s32.totalorder %s20, 0
    %p88 = por %p86, %p87
    %p89 = scmp.ne.s32.totalorder %s77, %s78
    %p90 = scmp.eq.s32.totalorder %s21, 3
    %p91 = por %p89, %p90
    %p93 = scmp.ne.s32.totalorder %s78, %s92
    %p94 = scmp.eq.s32.totalorder %s21, 0
    %p95 = por %p93, %p94
    %s97 = sadd.s32 %s96, 1
    %p100 = scmp.eq.s32.totalorder %s15, 3
    %p101 = scmp.ne.s32.totalorder %s96, %s98
    %p102 = scmp.eq.s32.totalorder %s15, 0
    %p103 = por %p101, %p102
    %p104 = scmp.ne.s32.totalorder %s96, %s98
    %p105 = scmp.eq.s32.totalorder %s20, 3
    %p106 = por %p104, %p105
    %p107 = scmp.ne.s32.totalorder %s98, %s99
    %p108 = scmp.eq.s32.totalorder %s20, 0
    %p109 = por %p107, %p108
    %p110 = scmp.ne.s32.totalorder %s98, %s99
    %p111 = scmp.eq.s32.totalorder %s21, 3
    %p112 = por %p110, %p111
    %p114 = scmp.ne.s32.totalorder %s99, %s113
    %p115 = scmp.eq.s32.totalorder %s21, 0
    %p116 = por %p114, %p115
    %s118 = sadd.s32 %s117, 1
    %p121 = scmp.eq.s32.totalorder %s15, 3
    %p122 = scmp.ne.s32.totalorder %s117, %s119
    %p123 = scmp.eq.s32.totalorder %s15, 0
    %p124 = por %p122, %p123
    %p125 = scmp.ne.s32.totalorder %s117, %s119
    %p126 = scmp.eq.s32.totalorder %s20, 3
    %p127 = por %p125, %p126
    %p128 = scmp.ne.s32.totalorder %s119, %s120
    %p129 = scmp.eq.s32.totalorder %s20, 0
    %p130 = por %p128, %p129
    %p131 = scmp.ne.s32.totalorder %s119, %s120
    %p132 = scmp.eq.s32.totalorder %s21, 3
    %p133 = por %p131, %p132
    %p135 = scmp.ne.s32.totalorder %s120, %s134
    %p136 = scmp.eq.s32.totalorder %s21, 0
    %p137 = por %p135, %p136
    %s139 = sadd.s32 %s138, 1
    %p142 = scmp.eq.s32.totalorder %s15, 3
    %p143 = scmp.ne.s32.totalorder %s138, %s140
    %p144 = scmp.eq.s32.totalorder %s15, 0
    %p145 = por %p143, %p144
    %p146 = scmp.ne.s32.totalorder %s138, %s140
    %p147 = scmp.eq.s32.totalorder %s20, 3
    %p148 = por %p146, %p147
    %p149 = scmp.ne.s32.totalorder %s140, %s141
    %p150 = scmp.eq.s32.totalorder %s20, 0
    %p151 = por %p149, %p150
    %p152 = scmp.ne.s32.totalorder %s140, %s141
    %p153 = scmp.eq.s32.totalorder %s21, 3
    %p154 = por %p152, %p153
    %p156 = scmp.ne.s32.totalorder %s141, %s155
    %p157 = scmp.eq.s32.totalorder %s21, 0
    %p158 = por %p156, %p157
    %s160 = sadd.s32 %s159, 1
    %p163 = scmp.eq.s32.totalorder %s15, 3
    %p164 = scmp.ne.s32.totalorder %s159, %s161
    %p165 = scmp.eq.s32.totalorder %s15, 0
    %p166 = por %p164, %p165
    %p167 = scmp.ne.s32.totalorder %s159, %s161
    %p168 = scmp.eq.s32.totalorder %s20, 3
    %p169 = por %p167, %p168
    %p170 = scmp.ne.s32.totalorder %s161, %s162
    %p171 = scmp.eq.s32.totalorder %s20, 0
    %p172 = por %p170, %p171
    %p173 = scmp.ne.s32.totalorder %s161, %s162
    %p174 = scmp.eq.s32.totalorder %s21, 3
    %p175 = por %p173, %p174
    %p177 = scmp.ne.s32.totalorder %s162, %s176
    %p178 = scmp.eq.s32.totalorder %s21, 0
    %p179 = por %p177, %p178
    %s181 = sadd.s32 %s180, 1
    %p184 = scmp.eq.s32.totalorder %s15, 3
    %p185 = scmp.ne.s32.totalorder %s180, %s182
    %p186 = scmp.eq.s32.totalorder %s15, 0
    %p187 = por %p185, %p186
    %p188 = scmp.ne.s32.totalorder %s180, %s182
    %p189 = scmp.eq.s32.totalorder %s20, 3
    %p190 = por %p188, %p189
    %p191 = scmp.ne.s32.totalorder %s182, %s183
    %p192 = scmp.eq.s32.totalorder %s20, 0
    %p193 = por %p191, %p192
    %p194 = scmp.ne.s32.totalorder %s182, %s183
    %p195 = scmp.eq.s32.totalorder %s21, 3
    %p196 = por %p194, %p195
    %p198 = scmp.ne.s32.totalorder %s183, %s197
    %p199 = scmp.eq.s32.totalorder %s21, 0
    %p200 = por %p198, %p199
    %s202 = sadd.s32 %s201, 1
    %p205 = scmp.eq.s32.totalorder %s15, 3
    %p206 = scmp.ne.s32.totalorder %s201, %s203
    %p207 = scmp.eq.s32.totalorder %s15, 0
    %p208 = por %p206, %p207
    %p209 = scmp.ne.s32.totalorder %s201, %s203
    %p210 = scmp.eq.s32.totalorder %s20, 3
    %p211 = por %p209, %p210
    %p212 = scmp.ne.s32.totalorder %s203, %s204
    %p213 = scmp.eq.s32.totalorder %s20, 0
    %p214 = por %p212, %p213
    %p215 = scmp.ne.s32.totalorder %s203, %s204
    %p216 = scmp.eq.s32.totalorder %s21, 3
    %p217 = por %p215, %p216
    %p219 = scmp.ne.s32.totalorder %s204, %s218
    %p220 = scmp.eq.s32.totalorder %s21, 0
    %p221 = por %p219, %p220
    %s223 = sadd.s32 %s222, 1
    %p226 = scmp.eq.s32.totalorder %s15, 3
    %p227 = scmp.ne.s32.totalorder %s222, %s224
    %p228 = scmp.eq.s32.totalorder %s15, 0
    %p229 = por %p227, %p228
    %p230 = scmp.ne.s32.totalorder %s222, %s224
    %p231 = scmp.eq.s32.totalorder %s20, 3
    %p232 = por %p230, %p231
    %p233 = scmp.ne.s32.totalorder %s224, %s225
    %p234 = scmp.eq.s32.totalorder %s20, 0
    %p235 = por %p233, %p234
    %p236 = scmp.ne.s32.totalorder %s224, %s225
    %p237 = scmp.eq.s32.totalorder %s21, 3
    %p238 = por %p236, %p237
    %p240 = scmp.ne.s32.totalorder %s225, %s239
    %p241 = scmp.eq.s32.totalorder %s21, 0
    %p242 = por %p240, %p241
    %p243 = scmp.le.s32.totalorder 1, %s15
    %p244 = scmp.lt.s32.totalorder %s15, 5
    %p245 = pnand %p243, %p244
    %p246 = pneg %p245
    // Predicated region
    $region9: #{brainnet_forward.8} parent=5 // pred_check
      _
    $region10: #{brainnet_forward.8} parent=5 // pred_check_branch
      %248 = sbr.rel (%p245) target = $region12
    $region11: #{brainnet_forward.8} parent=5 // pred_region
      %s249 = ssub.s32 %s15, 1
      // Predicated region
      $region13: #{brainnet_forward.8} parent=11 // pred_check
        %p250 = pneg %p88
      $region14: #{brainnet_forward.8} parent=11 // pred_check_branch
        %252 = sbr.rel (%p250) target = $region16
      $region15: #{brainnet_forward.8} parent=11 // pred_region
        _
      $region16: #{brainnet_forward.8} parent=11 // pred_fallthru
        _
      // Predicated region
      $region17: #{brainnet_forward.8} parent=11 // pred_check
        %p253 = pneg %p109
      $region18: #{brainnet_forward.8} parent=11 // pred_check_branch
        %255 = sbr.rel (%p253) target = $region20
      $region19: #{brainnet_forward.8} parent=11 // pred_region
        _
      $region20: #{brainnet_forward.8} parent=11 // pred_fallthru
        _
      // Predicated region
      $region21: #{brainnet_forward.8} parent=11 // pred_check
        %p256 = pneg %p130
      $region22: #{brainnet_forward.8} parent=11 // pred_check_branch
        %258 = sbr.rel (%p256) target = $region24
      $region23: #{brainnet_forward.8} parent=11 // pred_region
        _
      $region24: #{brainnet_forward.8} parent=11 // pred_fallthru
        _
      // Predicated region
      $region25: #{brainnet_forward.8} parent=11 // pred_check
        %p259 = pneg %p151
      $region26: #{brainnet_forward.8} parent=11 // pred_check_branch
        %261 = sbr.rel (%p259) target = $region28
      $region27: #{brainnet_forward.8} parent=11 // pred_region
        _
      $region28: #{brainnet_forward.8} parent=11 // pred_fallthru
        _
      // Predicated region
      $region29: #{brainnet_forward.8} parent=11 // pred_check
        %p262 = pneg %p172
      $region30: #{brainnet_forward.8} parent=11 // pred_check_branch
        %264 = sbr.rel (%p262) target = $region32
      $region31: #{brainnet_forward.8} parent=11 // pred_region
        _
      $region32: #{brainnet_forward.8} parent=11 // pred_fallthru
        _
      // Predicated region
      $region33: #{brainnet_forward.8} parent=11 // pred_check
        %p265 = pneg %p193
      $region34: #{brainnet_forward.8} parent=11 // pred_check_branch
        %267 = sbr.rel (%p265) target = $region36
      $region35: #{brainnet_forward.8} parent=11 // pred_region
        _
      $region36: #{brainnet_forward.8} parent=11 // pred_fallthru
        _
      // Predicated region
      $region37: #{brainnet_forward.8} parent=11 // pred_check
        %p268 = pneg %p214
      $region38: #{brainnet_forward.8} parent=11 // pred_check_branch
        %270 = sbr.rel (%p268) target = $region40
      $region39: #{brainnet_forward.8} parent=11 // pred_region
        _
      $region40: #{brainnet_forward.8} parent=11 // pred_fallthru
        _
    $region12: #{brainnet_forward.8} parent=5 // pred_fallthru
      _
    %p271 = scmp.lt.s32.totalorder %s15, 4
    // Predicated region
    $region41: #{brainnet_forward.8} parent=5 // pred_check
      %p272 = pneg %p271
    $region42: #{brainnet_forward.8} parent=5 // pred_check_branch
      %274 = sbr.rel (%p272) target = $region44
    $region43: #{brainnet_forward.8} parent=5 // pred_region
      // Predicated region
      $region45: #{brainnet_forward.8} parent=43 // pred_check
        %p275 = pneg %p35
      $region46: #{brainnet_forward.8} parent=43 // pred_check_branch
        %277 = sbr.rel (%p275) target = $region48
      $region47: #{brainnet_forward.8} parent=43 // pred_region
        %p278 = scmp.lt.s32.totalorder %s15, 3
        %s279 = scalar_select %p278, %s15, 3
        %s280 = smul.addr %s279, 8
        %s281 = scalar_lea.vmem %s0, %s280
      $region48: #{brainnet_forward.8} parent=43 // pred_fallthru
        _
      // Predicated region
      $region49: #{brainnet_forward.8} parent=43 // pred_check
        %p282 = pneg %p61
      $region50: #{brainnet_forward.8} parent=43 // pred_check_branch
        %284 = sbr.rel (%p282) target = $region52
      $region51: #{brainnet_forward.8} parent=43 // pred_region
        %p285 = scmp.lt.s32.totalorder %s15, 3
        %s286 = scalar_select %p285, %s15, 3
        %s287 = smul.addr %s286, 8
        %s288 = scalar_lea.vmem %s1, %s287
      $region52: #{brainnet_forward.8} parent=43 // pred_fallthru
        _
    $region44: #{brainnet_forward.8} parent=5 // pred_fallthru
      _
    %p289 = scmp.le.s32.totalorder 1, %s15
    %p290 = scmp.lt.s32.totalorder %s15, 5
    %p291 = pnand %p289, %p290
    %p292 = pneg %p291
    // Predicated region
    $region53: #{brainnet_forward.8} parent=5 // pred_check
      _
    $region54: #{brainnet_forward.8} parent=5 // pred_check_branch
      %294 = sbr.rel (%p291) target = $region56
    $region55: #{brainnet_forward.8} parent=5 // pred_region
      %s295 = ssub.s32 %s15, 1
      %p296 = scmp.lt.s32.totalorder %s20, 3
      %s297 = scalar_select %p296, %s20, 3
      %s298 = smul.addr %s297, 8
      %s299 = scalar_lea.vmem %s0, %s298
      %p300 = pneg %p41
      %p301 = pneg %p38
      %p302 = scmp.lt.s32.totalorder %s20, 3
      %s303 = scalar_select %p302, %s20, 3
      %s304 = smul.addr %s303, 8
      %s305 = scalar_lea.vmem %s1, %s304
      %p306 = pneg %p67
      %p307 = pneg %p64
      %p308 = pneg %p88
      %p309 = pneg %p85
      %p310 = pneg %p109
      %p311 = pneg %p106
      %p312 = pneg %p130
      %p313 = pneg %p127
      %p314 = pneg %p151
      %p315 = pneg %p148
      %p316 = pneg %p172
      %p317 = pneg %p169
      %p318 = pneg %p193
      %p319 = pneg %p190
      %p320 = pneg %p214
      %p321 = pneg %p211
      %p322 = pneg %p235
      %p323 = pneg %p232
      %p324 = scmp.lt.s32.totalorder %s20, 3
      %s325 = scalar_select %p324, %s20, 3
      %s326 = smul.addr %s325, 8
      %s327 = scalar_lea.vmem %s0, %s326
      %p328 = scmp.lt.s32.totalorder %s20, 3
      %s329 = scalar_select %p328, %s20, 3
      %s330 = smul.addr %s329, 8
      %s331 = scalar_lea.vmem %s1, %s330
      %p332 = scmp.eq.s32.totalorder %s20, 0
      // Predicated region
      $region57: #{brainnet_forward.8} parent=55 // pred_check
        %p333 = pneg %p332
      $region58: #{brainnet_forward.8} parent=55 // pred_check_branch
        %335 = sbr.rel (%p333) target = $region60
      $region59: #{brainnet_forward.8} parent=55 // pred_region
        %vm336 = vcmask 261120
        %337 = vst.msk [vmem:[#allocation2] sm:$0xff] %vm336, 0.0
        %338 = vst.msk [vmem:[#allocation3] sm:$0xff] %vm336, 0.0
        %339 = vst.msk [vmem:[#allocation4] sm:$0xff] %vm336, 0.0
        %340 = vst.msk [vmem:[#allocation4 + $0x8] sm:$0xff] %vm336, 0.0
        %341 = vst.msk [vmem:[#allocation5] sm:$0xff] %vm336, 0.0
        %342 = vst.msk [vmem:[#allocation5 + $0x8] sm:$0xff] %vm336, 0.0
      $region60: #{brainnet_forward.8} parent=55 // pred_fallthru
        _
      %v343 = vld [vmem:[%s327] sm:$0xff]
      %v344 = vld [vmem:[%s331] sm:$0xff]
      %v345 = vld [vmem:[%s2] sm:$0xff]
      %v346 = vld [vmem:[%s2 + $0x8] sm:$0xff]
      %v347 = vld [vmem:[%s2 + $0x10] sm:$0xff]
      %v348 = vld [vmem:[%s2 + $0x18] sm:$0xff]
      %v349 = vld [vmem:[#allocation2] sm:$0xff]
      %v350 = vld [vmem:[#allocation3] sm:$0xff]
      %v351 = vld [vmem:[%s3] sm:$0xff]
      %v352 = vld [vmem:[%s3 + $0x8] sm:$0xff]
      %v353 = vld [vmem:[%s4] sm:$0x1]
      %vm354 = vcmask 261120
      %v356 = vsel %vm354, %v349, 0
      %358 = vmatpush.msra.mxu0 0.0
      %359 = vmatpush.msra.mxu0 0.0
      %360 = vmatpush.msra.mxu0 0.0
      %361 = vmatpush.msra.mxu0 0.0
      %362 = vmatpush.msra.mxu0 0.0
      %363 = vmatpush.msra.mxu0 0.0
      %364 = vmatpush.msra.mxu0 0.0
      %365 = vmatpush.msra.mxu0 0.0
      %366 = vmatpush.msra.mxu0 0.0
      %367 = vmatpush.msra.mxu0 0.0
      %368 = vmatpush.msra.mxu0 0.0
      %369 = vmatpush.msra.mxu0 0.0
      %370 = vmatpush.msra.mxu0 %v348
      %371 = vmatpush.msra.mxu0 %v347
      %372 = vmatpush.msra.mxu0 %v346
      %373 = vmatpush.msra.mxu0 %v345
      %374 = vmatmul.f32.gmra.mxu0 %v356
      %v375 = vpop.f32.mrf.mxu0
      %v376 = vadd.f32 0.0, %v375
      %377 = vdwg.mxu0
      %v378 = vadd.f32 %v343, %v376
      %v380 = vrot.slane %v378, 6
      %v382 = vrot.slane %v378, 4
      %v384 = vrot.slane %v378, 2
      %vm386 = vcmask 1041408
      %v387 = vsel %vm386, %v378, %v380
      %vm388 = vcmask 1043456
      %v389 = vsel %vm388, %v387, %v382
      %vm390 = vcmask 1045504
      %v391 = vsel %vm390, %v389, %v384
      %393 = vset.pattern.permute.xlu0 0
      %394 = vperm.xlu0 %393, %v344
      %v395 = vpop.permute.xlu0 %394
      %v397 = vmul.f32 %v395, %v391
      %v398 = vsel %vm386, %v384, %v378
      %v399 = vsel %vm388, %v398, %v380
      %v400 = vsel %vm390, %v399, %v382
      %401 = vset.pattern.permute.xlu0 1
      %402 = vperm.xlu0 %401, %v344
      %v403 = vpop.permute.xlu0 %402
      %v405 = vmul.f32 %v403, %v400
      %v406 = vadd.f32 %v397, %v405
      %v407 = vsel %vm386, %v382, %v384
      %v408 = vsel %vm388, %v407, %v378
      %v409 = vsel %vm390, %v408, %v380
      %410 = vset.pattern.permute.xlu0 2
      %411 = vperm.xlu0 %410, %v344
      %v412 = vpop.permute.xlu0 %411
      %v414 = vmul.f32 %v412, %v409
      %v415 = vadd.f32 %v406, %v414
      %v416 = vsel %vm386, %v380, %v382
      %v417 = vsel %vm388, %v416, %v384
      %v418 = vsel %vm390, %v417, %v378
      %419 = vset.pattern.permute.xlu0 3
      %420 = vperm.xlu0 %419, %v344
      %v421 = vpop.permute.xlu0 %420
      %v423 = vmul.f32 %v421, %v418
      %v424 = vadd.f32 %v415, %v423
      %v425 = vmax.f32 %v424, 0.0
      %v427 = vrot.slane %v425, 2
      %v429 = vadd.f32 %v425, %v427
      %v430 = vrot.slane %v425, 4
      %v432 = vadd.f32 %v429, %v430
      %v433 = vrot.slane %v425, 6
      %v435 = vadd.f32 %v432, %v433
      %v437 = vrot.slane %v435, 6
      %v439 = vrot.slane %v435, 4
      %v441 = vrot.slane %v435, 2
      %v443 = vsel %vm386, %v435, %v437
      %v444 = vsel %vm388, %v443, %v439
      %v445 = vsel %vm390, %v444, %v441
      %v446 = vmul.f32 %v445, 0.25
      %v447 = vadd.f32 %v446, 1e-06
      %v448 = vrcp.pop %v447
      %v449 = vmul.f32 %v447, %v448
      %v450 = vsub.f32 1.0, %v449
      %v451 = vmul.f32 %v448, %v450
      %v452 = vadd.f32 %v448, %v451
      %vm453 = vweird.f32 %v447
      %vm454 = vweird.f32 %v448
      %vm455 = vmor %vm453, %vm454
      %v456 = vsel %vm455, %v448, %v452
      %v457 = vand.u32 2147483647, %v447
      %vm458 = vcmp.eq.f32.partialorder %v457, 8.507059e+37
      %v459 = vand.u32 %v447, 2147483648
      %v460 = vor.u32 1.1754944e-38, %v459
      %v461 = vsel %vm458, %v460, %v456
      %v462 = vmul.f32 %v425, %v461
      %v463 = vmax.f32 %v462, 0.0
      %v464 = vand.u32 2147483647, %v462
      %v465 = vsub.f32 0.0, %v464
      %v466 = vmul.f32 %v465, 1.442695
      %v467 = vpow.pop %v466
      %v468 = vadd.f32 %v467, 1.0
      %v469 = vlog2.pop %v468
      %v470 = vmul.f32 %v469, 0.6931472
      %v471 = vadd.f32 %v463, %v470
      %v473 = vperm.slane %v353, 0
      %vm475 = vcmask 130048
      %v477 = vsel %vm475, %v471, 0
      %479 = vmatpush.msra.mxu0 0.0
      %480 = vmatpush.msra.mxu0 0.0
      %481 = vmatpush.msra.mxu0 0.0
      %482 = vmatpush.msra.mxu0 0.0
      %483 = vmatpush.msra.mxu0 0.0
      %484 = vmatpush.msra.mxu0 0.0
      %485 = vmatpush.msra.mxu0 0.0
      %486 = vmatpush.msra.mxu0 0.0
      %487 = vmatpush.msra.mxu0 0.0
      %488 = vmatpush.msra.mxu0 0.0
      %489 = vmatpush.msra.mxu0 0.0
      %490 = vmatpush.msra.mxu0 0.0
      %491 = vmatpush.msra.mxu0 0.0
      %492 = vmatpush.msra.mxu0 0.0
      %493 = vmatpush.msra.mxu0 %v352
      %494 = vmatpush.msra.mxu0 %v351
      %495 = vmatmul.f32.gmra.mxu0 %v477
      %v496 = vpop.f32.mrf.mxu0
      %v497 = vadd.f32 %v473, %v496
      %498 = vdwg.mxu0
      %v499 = vsub.f32 0.0, %v497
      %v500 = vmul.f32 %v499, 1.442695
      %v501 = vpow.pop %v500
      %v502 = vadd.f32 %v501, 1.0
      %v503 = vrcp.pop %v502
      %v504 = vmul.f32 %v502, %v503
      %v505 = vsub.f32 1.0, %v504
      %v506 = vmul.f32 %v503, %v505
      %v507 = vadd.f32 %v503, %v506
      %vm508 = vweird.f32 %v502
      %vm509 = vweird.f32 %v503
      %vm510 = vmor %vm508, %vm509
      %v511 = vsel %vm510, %v503, %v507
      %v512 = vand.u32 2147483647, %v502
      %vm513 = vcmp.eq.f32.partialorder %v512, 8.507059e+37
      %v514 = vand.u32 %v502, 2147483648
      %v515 = vor.u32 1.1754944e-38, %v514
      %v516 = vsel %vm513, %v515, %v511
      %v517 = vmul.f32 1.0, %v516
      %v518 = vmax.f32 %v497, 0.0
      %520 = vrot.lane.b32.xlu0 %v350, 32
      %v521 = vpop.permute.xlu0 %520
      %v523 = vmul.f32 %v517, %v521
      %525 = vrot.lane.b32.xlu0 %v518, 32
      %v526 = vpop.permute.xlu0 %525
      %v528 = vmul.f32 %v517, %v526
      %530 = vrot.lane.b32.xlu0 %v528, 32
      %v531 = vpop.permute.xlu0 %530
      %v533 = vadd.f32 %v523, %v531
      %v534 = vtanh.pop %v533
      %536 = vrot.lane.b32.xlu0 %v534, 32
      %v537 = vpop.permute.xlu0 %536
      %v539 = vmul.f32 %v517, %v537
      %541 = vrot.lane.b32.xlu0 %v539, 64
      %v542 = vpop.permute.xlu0 %541
      %544 = vst.msk [vmem:[#allocation2] sm:$0xff] %vm354, %v542
      %546 = vrot.lane.b32.xlu0 %v533, 96
      %v547 = vpop.permute.xlu0 %546
      %549 = vst.msk [vmem:[#allocation3] sm:$0xff] %vm354, %v547
      %p550 = scmp.ge.s32.totalorder %s20, 0
      %p551 = scmp.lt.s32.totalorder %s20, 0
      %s552 = ssub.s32 0, %s20
      %s553 = scalar_select %p551, %s552, %s20
      %s554 = sand.u32 %s553, 1
      %s555 = ssub.s32 0, %s554
      %s556 = scalar_select %p551, %s555, %s554
      %p557 = scmp.ne.s32.totalorder %s556, 0
      %p558 = scmp.lt.s32.totalorder %s556, 0
      %p559 = pnand %p558, %p557
      %p560 = pneg %p559
      %s561 = sadd.s32 %s556, 2
      %s562 = scalar_select %p560, %s561, %s556
      %p563 = scmp.eq.s32.totalorder %s562, 0
      %p564 = pnand %p550, %p563
      %p565 = pneg %p564
      // Predicated region
      $region61: #{brainnet_forward.8} parent=55 // pred_check
        _
      $region62: #{brainnet_forward.8} parent=55 // pred_check_branch
        %567 = sbr.rel (%p564) target = $region64
      $region63: #{brainnet_forward.8} parent=55 // pred_region
        %v568 = vld [vmem:[#allocation4] sm:$0xff]
        %v569 = vld [vmem:[#allocation5] sm:$0xff]
        %v570 = vld [vmem:[%s5] sm:$0xff]
        %v571 = vld [vmem:[%s5 + $0x8] sm:$0xff]
        %v572 = vld [vmem:[%s6] sm:$0x1]
        %v574 = vsel %vm354, %v568, 0
        %576 = vmatpush.msra.mxu0 0.0
        %577 = vmatpush.msra.mxu0 0.0
        %578 = vmatpush.msra.mxu0 0.0
        %579 = vmatpush.msra.mxu0 0.0
        %580 = vmatpush.msra.mxu0 0.0
        %581 = vmatpush.msra.mxu0 0.0
        %582 = vmatpush.msra.mxu0 0.0
        %583 = vmatpush.msra.mxu0 0.0
        %584 = vmatpush.msra.mxu0 0.0
        %585 = vmatpush.msra.mxu0 0.0
        %586 = vmatpush.msra.mxu0 0.0
        %587 = vmatpush.msra.mxu0 0.0
        %588 = vmatpush.msra.mxu0 %v348
        %589 = vmatpush.msra.mxu0 %v347
        %590 = vmatpush.msra.mxu0 %v346
        %591 = vmatpush.msra.mxu0 %v345
        %592 = vmatmul.f32.gmra.mxu0 %v574
        %v593 = vpop.f32.mrf.mxu0
        %v594 = vadd.f32 0.0, %v593
        %595 = vdwg.mxu0
        %v596 = vadd.f32 %v343, %v594
        %v598 = vrot.slane %v596, 6
        %v600 = vrot.slane %v596, 4
        %v602 = vrot.slane %v596, 2
        %v604 = vsel %vm386, %v596, %v598
        %v605 = vsel %vm388, %v604, %v600
        %v606 = vsel %vm390, %v605, %v602
        %v607 = vmul.f32 %v395, %v606
        %v608 = vsel %vm386, %v602, %v596
        %v609 = vsel %vm388, %v608, %v598
        %v610 = vsel %vm390, %v609, %v600
        %v611 = vmul.f32 %v403, %v610
        %v612 = vadd.f32 %v607, %v611
        %v613 = vsel %vm386, %v600, %v602
        %v614 = vsel %vm388, %v613, %v596
        %v615 = vsel %vm390, %v614, %v598
        %v616 = vmul.f32 %v412, %v615
        %v617 = vadd.f32 %v612, %v616
        %v618 = vsel %vm386, %v598, %v600
        %v619 = vsel %vm388, %v618, %v602
        %v620 = vsel %vm390, %v619, %v596
        %v621 = vmul.f32 %v421, %v620
        %v622 = vadd.f32 %v617, %v621
        %v623 = vmax.f32 %v622, 0.0
        %v625 = vrot.slane %v623, 2
        %v627 = vadd.f32 %v623, %v625
        %v628 = vrot.slane %v623, 4
        %v630 = vadd.f32 %v627, %v628
        %v631 = vrot.slane %v623, 6
        %v633 = vadd.f32 %v630, %v631
        %v635 = vrot.slane %v633, 6
        %v637 = vrot.slane %v633, 4
        %v639 = vrot.slane %v633, 2
        %v641 = vsel %vm386, %v633, %v635
        %v642 = vsel %vm388, %v641, %v637
        %v643 = vsel %vm390, %v642, %v639
        %v644 = vmul.f32 %v643, 0.25
        %v645 = vadd.f32 %v644, 1e-06
        %v646 = vrcp.pop %v645
        %v647 = vmul.f32 %v645, %v646
        %v648 = vsub.f32 1.0, %v647
        %v649 = vmul.f32 %v646, %v648
        %v650 = vadd.f32 %v646, %v649
        %vm651 = vweird.f32 %v645
        %vm652 = vweird.f32 %v646
        %vm653 = vmor %vm651, %vm652
        %v654 = vsel %vm653, %v646, %v650
        %v655 = vand.u32 2147483647, %v645
        %vm656 = vcmp.eq.f32.partialorder %v655, 8.507059e+37
        %v657 = vand.u32 %v645, 2147483648
        %v658 = vor.u32 1.1754944e-38, %v657
        %v659 = vsel %vm656, %v658, %v654
        %v660 = vmul.f32 %v623, %v659
        %v661 = vmax.f32 %v660, 0.0
        %v662 = vand.u32 2147483647, %v660
        %v663 = vsub.f32 0.0, %v662
        %v664 = vmul.f32 %v663, 1.442695
        %v665 = vpow.pop %v664
        %v666 = vadd.f32 %v665, 1.0
        %v667 = vlog2.pop %v666
        %v668 = vmul.f32 %v667, 0.6931472
        %v669 = vadd.f32 %v661, %v668
        %v671 = vperm.slane %v572, 0
        %v674 = vsel %vm475, %v669, 0
        %676 = vmatpush.msra.mxu0 0.0
        %677 = vmatpush.msra.mxu0 0.0
        %678 = vmatpush.msra.mxu0 0.0
        %679 = vmatpush.msra.mxu0 0.0
        %680 = vmatpush.msra.mxu0 0.0
        %681 = vmatpush.msra.mxu0 0.0
        %682 = vmatpush.msra.mxu0 0.0
        %683 = vmatpush.msra.mxu0 0.0
        %684 = vmatpush.msra.mxu0 0.0
        %685 = vmatpush.msra.mxu0 0.0
        %686 = vmatpush.msra.mxu0 0.0
        %687 = vmatpush.msra.mxu0 0.0
        %688 = vmatpush.msra.mxu0 0.0
        %689 = vmatpush.msra.mxu0 0.0
        %690 = vmatpush.msra.mxu0 %v571
        %691 = vmatpush.msra.mxu0 %v570
        %692 = vmatmul.f32.gmra.mxu0 %v674
        %v693 = vpop.f32.mrf.mxu0
        %v694 = vadd.f32 %v671, %v693
        %695 = vdwg.mxu0
        %v696 = vsub.f32 0.0, %v694
        %v697 = vmul.f32 %v696, 1.442695
        %v698 = vpow.pop %v697
        %v699 = vadd.f32 %v698, 1.0
        %v700 = vrcp.pop %v699
        %v701 = vmul.f32 %v699, %v700
        %v702 = vsub.f32 1.0, %v701
        %v703 = vmul.f32 %v700, %v702
        %v704 = vadd.f32 %v700, %v703
        %vm705 = vweird.f32 %v699
        %vm706 = vweird.f32 %v700
        %vm707 = vmor %vm705, %vm706
        %v708 = vsel %vm707, %v700, %v704
        %v709 = vand.u32 2147483647, %v699
        %vm710 = vcmp.eq.f32.partialorder %v709, 8.507059e+37
        %v711 = vand.u32 %v699, 2147483648
        %v712 = vor.u32 1.1754944e-38, %v711
        %v713 = vsel %vm710, %v712, %v708
        %v714 = vmul.f32 1.0, %v713
        %v715 = vmax.f32 %v694, 0.0
        %717 = vrot.lane.b32.xlu0 %v569, 32
        %v718 = vpop.permute.xlu0 %717
        %v720 = vmul.f32 %v714, %v718
        %722 = vrot.lane.b32.xlu0 %v715, 32
        %v723 = vpop.permute.xlu0 %722
        %v725 = vmul.f32 %v714, %v723
        %727 = vrot.lane.b32.xlu0 %v725, 32
        %v728 = vpop.permute.xlu0 %727
        %v730 = vadd.f32 %v720, %v728
        %v731 = vtanh.pop %v730
        %733 = vrot.lane.b32.xlu0 %v731, 32
        %v734 = vpop.permute.xlu0 %733
        %v736 = vmul.f32 %v714, %v734
        %738 = vrot.lane.b32.xlu0 %v736, 64
        %v739 = vpop.permute.xlu0 %738
        %741 = vst.msk [vmem:[#allocation4] sm:$0xff] %vm354, %v739
        %743 = vrot.lane.b32.xlu0 %v730, 96
        %v744 = vpop.permute.xlu0 %743
        %746 = vst.msk [vmem:[#allocation5] sm:$0xff] %vm354, %v744
      $region64: #{brainnet_forward.8} parent=55 // pred_fallthru
        _
      %p747 = scmp.eq.s32.totalorder %s562, 1
      %p748 = pnand %p550, %p747
      %p749 = pneg %p748
      // Predicated region
      $region65: #{brainnet_forward.8} parent=55 // pred_check
        _
      $region66: #{brainnet_forward.8} parent=55 // pred_check_branch
        %751 = sbr.rel (%p748) target = $region68
      $region67: #{brainnet_forward.8} parent=55 // pred_region
        %s752 = scalar_lea.vmem [#allocation4], 8
        %v753 = vld [vmem:[%s752] sm:$0xff]
        %s754 = scalar_lea.vmem [#allocation5], 8
        %v755 = vld [vmem:[%s754] sm:$0xff]
        %v756 = vld [vmem:[%s5] sm:$0xff]
        %v757 = vld [vmem:[%s5 + $0x8] sm:$0xff]
        %v758 = vld [vmem:[%s6] sm:$0x1]
        %v760 = vsel %vm354, %v753, 0
        %762 = vmatpush.msra.mxu0 0.0
        %763 = vmatpush.msra.mxu0 0.0
        %764 = vmatpush.msra.mxu0 0.0
        %765 = vmatpush.msra.mxu0 0.0
        %766 = vmatpush.msra.mxu0 0.0
        %767 = vmatpush.msra.mxu0 0.0
        %768 = vmatpush.msra.mxu0 0.0
        %769 = vmatpush.msra.mxu0 0.0
        %770 = vmatpush.msra.mxu0 0.0
        %771 = vmatpush.msra.mxu0 0.0
        %772 = vmatpush.msra.mxu0 0.0
        %773 = vmatpush.msra.mxu0 0.0
        %774 = vmatpush.msra.mxu0 %v348
        %775 = vmatpush.msra.mxu0 %v347
        %776 = vmatpush.msra.mxu0 %v346
        %777 = vmatpush.msra.mxu0 %v345
        %778 = vmatmul.f32.gmra.mxu0 %v760
        %v779 = vpop.f32.mrf.mxu0
        %v780 = vadd.f32 0.0, %v779
        %781 = vdwg.mxu0
        %v782 = vadd.f32 %v343, %v780
        %v784 = vrot.slane %v782, 6
        %v786 = vrot.slane %v782, 4
        %v788 = vrot.slane %v782, 2
        %v790 = vsel %vm386, %v782, %v784
        %v791 = vsel %vm388, %v790, %v786
        %v792 = vsel %vm390, %v791, %v788
        %v793 = vmul.f32 %v395, %v792
        %v794 = vsel %vm386, %v788, %v782
        %v795 = vsel %vm388, %v794, %v784
        %v796 = vsel %vm390, %v795, %v786
        %v797 = vmul.f32 %v403, %v796
        %v798 = vadd.f32 %v793, %v797
        %v799 = vsel %vm386, %v786, %v788
        %v800 = vsel %vm388, %v799, %v782
        %v801 = vsel %vm390, %v800, %v784
        %v802 = vmul.f32 %v412, %v801
        %v803 = vadd.f32 %v798, %v802
        %v804 = vsel %vm386, %v784, %v786
        %v805 = vsel %vm388, %v804, %v788
        %v806 = vsel %vm390, %v805, %v782
        %v807 = vmul.f32 %v421, %v806
        %v808 = vadd.f32 %v803, %v807
        %v809 = vmax.f32 %v808, 0.0
        %v811 = vrot.slane %v809, 2
        %v813 = vadd.f32 %v809, %v811
        %v814 = vrot.slane %v809, 4
        %v816 = vadd.f32 %v813, %v814
        %v817 = vrot.slane %v809, 6
        %v819 = vadd.f32 %v816, %v817
        %v821 = vrot.slane %v819, 6
        %v823 = vrot.slane %v819, 4
        %v825 = vrot.slane %v819, 2
        %v827 = vsel %vm386, %v819, %v821
        %v828 = vsel %vm388, %v827, %v823
        %v829 = vsel %vm390, %v828, %v825
        %v830 = vmul.f32 %v829, 0.25
        %v831 = vadd.f32 %v830, 1e-06
        %v832 = vrcp.pop %v831
        %v833 = vmul.f32 %v831, %v832
        %v834 = vsub.f32 1.0, %v833
        %v835 = vmul.f32 %v832, %v834
        %v836 = vadd.f32 %v832, %v835
        %vm837 = vweird.f32 %v831
        %vm838 = vweird.f32 %v832
        %vm839 = vmor %vm837, %vm838
        %v840 = vsel %vm839, %v832, %v836
        %v841 = vand.u32 2147483647, %v831
        %vm842 = vcmp.eq.f32.partialorder %v841, 8.507059e+37
        %v843 = vand.u32 %v831, 2147483648
        %v844 = vor.u32 1.1754944e-38, %v843
        %v845 = vsel %vm842, %v844, %v840
        %v846 = vmul.f32 %v809, %v845
        %v847 = vmax.f32 %v846, 0.0
        %v848 = vand.u32 2147483647, %v846
        %v849 = vsub.f32 0.0, %v848
        %v850 = vmul.f32 %v849, 1.442695
        %v851 = vpow.pop %v850
        %v852 = vadd.f32 %v851, 1.0
        %v853 = vlog2.pop %v852
        %v854 = vmul.f32 %v853, 0.6931472
        %v855 = vadd.f32 %v847, %v854
        %v857 = vperm.slane %v758, 0
        %v860 = vsel %vm475, %v855, 0
        %862 = vmatpush.msra.mxu0 0.0
        %863 = vmatpush.msra.mxu0 0.0
        %864 = vmatpush.msra.mxu0 0.0
        %865 = vmatpush.msra.mxu0 0.0
        %866 = vmatpush.msra.mxu0 0.0
        %867 = vmatpush.msra.mxu0 0.0
        %868 = vmatpush.msra.mxu0 0.0
        %869 = vmatpush.msra.mxu0 0.0
        %870 = vmatpush.msra.mxu0 0.0
        %871 = vmatpush.msra.mxu0 0.0
        %872 = vmatpush.msra.mxu0 0.0
        %873 = vmatpush.msra.mxu0 0.0
        %874 = vmatpush.msra.mxu0 0.0
        %875 = vmatpush.msra.mxu0 0.0
        %876 = vmatpush.msra.mxu0 %v757
        %877 = vmatpush.msra.mxu0 %v756
        %878 = vmatmul.f32.gmra.mxu0 %v860
        %v879 = vpop.f32.mrf.mxu0
        %v880 = vadd.f32 %v857, %v879
        %881 = vdwg.mxu0
        %v882 = vsub.f32 0.0, %v880
        %v883 = vmul.f32 %v882, 1.442695
        %v884 = vpow.pop %v883
        %v885 = vadd.f32 %v884, 1.0
        %v886 = vrcp.pop %v885
        %v887 = vmul.f32 %v885, %v886
        %v888 = vsub.f32 1.0, %v887
        %v889 = vmul.f32 %v886, %v888
        %v890 = vadd.f32 %v886, %v889
        %vm891 = vweird.f32 %v885
        %vm892 = vweird.f32 %v886
        %vm893 = vmor %vm891, %vm892
        %v894 = vsel %vm893, %v886, %v890
        %v895 = vand.u32 2147483647, %v885
        %vm896 = vcmp.eq.f32.partialorder %v895, 8.507059e+37
        %v897 = vand.u32 %v885, 2147483648
        %v898 = vor.u32 1.1754944e-38, %v897
        %v899 = vsel %vm896, %v898, %v894
        %v900 = vmul.f32 1.0, %v899
        %v901 = vmax.f32 %v880, 0.0
        %903 = vrot.lane.b32.xlu0 %v755, 32
        %v904 = vpop.permute.xlu0 %903
        %v906 = vmul.f32 %v900, %v904
        %908 = vrot.lane.b32.xlu0 %v901, 32
        %v909 = vpop.permute.xlu0 %908
        %v911 = vmul.f32 %v900, %v909
        %913 = vrot.lane.b32.xlu0 %v911, 32
        %v914 = vpop.permute.xlu0 %913
        %v916 = vadd.f32 %v906, %v914
        %v917 = vtanh.pop %v916
        %919 = vrot.lane.b32.xlu0 %v917, 32
        %v920 = vpop.permute.xlu0 %919
        %v922 = vmul.f32 %v900, %v920
        %924 = vrot.lane.b32.xlu0 %v922, 64
        %v925 = vpop.permute.xlu0 %924
        %927 = vst.msk [vmem:[%s752] sm:$0xff] %vm354, %v925
        %929 = vrot.lane.b32.xlu0 %v916, 96
        %v930 = vpop.permute.xlu0 %929
        %932 = vst.msk [vmem:[%s754] sm:$0xff] %vm354, %v930
      $region68: #{brainnet_forward.8} parent=55 // pred_fallthru
        _
      %p933 = scmp.eq.s32.totalorder %s20, 3
      // Predicated region
      $region69: #{brainnet_forward.8} parent=55 // pred_check
        %p934 = pneg %p933
      $region70: #{brainnet_forward.8} parent=55 // pred_check_branch
        %936 = sbr.rel (%p934) target = $region72
      $region71: #{brainnet_forward.8} parent=55 // pred_region
        %v937 = vld [vmem:[#allocation2] sm:$0xff]
        %v938 = vld [vmem:[#allocation4] sm:$0xff]
        %s939 = scalar_lea.vmem [#allocation4], 8
        %v940 = vld [vmem:[%s939] sm:$0xff]
        %942 = vrot.lane.b32.xlu0 %v938, 32
        %v943 = vpop.permute.xlu0 %942
        %946 = vrot.lane.b32.xlu0 %v940, 64
        %v947 = vpop.permute.xlu0 %946
        %v949 = vsel %vm354, %v937, %v943
        %vm950 = vcmask 523264
        %v951 = vsel %vm950, %v949, %v947
        %v952 = vld [vmem:[%s7] sm:$0xff]
        %v953 = vld [vmem:[%s7 + $0x8] sm:$0xff]
        %v954 = vld [vmem:[%s7 + $0x10] sm:$0xff]
        %v955 = vld [vmem:[%s7 + $0x18] sm:$0xff]
        %v956 = vld [vmem:[%s7 + $0x20] sm:$0xff]
        %v957 = vld [vmem:[%s7 + $0x28] sm:$0xff]
        %v958 = vld [vmem:[%s7 + $0x30] sm:$0xff]
        %v959 = vld [vmem:[%s7 + $0x38] sm:$0xff]
        %v960 = vld [vmem:[%s7 + $0x40] sm:$0xff]
        %v961 = vld [vmem:[%s7 + $0x48] sm:$0xff]
        %v962 = vld [vmem:[%s7 + $0x50] sm:$0xff]
        %v963 = vld [vmem:[%s7 + $0x58] sm:$0xff]
        %v964 = vld [vmem:[%s8] sm:$0x1]
        %v966 = vperm.slane %v964, 0
        %vm968 = vcmask 785408
        %v970 = vsel %vm968, %v951, 0
        %972 = vmatpush.msra.mxu0 0.0
        %973 = vmatpush.msra.mxu0 0.0
        %974 = vmatpush.msra.mxu0 0.0
        %975 = vmatpush.msra.mxu0 0.0
        %976 = vmatpush.msra.mxu0 %v963
        %977 = vmatpush.msra.mxu0 %v962
        %978 = vmatpush.msra.mxu0 %v961
        %979 = vmatpush.msra.mxu0 %v960
        %980 = vmatpush.msra.mxu0 %v959
        %981 = vmatpush.msra.mxu0 %v958
        %982 = vmatpush.msra.mxu0 %v957
        %983 = vmatpush.msra.mxu0 %v956
        %984 = vmatpush.msra.mxu0 %v955
        %985 = vmatpush.msra.mxu0 %v954
        %986 = vmatpush.msra.mxu0 %v953
        %987 = vmatpush.msra.mxu0 %v952
        %988 = vmatmul.f32.gmra.mxu0 %v970
        %v989 = vpop.f32.mrf.mxu0
        %v990 = vadd.f32 %v966, %v989
        %991 = vdwg.mxu0
        %992 = vst.msk [vmem:[%s9] sm:$0xff] %vm354, %v990
      $region72: #{brainnet_forward.8} parent=55 // pred_fallthru
        _
      // Predicated region
      $region73: #{brainnet_forward.8} parent=55 // pred_check
        %p993 = pneg %p232
      $region74: #{brainnet_forward.8} parent=55 // pred_check_branch
        %995 = sbr.rel (%p993) target = $region76
      $region75: #{brainnet_forward.8} parent=55 // pred_region
        _
      $region76: #{brainnet_forward.8} parent=55 // pred_fallthru
        _
      // Predicated region
      $region77: #{brainnet_forward.8} parent=55 // pred_check
        %p996 = pneg %p232
      $region78: #{brainnet_forward.8} parent=55 // pred_check_branch
        %998 = sbr.rel (%p996) target = $region80
      $region79: #{brainnet_forward.8} parent=55 // pred_region
        _
      $region80: #{brainnet_forward.8} parent=55 // pred_fallthru
        _
    $region56: #{brainnet_forward.8} parent=5 // pred_fallthru
      _
    %p999 = scmp.le.s32.totalorder 2, %s15
    // Predicated region
    $region81: #{brainnet_forward.8} parent=5 // pred_check
      %p1000 = pneg %p999
    $region82: #{brainnet_forward.8} parent=5 // pred_check_branch
      %1002 = sbr.rel (%p1000) target = $region84
    $region83: #{brainnet_forward.8} parent=5 // pred_region
      %s1003 = ssub.s32 %s15, 2
    $region84: #{brainnet_forward.8} parent=5 // pred_fallthru
      _
  $region6: #{brainnet_forward.8} parent=0 // loop_footer
    %s19 = sadd.s32 1, %s15
  $region7: #{brainnet_forward.8} parent=0 // loop_footer_branch
    %14 = sbr.rel target = $region3
  $region8: #{brainnet_forward.8} parent=0 // loop_exit
    _

</llo_original>
